<compile_context>
chip_gen: v5e
topology: v5e:2x2
jax: 0.10.0
libtpu: 0.0.40
codegen_flags: <defaults>
</compile_context>

<pallas_src>
import functools

import numpy as np
import jax
import jax.numpy as jnp
from jax.experimental import pallas as pl
from jax.experimental.pallas import tpu as pltpu

_EPS = float(np.finfo(np.float32).eps)
_HIGHEST = jax.lax.Precision.HIGHEST

# ----------------------------------------------------------------------------
# constant precompute (deterministic, numpy)
# ----------------------------------------------------------------------------
def _get_meshgrid(size):
    h, w = size
    if h % 2:
        xs = np.arange(-(h - 1) / 2, h / 2) / (h - 1)
    else:
        xs = np.arange(-h / 2, h / 2) / h
    if w % 2:
        ys = np.arange(-(w - 1) / 2, w / 2) / (w - 1)
    else:
        ys = np.arange(-w / 2, w / 2) / w
    return np.meshgrid(xs, ys, indexing="ij")


def _log_gabor(size, omega_0, sigma_f):
    xx, yy = _get_meshgrid(size)
    radius = np.sqrt(xx ** 2 + yy ** 2)
    mask = radius <= 0.5
    r = radius * mask
    r = np.fft.ifftshift(r)
    r[0, 0] = 1.0
    with np.errstate(divide="ignore"):
        lg = np.exp(-np.log(r / omega_0) ** 2 / (2.0 * sigma_f ** 2))
    lg[0, 0] = 0.0
    return lg.astype(np.float32)


def _sd_map(size, sigma_d):
    xx, yy = _get_meshgrid(size)
    coords = np.stack([xx, yy], axis=0) * size[0] + 1.0
    return np.exp(-np.sum(coords ** 2, axis=0) / sigma_d ** 2).astype(np.float32)


def _bilinear_matrix(in_size, out_size, align_corners):
    """(out_size, in_size) interpolation matrix replicating torch bilinear."""
    if align_corners:
        if out_size == 1:
            src = np.zeros((1,), dtype=np.float64)
        else:
            src = np.linspace(0.0, in_size - 1, out_size)
    else:
        scale = in_size / out_size
        src = np.maximum((np.arange(out_size) + 0.5) * scale - 0.5, 0.0)
    src = np.clip(src, 0.0, in_size - 1)
    i0 = np.floor(src).astype(np.int64)
    i1 = np.minimum(i0 + 1, in_size - 1)
    frac = (src - i0).astype(np.float32)
    w = np.zeros((out_size, in_size), dtype=np.float32)
    rows = np.arange(out_size)
    np.add.at(w, (rows, i0), 1.0 - frac)
    np.add.at(w, (rows, i1), frac)
    return w


# ----------------------------------------------------------------------------
# matmul-form bilinear resize (MXU), exact same sampling as torch interpolate
# ----------------------------------------------------------------------------
def _resize_bilinear(x, out_size, align_corners):
    n, c, h, w = x.shape
    oh, ow = out_size
    if (h, w) == (oh, ow):
        return x
    wy = jnp.asarray(_bilinear_matrix(h, oh, align_corners))
    wx = jnp.asarray(_bilinear_matrix(w, ow, align_corners))
    tmp = jnp.einsum("oy,ncyx->ncox", wy, x, precision=_HIGHEST)
    return jnp.einsum("px,ncox->ncop", wx, tmp, precision=_HIGHEST)


# ----------------------------------------------------------------------------
# colour conversions (plain JAX glue — per-pixel 3x3 matmuls)
# ----------------------------------------------------------------------------
def _rgb2xyz(x):
    mask_below = (x <= 0.04045).astype(x.dtype)
    mask_above = (x > 0.04045).astype(x.dtype)
    tmp = x / 12.92 * mask_below + jnp.power((x + 0.055) / 1.055, 2.4) * mask_above
    w = jnp.array([[0.4124564, 0.3575761, 0.1804375],
                   [0.2126729, 0.7151522, 0.0721750],
                   [0.0193339, 0.1191920, 0.9503041]], dtype=x.dtype)
    return jnp.einsum("kc,nchw->nkhw", w, tmp, precision=_HIGHEST)


def _xyz2lab(x):
    epsilon = 0.008856
    kappa = 903.3
    illum = jnp.array([0.9642119944211994, 1.0, 0.8251882845188288],
                      dtype=x.dtype).reshape(1, 3, 1, 1)
    tmp = x / illum
    tmp = jnp.where(tmp > epsilon,
                    jnp.power(jnp.maximum(tmp, 0.0), 1.0 / 3.0),
                    (kappa * tmp + 16.0) / 116.0)
    w = jnp.array([[0.0, 116.0, 0.0],
                   [500.0, -500.0, 0.0],
                   [0.0, 200.0, -200.0]], dtype=x.dtype)
    b = jnp.array([-16.0, 0.0, 0.0], dtype=x.dtype).reshape(1, 3, 1, 1)
    return jnp.einsum("kc,nchw->nkhw", w, tmp, precision=_HIGHEST) + b


def _rgb2lab(x, data_range=255.0):
    return _xyz2lab(_rgb2xyz(x / float(data_range)))


def _rgb2lmn(x):
    w = jnp.array([[0.06, 0.63, 0.27],
                   [0.30, 0.04, -0.35],
                   [0.34, -0.60, 0.17]], dtype=x.dtype)
    return jnp.einsum("kc,nchw->nkhw", w, x, precision=_HIGHEST)


# ----------------------------------------------------------------------------
# Pallas kernel 1: SDSP per-pixel saliency map (one 256x256 image per grid step)
# Only the Lab a/b channels are streamed in (L is never read).
# ----------------------------------------------------------------------------
def _sdsp_kernel(ab_ref, ifft_ref, sd_ref, out_ref, *, sigma_c):
    eps = jnp.float32(_EPS)
    ifft = ifft_ref[0]                         # (3, 256, 256)
    s_f = jnp.sqrt(ifft[0] ** 2 + ifft[1] ** 2 + ifft[2] ** 2 + eps)

    ab = ab_ref[0]                             # (2, 256, 256)
    a = ab[0]
    b = ab[1]
    a_min = jnp.min(a, keepdims=True)
    a_max = jnp.max(a, keepdims=True)
    b_min = jnp.min(b, keepdims=True)
    b_max = jnp.max(b, keepdims=True)
    # exact scalar reciprocals (the range normalisation is precision-sensitive),
    # then per-pixel multiplies instead of per-pixel divides.
    inv_a = 1.0 / (a_max - a_min + eps)
    inv_b = 1.0 / (b_max - b_min + eps)
    a_n = (a - a_min) * inv_a
    b_n = (b - b_min) * inv_b
    norm = a_n * a_n + b_n * b_n
    s_c = 1.0 - jnp.exp(-norm * jnp.float32(1.0 / (sigma_c ** 2)))

    out_ref[...] = (s_f * sd_ref[...] * s_c)[None, :, :]


def _sdsp_vs(x, lg, sd, sigma_c):
    """SDSP visual saliency map.  x: (N,3,H,W) in [0,255]."""
    n, _, h, w = x.shape
    size = (256, 256)
    x_r = _resize_bilinear(x, size, align_corners=False)
    x_lab = _rgb2lab(x_r, 255.0)

    # TODO(synk): FFT has no Pallas equivalent; log-Gabor frequency filtering uses jnp.fft.
    x_fft = jnp.fft.fft2(x_lab)
    x_ifft_real = jnp.real(jnp.fft.ifft2(x_fft * lg[None, None])).astype(jnp.float32)

    x_ab = x_lab[:, 1:3].astype(jnp.float32)   # only a/b are read by the kernel

    vs_m = pl.pallas_call(
        functools.partial(_sdsp_kernel, sigma_c=sigma_c),
        out_shape=jax.ShapeDtypeStruct((n, 256, 256), jnp.float32),
        grid_spec=pltpu.PrefetchScalarGridSpec(
            num_scalar_prefetch=0,
            grid=(n,),
            in_specs=[
                pl.BlockSpec((1, 2, 256, 256), lambda i: (i, 0, 0, 0)),
                pl.BlockSpec((1, 3, 256, 256), lambda i: (i, 0, 0, 0)),
                pl.BlockSpec((256, 256), lambda i: (0, 0)),
            ],
            out_specs=pl.BlockSpec((1, 256, 256), lambda i: (i, 0, 0)),
        ),
        compiler_params=pltpu.CompilerParams(
            dimension_semantics=("parallel",)),
    )(x_ab, x_ifft_real, sd)

    vs_m = vs_m[:, None]                                      # (N,1,256,256)
    vs_m = _resize_bilinear(vs_m, (h, w), align_corners=True)
    min_v = jnp.min(vs_m, axis=(-1, -2), keepdims=True)
    max_v = jnp.max(vs_m, axis=(-1, -2), keepdims=True)
    return (vs_m - min_v) / (max_v - min_v + _EPS)


# ----------------------------------------------------------------------------
# Pallas kernel 2: VSI combination + final reduction (one image per grid step)
# ----------------------------------------------------------------------------
def _vsi_kernel(vsx_ref, vsy_ref, lx_ref, ly_ref, mnx_ref, mny_ref, out_ref,
                *, c1, c2, c3, alpha, beta, hp, wp):
    eps = jnp.float32(_EPS)
    H, W = hp, wp

    def sim(a, b, c):
        # (2ab + c) / (a^2 + b^2 + c); denominator > 0, so approx reciprocal on EUP.
        return (2.0 * a * b + c) * pl.reciprocal(a * a + b * b + c, approx=True)

    def grad_map(lp):
        # Separable Scharr cross-correlation on the zero-padded (H+2, W+2) L plane:
        #   K_h = outer([3,10,3]/16, [-1,0,1]),  K_v = K_h^T
        s = (3.0 / 16.0) * (lp[0:H, :] + lp[2:H + 2, :]) \
            + (10.0 / 16.0) * lp[1:H + 1, :]                   # (H, W+2) vertical smooth
        gx = s[:, 2:W + 2] - s[:, 0:W]                          # horizontal difference
        t = (3.0 / 16.0) * (lp[:, 0:W] + lp[:, 2:W + 2]) \
            + (10.0 / 16.0) * lp[:, 1:W + 1]                    # (H+2, W) horizontal smooth
        gy = t[2:H + 2, :] - t[0:H, :]                          # vertical difference
        return jnp.sqrt(gx * gx + gy * gy + eps)

    # running product `s` keeps only one full-image f32 temporary alive at a time
    s = jnp.power(sim(grad_map(lx_ref[0]), grad_map(ly_ref[0]), jnp.float32(c2)),
                  jnp.float32(alpha))

    vs_x = vsx_ref[0]
    vs_y = vsy_ref[0]
    s = s * sim(vs_x, vs_y, jnp.float32(c1))

    mnx = mnx_ref[0]           # (2, H, W): M, N channels
    mny = mny_ref[0]
    s_c = sim(mnx[0], mny[0], jnp.float32(c3)) * sim(mnx[1], mny[1], jnp.float32(c3))
    # real part of s_c ** beta: atan2(0, s_c) is 0 for s_c >= 0 and pi otherwise.
    cos_term = jnp.where(s_c < 0.0,
                         jnp.float32(np.cos(np.pi * beta)),
                         jnp.float32(1.0))
    s = s * (jnp.power(jnp.abs(s_c), jnp.float32(beta)) * cos_term)

    vs_max = jnp.maximum(vs_x, vs_y)
    num = jnp.sum(s * vs_max, axis=(-2, -1), keepdims=True) + eps   # (1,1)
    den = jnp.sum(vs_max, axis=(-2, -1), keepdims=True) + eps       # (1,1)
    res = num * pl.reciprocal(den, approx=True)
    # broadcast the per-image scalar into a lane-dense (8,128) tile (unmasked vst)
    out_ref[...] = jnp.broadcast_to(res.reshape(1, 1, 1), (1, 8, 128))


# ----------------------------------------------------------------------------
# VSI forward (matches the PyTorch VSI module)
# ----------------------------------------------------------------------------
def vsi_forward(x, y, data_range=1.0, c1=1.27, c2=386.0, c3=130.0, alpha=0.4,
                beta=0.02, omega_0=0.021, sigma_f=1.34, sigma_d=145.0,
                sigma_c=0.001):
    x = x.astype(jnp.float32)
    y = y.astype(jnp.float32)
    if x.shape[1] == 1:
        x = jnp.repeat(x, 3, axis=1)
        y = jnp.repeat(y, 3, axis=1)
    x = x * 255.0 / float(data_range)
    y = y * 255.0 / float(data_range)
    n, c, h, w = x.shape
    assert c == 3, "expects RGB input (N, 3, H, W)"

    lg = jnp.asarray(_log_gabor((256, 256), omega_0, sigma_f))
    sd = jnp.asarray(_sd_map((256, 256), sigma_d))

    vs_x = _sdsp_vs(x, lg, sd, sigma_c)        # (N,1,H,W)
    vs_y = _sdsp_vs(y, lg, sd, sigma_c)
    x_lmn = _rgb2lmn(x)                         # (N,3,H,W)
    y_lmn = _rgb2lmn(y)

    k = max(1, round(min(h, w) / 256))
    padding = k // 2
    if padding:
        top = padding
        bottom = (k - 1) // 2

        def rep_pad(t):
            return jnp.pad(t, ((0, 0), (0, 0), (top, bottom), (top, bottom)), mode="edge")

        vs_x, vs_y, x_lmn, y_lmn = map(rep_pad, (vs_x, vs_y, x_lmn, y_lmn))

    def avg_pool(t):
        if k == 1:
            return t
        s = jax.lax.reduce_window(t, 0.0, jax.lax.add, (1, 1, k, k), (1, 1, k, k), "VALID")
        return s / float(k * k)

    vs_x, vs_y, x_lmn, y_lmn = map(avg_pool, (vs_x, vs_y, x_lmn, y_lmn))

    hp, wp = vs_x.shape[-2:]
    # zero-pad L channels only (conv2d padding=1 in gradient_map)
    lx_pad = jnp.pad(x_lmn[:, 0], ((0, 0), (1, 1), (1, 1)))
    ly_pad = jnp.pad(y_lmn[:, 0], ((0, 0), (1, 1), (1, 1)))
    mnx = x_lmn[:, 1:]            # (N,2,hp,wp)
    mny = y_lmn[:, 1:]
    vsx2 = vs_x[:, 0]             # (N,hp,wp)
    vsy2 = vs_y[:, 0]

    out = pl.pallas_call(
        functools.partial(_vsi_kernel, c1=c1, c2=c2, c3=c3, alpha=alpha,
                          beta=beta, hp=hp, wp=wp),
        out_shape=jax.ShapeDtypeStruct((n, 8, 128), jnp.float32),
        grid_spec=pltpu.PrefetchScalarGridSpec(
            num_scalar_prefetch=0,
            grid=(n,),
            in_specs=[
                pl.BlockSpec((1, hp, wp), lambda i: (i, 0, 0)),
                pl.BlockSpec((1, hp, wp), lambda i: (i, 0, 0)),
                pl.BlockSpec((1, hp + 2, wp + 2), lambda i: (i, 0, 0)),
                pl.BlockSpec((1, hp + 2, wp + 2), lambda i: (i, 0, 0)),
                pl.BlockSpec((1, 2, hp, wp), lambda i: (i, 0, 0, 0)),
                pl.BlockSpec((1, 2, hp, wp), lambda i: (i, 0, 0, 0)),
            ],
            out_specs=pl.BlockSpec((1, 8, 128), lambda i: (i, 0, 0)),
        ),
        compiler_params=pltpu.CompilerParams(
            dimension_semantics=("parallel",),
            vmem_limit_bytes=48 * 1024 * 1024),
    )(vsx2, vsy2, lx_pad, ly_pad, mnx, mny)

    return out[:, 0, 0]            # (N,)


class VSI:
    """JAX/Pallas re-implementation of the PyTorch VSI module (no parameters)."""

    def __init__(self, c1=1.27, c2=386.0, c3=130.0, alpha=0.4, beta=0.02,
                 data_range=1.0, omega_0=0.021, sigma_f=1.34, sigma_d=145.0,
                 sigma_c=0.001):
        self._kw = dict(c1=c1, c2=c2, c3=c3, alpha=alpha, beta=beta,
                        data_range=data_range, omega_0=omega_0, sigma_f=sigma_f,
                        sigma_d=sigma_d, sigma_c=sigma_c)

    def __call__(self, x, y):
        return vsi_forward(x, y, **self._kw)


if __name__ == "__main__":
    key = jax.random.PRNGKey(0)
    k1, k2 = jax.random.split(key)
    x = jax.random.uniform(k1, (2, 3, 16, 16), dtype=jnp.float32)
    y = jax.random.uniform(k2, (2, 3, 16, 16), dtype=jnp.float32)

    model = VSI()
    out = jax.jit(model.__call__)(x, y)
    out = jax.block_until_ready(out)
    assert out.shape == (2,), out.shape
    assert bool(jnp.all(jnp.isfinite(out)))
    print("KERNEL_OK")
</pallas_src>

<mosaic_0001>
module attributes {stable_mosaic.version = 11 : i64} {
  func.func @_sdsp_kernel(%arg0: i32, %arg1: memref<1x2x256x256xf32, #tpu.memory_space<vmem>>, %arg2: memref<1x3x256x256xf32, #tpu.memory_space<vmem>>, %arg3: memref<256x256xf32, #tpu.memory_space<vmem>>, %arg4: memref<1x256x256xf32, #tpu.memory_space<vmem>>) attributes {dimension_semantics = [#tpu.dimension_semantics<parallel>], iteration_bounds = array<i64: 2>, scalar_prefetch = 0 : i64, scratch_operands = 0 : i64, tpu.core_type = #tpu.core_type<tc>, window_params = [{transform_indices = @transform_0, window_bounds = array<i64: 1, 2, 256, 256>}, {transform_indices = @transform_1, window_bounds = array<i64: 1, 3, 256, 256>}, {pipeline_mode = #tpu.pipeline_mode<synchronous>, transform_indices = @transform_2, window_bounds = array<i64: 256, 256>}, {transform_indices = @transform_3, window_bounds = array<i64: 1, 256, 256>}]} {
    %c0 = arith.constant 0 : index
    %c0_0 = arith.constant 0 : index
    %c0_1 = arith.constant 0 : index
    %c0_2 = arith.constant 0 : index
    %0 = vector.load %arg2[%c0, %c0_0, %c0_1, %c0_2] : memref<1x3x256x256xf32, #tpu.memory_space<vmem>>, vector<1x3x256x256xf32>
    %1 = vector.shape_cast %0 : vector<1x3x256x256xf32> to vector<3x256x256xf32>
    %2 = vector.extract_strided_slice %1 {offsets = [0, 0, 0], sizes = [1, 256, 256], strides = [1, 1, 1]} : vector<3x256x256xf32> to vector<1x256x256xf32>
    %3 = vector.shape_cast %2 : vector<1x256x256xf32> to vector<256x256xf32>
    %4 = arith.mulf %3, %3 : vector<256x256xf32>
    %5 = vector.extract_strided_slice %1 {offsets = [1, 0, 0], sizes = [1, 256, 256], strides = [1, 1, 1]} : vector<3x256x256xf32> to vector<1x256x256xf32>
    %6 = vector.shape_cast %5 : vector<1x256x256xf32> to vector<256x256xf32>
    %7 = arith.mulf %6, %6 : vector<256x256xf32>
    %8 = arith.addf %4, %7 : vector<256x256xf32>
    %9 = vector.extract_strided_slice %1 {offsets = [2, 0, 0], sizes = [1, 256, 256], strides = [1, 1, 1]} : vector<3x256x256xf32> to vector<1x256x256xf32>
    %10 = vector.shape_cast %9 : vector<1x256x256xf32> to vector<256x256xf32>
    %11 = arith.mulf %10, %10 : vector<256x256xf32>
    %12 = arith.addf %8, %11 : vector<256x256xf32>
    %cst = arith.constant 1.1920929E-7 : f32
    %13 = vector.broadcast %cst : f32 to vector<256x256xf32>
    %14 = arith.addf %12, %13 : vector<256x256xf32>
    %15 = math.sqrt %14 : vector<256x256xf32>
    %c0_3 = arith.constant 0 : index
    %c0_4 = arith.constant 0 : index
    %c0_5 = arith.constant 0 : index
    %c0_6 = arith.constant 0 : index
    %16 = vector.load %arg1[%c0_3, %c0_4, %c0_5, %c0_6] : memref<1x2x256x256xf32, #tpu.memory_space<vmem>>, vector<1x2x256x256xf32>
    %17 = vector.shape_cast %16 : vector<1x2x256x256xf32> to vector<2x256x256xf32>
    %18 = vector.extract_strided_slice %17 {offsets = [0, 0, 0], sizes = [1, 256, 256], strides = [1, 1, 1]} : vector<2x256x256xf32> to vector<1x256x256xf32>
    %19 = vector.shape_cast %18 : vector<1x256x256xf32> to vector<256x256xf32>
    %20 = vector.extract_strided_slice %17 {offsets = [1, 0, 0], sizes = [1, 256, 256], strides = [1, 1, 1]} : vector<2x256x256xf32> to vector<1x256x256xf32>
    %21 = vector.shape_cast %20 : vector<1x256x256xf32> to vector<256x256xf32>
    %22 = vector.shape_cast %19 : vector<256x256xf32> to vector<1x256x256xf32>
    %cst_7 = arith.constant dense<0x7F800000> : vector<1xf32>
    %23 = vector.multi_reduction <minimumf>, %22, %cst_7 [1, 2] : vector<1x256x256xf32> to vector<1xf32>
    %24 = vector.shape_cast %23 : vector<1xf32> to vector<1x1x1xf32>
    %25 = vector.extract %24[0, 0, 0] : f32 from vector<1x1x1xf32>
    %26 = vector.broadcast %25 : f32 to vector<1x1xf32>
    %27 = vector.shape_cast %19 : vector<256x256xf32> to vector<1x256x256xf32>
    %cst_8 = arith.constant dense<0xFF800000> : vector<1xf32>
    %28 = vector.multi_reduction <maximumf>, %27, %cst_8 [1, 2] : vector<1x256x256xf32> to vector<1xf32>
    %29 = vector.shape_cast %28 : vector<1xf32> to vector<1x1x1xf32>
    %30 = vector.extract %29[0, 0, 0] : f32 from vector<1x1x1xf32>
    %31 = vector.broadcast %30 : f32 to vector<1x1xf32>
    %32 = vector.shape_cast %21 : vector<256x256xf32> to vector<1x256x256xf32>
    %cst_9 = arith.constant dense<0x7F800000> : vector<1xf32>
    %33 = vector.multi_reduction <minimumf>, %32, %cst_9 [1, 2] : vector<1x256x256xf32> to vector<1xf32>
    %34 = vector.shape_cast %33 : vector<1xf32> to vector<1x1x1xf32>
    %35 = vector.extract %34[0, 0, 0] : f32 from vector<1x1x1xf32>
    %36 = vector.broadcast %35 : f32 to vector<1x1xf32>
    %37 = vector.shape_cast %21 : vector<256x256xf32> to vector<1x256x256xf32>
    %cst_10 = arith.constant dense<0xFF800000> : vector<1xf32>
    %38 = vector.multi_reduction <maximumf>, %37, %cst_10 [1, 2] : vector<1x256x256xf32> to vector<1xf32>
    %39 = vector.shape_cast %38 : vector<1xf32> to vector<1x1x1xf32>
    %40 = vector.extract %39[0, 0, 0] : f32 from vector<1x1x1xf32>
    %41 = vector.broadcast %40 : f32 to vector<1x1xf32>
    %42 = arith.subf %31, %26 : vector<1x1xf32>
    %cst_11 = arith.constant 1.1920929E-7 : f32
    %43 = vector.broadcast %cst_11 : f32 to vector<1x1xf32>
    %44 = arith.addf %42, %43 : vector<1x1xf32>
    %cst_12 = arith.constant 1.000000e+00 : f32
    %45 = vector.broadcast %cst_12 : f32 to vector<1x1xf32>
    %46 = arith.divf %45, %44 : vector<1x1xf32>
    %47 = arith.subf %41, %36 : vector<1x1xf32>
    %cst_13 = arith.constant 1.1920929E-7 : f32
    %48 = vector.broadcast %cst_13 : f32 to vector<1x1xf32>
    %49 = arith.addf %47, %48 : vector<1x1xf32>
    %cst_14 = arith.constant 1.000000e+00 : f32
    %50 = vector.broadcast %cst_14 : f32 to vector<1x1xf32>
    %51 = arith.divf %50, %49 : vector<1x1xf32>
    %52 = vector.broadcast %26 : vector<1x1xf32> to vector<256x256xf32>
    %53 = arith.subf %19, %52 : vector<256x256xf32>
    %54 = vector.broadcast %46 : vector<1x1xf32> to vector<256x256xf32>
    %55 = arith.mulf %53, %54 : vector<256x256xf32>
    %56 = vector.broadcast %36 : vector<1x1xf32> to vector<256x256xf32>
    %57 = arith.subf %21, %56 : vector<256x256xf32>
    %58 = vector.broadcast %51 : vector<1x1xf32> to vector<256x256xf32>
    %59 = arith.mulf %57, %58 : vector<256x256xf32>
    %60 = arith.mulf %55, %55 : vector<256x256xf32>
    %61 = arith.mulf %59, %59 : vector<256x256xf32>
    %62 = arith.addf %60, %61 : vector<256x256xf32>
    %cst_15 = arith.constant 0.000000e+00 : f32
    %63 = vector.broadcast %cst_15 : f32 to vector<256x256xf32>
    %64 = arith.subf %63, %62 : vector<256x256xf32>
    %cst_16 = arith.constant 1.000000e+06 : f32
    %65 = vector.broadcast %cst_16 : f32 to vector<256x256xf32>
    %66 = arith.mulf %64, %65 : vector<256x256xf32>
    %67 = math.exp %66 : vector<256x256xf32>
    %cst_17 = arith.constant 1.000000e+00 : f32
    %68 = vector.broadcast %cst_17 : f32 to vector<256x256xf32>
    %69 = arith.subf %68, %67 : vector<256x256xf32>
    %c0_18 = arith.constant 0 : index
    %c0_19 = arith.constant 0 : index
    %70 = vector.load %arg3[%c0_18, %c0_19] : memref<256x256xf32, #tpu.memory_space<vmem>>, vector<256x256xf32>
    %71 = arith.mulf %15, %70 : vector<256x256xf32>
    %72 = arith.mulf %71, %69 : vector<256x256xf32>
    %73 = vector.shape_cast %72 : vector<256x256xf32> to vector<1x256x256xf32>
    %c0_20 = arith.constant 0 : index
    %c0_21 = arith.constant 0 : index
    %c0_22 = arith.constant 0 : index
    %74 = vector.load %arg4[%c0_20, %c0_21, %c0_22] : memref<1x256x256xf32, #tpu.memory_space<vmem>>, vector<1x256x256xf32>
    tpu.vector_store %arg4[%c0_20, %c0_21, %c0_22], %73 {strides = array<i32>} : memref<1x256x256xf32, #tpu.memory_space<vmem>>, vector<1x256x256xf32>,
    return
  }
  func.func @transform_0(%arg0: i32) -> (i32, i32, i32, i32) {
    %c0_i32 = arith.constant 0 : i32
    %c0_i32_0 = arith.constant 0 : i32
    %c0_i32_1 = arith.constant 0 : i32
    %c0_i32_2 = arith.constant 0 : i32
    return %arg0, %c0_i32, %c0_i32_0, %c0_i32_1 : i32, i32, i32, i32
  }
  func.func @transform_1(%arg0: i32) -> (i32, i32, i32, i32) {
    %c0_i32 = arith.constant 0 : i32
    %c0_i32_0 = arith.constant 0 : i32
    %c0_i32_1 = arith.constant 0 : i32
    %c0_i32_2 = arith.constant 0 : i32
    return %arg0, %c0_i32, %c0_i32_0, %c0_i32_1 : i32, i32, i32, i32
  }
  func.func @transform_2(%arg0: i32) -> (i32, i32) {
    %c0_i32 = arith.constant 0 : i32
    %c0_i32_0 = arith.constant 0 : i32
    %c0_i32_1 = arith.constant 0 : i32
    return %c0_i32, %c0_i32_0 : i32, i32
  }
  func.func @transform_3(%arg0: i32) -> (i32, i32, i32) {
    %c0_i32 = arith.constant 0 : i32
    %c0_i32_0 = arith.constant 0 : i32
    %c0_i32_1 = arith.constant 0 : i32
    return %arg0, %c0_i32, %c0_i32_0 : i32, i32, i32
  }
}

module attributes {stable_mosaic.version = 11 : i64} {
  func.func @_vsi_kernel(%arg0: i32, %arg1: memref<1x16x16xf32, #tpu.memory_space<vmem>>, %arg2: memref<1x16x16xf32, #tpu.memory_space<vmem>>, %arg3: memref<1x18x18xf32, #tpu.memory_space<vmem>>, %arg4: memref<1x18x18xf32, #tpu.memory_space<vmem>>, %arg5: memref<1x2x16x16xf32, #tpu.memory_space<vmem>>, %arg6: memref<1x2x16x16xf32, #tpu.memory_space<vmem>>, %arg7: memref<1x8x128xf32, #tpu.memory_space<vmem>>) attributes {dimension_semantics = [#tpu.dimension_semantics<parallel>], iteration_bounds = array<i64: 2>, scalar_prefetch = 0 : i64, scratch_operands = 0 : i64, tpu.core_type = #tpu.core_type<tc>, window_params = [{transform_indices = @transform_0, window_bounds = array<i64: 1, 16, 16>}, {transform_indices = @transform_1, window_bounds = array<i64: 1, 16, 16>}, {transform_indices = @transform_2, window_bounds = array<i64: 1, 18, 18>}, {transform_indices = @transform_3, window_bounds = array<i64: 1, 18, 18>}, {transform_indices = @transform_4, window_bounds = array<i64: 1, 2, 16, 16>}, {transform_indices = @transform_5, window_bounds = array<i64: 1, 2, 16, 16>}, {transform_indices = @transform_6, window_bounds = array<i64: 1, 8, 128>}]} {
    %c0 = arith.constant 0 : index
    %c0_0 = arith.constant 0 : index
    %c0_1 = arith.constant 0 : index
    %0 = vector.load %arg3[%c0, %c0_0, %c0_1] : memref<1x18x18xf32, #tpu.memory_space<vmem>>, vector<1x18x18xf32>
    %1 = vector.shape_cast %0 : vector<1x18x18xf32> to vector<18x18xf32>
    %2 = vector.extract_strided_slice %1 {offsets = [0, 0], sizes = [16, 18], strides = [1, 1]} : vector<18x18xf32> to vector<16x18xf32>
    %3 = vector.extract_strided_slice %1 {offsets = [2, 0], sizes = [16, 18], strides = [1, 1]} : vector<18x18xf32> to vector<16x18xf32>
    %4 = arith.addf %2, %3 : vector<16x18xf32>
    %cst = arith.constant 1.875000e-01 : f32
    %5 = vector.broadcast %cst : f32 to vector<16x18xf32>
    %6 = arith.mulf %5, %4 : vector<16x18xf32>
    %7 = vector.extract_strided_slice %1 {offsets = [1, 0], sizes = [16, 18], strides = [1, 1]} : vector<18x18xf32> to vector<16x18xf32>
    %cst_2 = arith.constant 6.250000e-01 : f32
    %8 = vector.broadcast %cst_2 : f32 to vector<16x18xf32>
    %9 = arith.mulf %8, %7 : vector<16x18xf32>
    %10 = arith.addf %6, %9 : vector<16x18xf32>
    %11 = vector.extract_strided_slice %10 {offsets = [0, 2], sizes = [16, 16], strides = [1, 1]} : vector<16x18xf32> to vector<16x16xf32>
    %12 = vector.extract_strided_slice %10 {offsets = [0, 0], sizes = [16, 16], strides = [1, 1]} : vector<16x18xf32> to vector<16x16xf32>
    %13 = arith.subf %11, %12 : vector<16x16xf32>
    %14 = vector.extract_strided_slice %1 {offsets = [0, 0], sizes = [18, 16], strides = [1, 1]} : vector<18x18xf32> to vector<18x16xf32>
    %15 = vector.extract_strided_slice %1 {offsets = [0, 2], sizes = [18, 16], strides = [1, 1]} : vector<18x18xf32> to vector<18x16xf32>
    %16 = arith.addf %14, %15 : vector<18x16xf32>
    %cst_3 = arith.constant 1.875000e-01 : f32
    %17 = vector.broadcast %cst_3 : f32 to vector<18x16xf32>
    %18 = arith.mulf %17, %16 : vector<18x16xf32>
    %19 = vector.extract_strided_slice %1 {offsets = [0, 1], sizes = [18, 16], strides = [1, 1]} : vector<18x18xf32> to vector<18x16xf32>
    %cst_4 = arith.constant 6.250000e-01 : f32
    %20 = vector.broadcast %cst_4 : f32 to vector<18x16xf32>
    %21 = arith.mulf %20, %19 : vector<18x16xf32>
    %22 = arith.addf %18, %21 : vector<18x16xf32>
    %23 = vector.extract_strided_slice %22 {offsets = [2, 0], sizes = [16, 16], strides = [1, 1]} : vector<18x16xf32> to vector<16x16xf32>
    %24 = vector.extract_strided_slice %22 {offsets = [0, 0], sizes = [16, 16], strides = [1, 1]} : vector<18x16xf32> to vector<16x16xf32>
    %25 = arith.subf %23, %24 : vector<16x16xf32>
    %26 = arith.mulf %13, %13 : vector<16x16xf32>
    %27 = arith.mulf %25, %25 : vector<16x16xf32>
    %28 = arith.addf %26, %27 : vector<16x16xf32>
    %cst_5 = arith.constant 1.1920929E-7 : f32
    %29 = vector.broadcast %cst_5 : f32 to vector<16x16xf32>
    %30 = arith.addf %28, %29 : vector<16x16xf32>
    %31 = math.sqrt %30 : vector<16x16xf32>
    %c0_6 = arith.constant 0 : index
    %c0_7 = arith.constant 0 : index
    %c0_8 = arith.constant 0 : index
    %32 = vector.load %arg4[%c0_6, %c0_7, %c0_8] : memref<1x18x18xf32, #tpu.memory_space<vmem>>, vector<1x18x18xf32>
    %33 = vector.shape_cast %32 : vector<1x18x18xf32> to vector<18x18xf32>
    %34 = vector.extract_strided_slice %33 {offsets = [0, 0], sizes = [16, 18], strides = [1, 1]} : vector<18x18xf32> to vector<16x18xf32>
    %35 = vector.extract_strided_slice %33 {offsets = [2, 0], sizes = [16, 18], strides = [1, 1]} : vector<18x18xf32> to vector<16x18xf32>
    %36 = arith.addf %34, %35 : vector<16x18xf32>
    %cst_9 = arith.constant 1.875000e-01 : f32
    %37 = vector.broadcast %cst_9 : f32 to vector<16x18xf32>
    %38 = arith.mulf %37, %36 : vector<16x18xf32>
    %39 = vector.extract_strided_slice %33 {offsets = [1, 0], sizes = [16, 18], strides = [1, 1]} : vector<18x18xf32> to vector<16x18xf32>
    %cst_10 = arith.constant 6.250000e-01 : f32
    %40 = vector.broadcast %cst_10 : f32 to vector<16x18xf32>
    %41 = arith.mulf %40, %39 : vector<16x18xf32>
    %42 = arith.addf %38, %41 : vector<16x18xf32>
    %43 = vector.extract_strided_slice %42 {offsets = [0, 2], sizes = [16, 16], strides = [1, 1]} : vector<16x18xf32> to vector<16x16xf32>
    %44 = vector.extract_strided_slice %42 {offsets = [0, 0], sizes = [16, 16], strides = [1, 1]} : vector<16x18xf32> to vector<16x16xf32>
    %45 = arith.subf %43, %44 : vector<16x16xf32>
    %46 = vector.extract_strided_slice %33 {offsets = [0, 0], sizes = [18, 16], strides = [1, 1]} : vector<18x18xf32> to vector<18x16xf32>
    %47 = vector.extract_strided_slice %33 {offsets = [0, 2], sizes = [18, 16], strides = [1, 1]} : vector<18x18xf32> to vector<18x16xf32>
    %48 = arith.addf %46, %47 : vector<18x16xf32>
    %cst_11 = arith.constant 1.875000e-01 : f32
    %49 = vector.broadcast %cst_11 : f32 to vector<18x16xf32>
    %50 = arith.mulf %49, %48 : vector<18x16xf32>
    %51 = vector.extract_strided_slice %33 {offsets = [0, 1], sizes = [18, 16], strides = [1, 1]} : vector<18x18xf32> to vector<18x16xf32>
    %cst_12 = arith.constant 6.250000e-01 : f32
    %52 = vector.broadcast %cst_12 : f32 to vector<18x16xf32>
    %53 = arith.mulf %52, %51 : vector<18x16xf32>
    %54 = arith.addf %50, %53 : vector<18x16xf32>
    %55 = vector.extract_strided_slice %54 {offsets = [2, 0], sizes = [16, 16], strides = [1, 1]} : vector<18x16xf32> to vector<16x16xf32>
    %56 = vector.extract_strided_slice %54 {offsets = [0, 0], sizes = [16, 16], strides = [1, 1]} : vector<18x16xf32> to vector<16x16xf32>
    %57 = arith.subf %55, %56 : vector<16x16xf32>
    %58 = arith.mulf %45, %45 : vector<16x16xf32>
    %59 = arith.mulf %57, %57 : vector<16x16xf32>
    %60 = arith.addf %58, %59 : vector<16x16xf32>
    %cst_13 = arith.constant 1.1920929E-7 : f32
    %61 = vector.broadcast %cst_13 : f32 to vector<16x16xf32>
    %62 = arith.addf %60, %61 : vector<16x16xf32>
    %63 = math.sqrt %62 : vector<16x16xf32>
    %cst_14 = arith.constant 2.000000e+00 : f32
    %64 = vector.broadcast %cst_14 : f32 to vector<16x16xf32>
    %65 = arith.mulf %64, %31 : vector<16x16xf32>
    %66 = arith.mulf %65, %63 : vector<16x16xf32>
    %cst_15 = arith.constant 3.860000e+02 : f32
    %67 = vector.broadcast %cst_15 : f32 to vector<16x16xf32>
    %68 = arith.addf %66, %67 : vector<16x16xf32>
    %69 = arith.mulf %31, %31 : vector<16x16xf32>
    %70 = arith.mulf %63, %63 : vector<16x16xf32>
    %71 = arith.addf %69, %70 : vector<16x16xf32>
    %cst_16 = arith.constant 3.860000e+02 : f32
    %72 = vector.broadcast %cst_16 : f32 to vector<16x16xf32>
    %73 = arith.addf %71, %72 : vector<16x16xf32>
    %74 = tpu.reciprocal %73 {approx = true} : vector<16x16xf32> -> vector<16x16xf32>
    %75 = arith.mulf %68, %74 : vector<16x16xf32>
    %cst_17 = arith.constant 4.000000e-01 : f32
    %76 = vector.broadcast %cst_17 : f32 to vector<16x16xf32>
    %77 = math.powf %75, %76 : vector<16x16xf32>
    %c0_18 = arith.constant 0 : index
    %c0_19 = arith.constant 0 : index
    %c0_20 = arith.constant 0 : index
    %78 = vector.load %arg1[%c0_18, %c0_19, %c0_20] : memref<1x16x16xf32, #tpu.memory_space<vmem>>, vector<1x16x16xf32>
    %79 = vector.shape_cast %78 : vector<1x16x16xf32> to vector<16x16xf32>
    %c0_21 = arith.constant 0 : index
    %c0_22 = arith.constant 0 : index
    %c0_23 = arith.constant 0 : index
    %80 = vector.load %arg2[%c0_21, %c0_22, %c0_23] : memref<1x16x16xf32, #tpu.memory_space<vmem>>, vector<1x16x16xf32>
    %81 = vector.shape_cast %80 : vector<1x16x16xf32> to vector<16x16xf32>
    %cst_24 = arith.constant 2.000000e+00 : f32
    %82 = vector.broadcast %cst_24 : f32 to vector<16x16xf32>
    %83 = arith.mulf %82, %79 : vector<16x16xf32>
    %84 = arith.mulf %83, %81 : vector<16x16xf32>
    %cst_25 = arith.constant 1.270000e+00 : f32
    %85 = vector.broadcast %cst_25 : f32 to vector<16x16xf32>
    %86 = arith.addf %84, %85 : vector<16x16xf32>
    %87 = arith.mulf %79, %79 : vector<16x16xf32>
    %88 = arith.mulf %81, %81 : vector<16x16xf32>
    %89 = arith.addf %87, %88 : vector<16x16xf32>
    %cst_26 = arith.constant 1.270000e+00 : f32
    %90 = vector.broadcast %cst_26 : f32 to vector<16x16xf32>
    %91 = arith.addf %89, %90 : vector<16x16xf32>
    %92 = tpu.reciprocal %91 {approx = true} : vector<16x16xf32> -> vector<16x16xf32>
    %93 = arith.mulf %86, %92 : vector<16x16xf32>
    %94 = arith.mulf %77, %93 : vector<16x16xf32>
    %c0_27 = arith.constant 0 : index
    %c0_28 = arith.constant 0 : index
    %c0_29 = arith.constant 0 : index
    %c0_30 = arith.constant 0 : index
    %95 = vector.load %arg5[%c0_27, %c0_28, %c0_29, %c0_30] : memref<1x2x16x16xf32, #tpu.memory_space<vmem>>, vector<1x2x16x16xf32>
    %96 = vector.shape_cast %95 : vector<1x2x16x16xf32> to vector<2x16x16xf32>
    %c0_31 = arith.constant 0 : index
    %c0_32 = arith.constant 0 : index
    %c0_33 = arith.constant 0 : index
    %c0_34 = arith.constant 0 : index
    %97 = vector.load %arg6[%c0_31, %c0_32, %c0_33, %c0_34] : memref<1x2x16x16xf32, #tpu.memory_space<vmem>>, vector<1x2x16x16xf32>
    %98 = vector.shape_cast %97 : vector<1x2x16x16xf32> to vector<2x16x16xf32>
    %99 = vector.extract_strided_slice %96 {offsets = [0, 0, 0], sizes = [1, 16, 16], strides = [1, 1, 1]} : vector<2x16x16xf32> to vector<1x16x16xf32>
    %100 = vector.shape_cast %99 : vector<1x16x16xf32> to vector<16x16xf32>
    %101 = vector.extract_strided_slice %98 {offsets = [0, 0, 0], sizes = [1, 16, 16], strides = [1, 1, 1]} : vector<2x16x16xf32> to vector<1x16x16xf32>
    %102 = vector.shape_cast %101 : vector<1x16x16xf32> to vector<16x16xf32>
    %cst_35 = arith.constant 2.000000e+00 : f32
    %103 = vector.broadcast %cst_35 : f32 to vector<16x16xf32>
    %104 = arith.mulf %103, %100 : vector<16x16xf32>
    %105 = arith.mulf %104, %102 : vector<16x16xf32>
    %cst_36 = arith.constant 1.300000e+02 : f32
    %106 = vector.broadcast %cst_36 : f32 to vector<16x16xf32>
    %107 = arith.addf %105, %106 : vector<16x16xf32>
    %108 = arith.mulf %100, %100 : vector<16x16xf32>
    %109 = arith.mulf %102, %102 : vector<16x16xf32>
    %110 = arith.addf %108, %109 : vector<16x16xf32>
    %cst_37 = arith.constant 1.300000e+02 : f32
    %111 = vector.broadcast %cst_37 : f32 to vector<16x16xf32>
    %112 = arith.addf %110, %111 : vector<16x16xf32>
    %113 = tpu.reciprocal %112 {approx = true} : vector<16x16xf32> -> vector<16x16xf32>
    %114 = arith.mulf %107, %113 : vector<16x16xf32>
    %115 = vector.extract_strided_slice %96 {offsets = [1, 0, 0], sizes = [1, 16, 16], strides = [1, 1, 1]} : vector<2x16x16xf32> to vector<1x16x16xf32>
    %116 = vector.shape_cast %115 : vector<1x16x16xf32> to vector<16x16xf32>
    %117 = vector.extract_strided_slice %98 {offsets = [1, 0, 0], sizes = [1, 16, 16], strides = [1, 1, 1]} : vector<2x16x16xf32> to vector<1x16x16xf32>
    %118 = vector.shape_cast %117 : vector<1x16x16xf32> to vector<16x16xf32>
    %cst_38 = arith.constant 2.000000e+00 : f32
    %119 = vector.broadcast %cst_38 : f32 to vector<16x16xf32>
    %120 = arith.mulf %119, %116 : vector<16x16xf32>
    %121 = arith.mulf %120, %118 : vector<16x16xf32>
    %cst_39 = arith.constant 1.300000e+02 : f32
    %122 = vector.broadcast %cst_39 : f32 to vector<16x16xf32>
    %123 = arith.addf %121, %122 : vector<16x16xf32>
    %124 = arith.mulf %116, %116 : vector<16x16xf32>
    %125 = arith.mulf %118, %118 : vector<16x16xf32>
    %126 = arith.addf %124, %125 : vector<16x16xf32>
    %cst_40 = arith.constant 1.300000e+02 : f32
    %127 = vector.broadcast %cst_40 : f32 to vector<16x16xf32>
    %128 = arith.addf %126, %127 : vector<16x16xf32>
    %129 = tpu.reciprocal %128 {approx = true} : vector<16x16xf32> -> vector<16x16xf32>
    %130 = arith.mulf %123, %129 : vector<16x16xf32>
    %131 = arith.mulf %114, %130 : vector<16x16xf32>
    %cst_41 = arith.constant 0.000000e+00 : f32
    %132 = vector.broadcast %cst_41 : f32 to vector<16x16xf32>
    %133 = arith.cmpf olt, %131, %132 : vector<16x16xf32>
    %cst_42 = arith.constant 0.998026728 : f32
    %cst_43 = arith.constant 1.000000e+00 : f32
    %134 = vector.broadcast %cst_42 : f32 to vector<16x16xf32>
    %135 = vector.broadcast %cst_43 : f32 to vector<16x16xf32>
    %136 = arith.select %133, %134, %135 : vector<16x16xi1>, vector<16x16xf32>
    %137 = math.absf %131 : vector<16x16xf32>
    %cst_44 = arith.constant 2.000000e-02 : f32
    %138 = vector.broadcast %cst_44 : f32 to vector<16x16xf32>
    %139 = math.powf %137, %138 : vector<16x16xf32>
    %140 = arith.mulf %139, %136 : vector<16x16xf32>
    %141 = arith.mulf %94, %140 : vector<16x16xf32>
    %142 = arith.maximumf %79, %81 : vector<16x16xf32>
    %143 = arith.mulf %141, %142 : vector<16x16xf32>
    %144 = vector.shape_cast %143 : vector<16x16xf32> to vector<1x16x16xf32>
    %cst_45 = arith.constant dense<0.000000e+00> : vector<1xf32>
    %145 = vector.multi_reduction <add>, %144, %cst_45 [1, 2] : vector<1x16x16xf32> to vector<1xf32>
    %146 = vector.shape_cast %145 : vector<1xf32> to vector<1x1x1xf32>
    %147 = vector.extract %146[0, 0, 0] : f32 from vector<1x1x1xf32>
    %148 = vector.broadcast %147 : f32 to vector<1x1xf32>
    %cst_46 = arith.constant 1.1920929E-7 : f32
    %149 = vector.broadcast %cst_46 : f32 to vector<1x1xf32>
    %150 = arith.addf %148, %149 : vector<1x1xf32>
    %151 = vector.shape_cast %142 : vector<16x16xf32> to vector<1x16x16xf32>
    %cst_47 = arith.constant dense<0.000000e+00> : vector<1xf32>
    %152 = vector.multi_reduction <add>, %151, %cst_47 [1, 2] : vector<1x16x16xf32> to vector<1xf32>
    %153 = vector.shape_cast %152 : vector<1xf32> to vector<1x1x1xf32>
    %154 = vector.extract %153[0, 0, 0] : f32 from vector<1x1x1xf32>
    %155 = vector.broadcast %154 : f32 to vector<1x1xf32>
    %cst_48 = arith.constant 1.1920929E-7 : f32
    %156 = vector.broadcast %cst_48 : f32 to vector<1x1xf32>
    %157 = arith.addf %155, %156 : vector<1x1xf32>
    %158 = tpu.reciprocal %157 {approx = true} : vector<1x1xf32> -> vector<1x1xf32>
    %159 = arith.mulf %150, %158 : vector<1x1xf32>
    %160 = vector.shape_cast %159 : vector<1x1xf32> to vector<1x1x1xf32>
    %161 = vector.shape_cast %160 : vector<1x1x1xf32> to vector<1x1x1xf32>
    %162 = vector.broadcast %161 : vector<1x1x1xf32> to vector<1x8x128xf32>
    %c0_49 = arith.constant 0 : index
    %c0_50 = arith.constant 0 : index
    %c0_51 = arith.constant 0 : index
    %163 = vector.load %arg7[%c0_49, %c0_50, %c0_51] : memref<1x8x128xf32, #tpu.memory_space<vmem>>, vector<1x8x128xf32>
    tpu.vector_store %arg7[%c0_49, %c0_50, %c0_51], %162 {strides = array<i32>} : memref<1x8x128xf32, #tpu.memory_space<vmem>>, vector<1x8x128xf32>,
    return
  }
  func.func @transform_0(%arg0: i32) -> (i32, i32, i32) {
    %c0_i32 = arith.constant 0 : i32
    %c0_i32_0 = arith.constant 0 : i32
    %c0_i32_1 = arith.constant 0 : i32
    return %arg0, %c0_i32, %c0_i32_0 : i32, i32, i32
  }
  func.func @transform_1(%arg0: i32) -> (i32, i32, i32) {
    %c0_i32 = arith.constant 0 : i32
    %c0_i32_0 = arith.constant 0 : i32
    %c0_i32_1 = arith.constant 0 : i32
    return %arg0, %c0_i32, %c0_i32_0 : i32, i32, i32
  }
  func.func @transform_2(%arg0: i32) -> (i32, i32, i32) {
    %c0_i32 = arith.constant 0 : i32
    %c0_i32_0 = arith.constant 0 : i32
    %c0_i32_1 = arith.constant 0 : i32
    return %arg0, %c0_i32, %c0_i32_0 : i32, i32, i32
  }
  func.func @transform_3(%arg0: i32) -> (i32, i32, i32) {
    %c0_i32 = arith.constant 0 : i32
    %c0_i32_0 = arith.constant 0 : i32
    %c0_i32_1 = arith.constant 0 : i32
    return %arg0, %c0_i32, %c0_i32_0 : i32, i32, i32
  }
  func.func @transform_4(%arg0: i32) -> (i32, i32, i32, i32) {
    %c0_i32 = arith.constant 0 : i32
    %c0_i32_0 = arith.constant 0 : i32
    %c0_i32_1 = arith.constant 0 : i32
    %c0_i32_2 = arith.constant 0 : i32
    return %arg0, %c0_i32, %c0_i32_0, %c0_i32_1 : i32, i32, i32, i32
  }
  func.func @transform_5(%arg0: i32) -> (i32, i32, i32, i32) {
    %c0_i32 = arith.constant 0 : i32
    %c0_i32_0 = arith.constant 0 : i32
    %c0_i32_1 = arith.constant 0 : i32
    %c0_i32_2 = arith.constant 0 : i32
    return %arg0, %c0_i32, %c0_i32_0, %c0_i32_1 : i32, i32, i32, i32
  }
  func.func @transform_6(%arg0: i32) -> (i32, i32, i32) {
    %c0_i32 = arith.constant 0 : i32
    %c0_i32_0 = arith.constant 0 : i32
    %c0_i32_1 = arith.constant 0 : i32
    return %arg0, %c0_i32, %c0_i32_0 : i32, i32, i32
  }
}

</mosaic_0001>

<llo_original>
// kernel: a_call__.4
$region0: #{a_call__.4}
  #allocation0 [shape = 'u32[]', space=smem, size = 0x4, offset = 0x4, fixed_abs, tag = 'smem constant byte address 0x4 - core index']
  #allocation1 [shape = 'u32[72,128]{1,0:T(1,128)}', space=vmem, size = 0x9000, scoped, tag = 'internal scratch']
  %s0 = inlined_call_operand.vmem [shape: f32[2,2,256,256], index: 0, kind: input, shape index: {}]
  %s1 = inlined_call_operand.vmem [shape: f32[2,3,256,256], index: 1, kind: input, shape index: {}]
  %s2 = inlined_call_operand.vmem [shape: f32[256,256], index: 2, kind: input, shape index: {}]
  %s3 = inlined_call_operand.vmem [shape: f32[2,256,256], index: 3, kind: output, shape index: {}]
  %s4 = sld [smem:[#allocation0]]
  $region45: #{a_call__.4} parent=0
    _
  %s6 = ssub.s32 1, %s4
  %s7 = scalar_select 0, %s6, %s4
  loop: start=0, step=1, limit=4
  $region2: #{a_call__.4} parent=0 // loop_pre_header
    _
  $region3: #{a_call__.4} parent=0 // loop_header
    %s9 = sphi 0, %s13
    %p10 = scmp.ge.s32.totalorder %s9, 4
    %s19 = sphi 0, %s21
    %s22 = sphi 0, %s19
    %s23 = sphi 0, %s22
    %s39 = sphi 0, %s23
    %s45 = sphi 0, %s47
    %s48 = sphi 0, %s45
    %s49 = sphi 0, %s48
    %s65 = sphi 0, %s49
    %s69 = sphi 0, %s69
    %s71 = sphi 0, %s69
    %s72 = sphi 0, %s71
    %s86 = sphi 0, %s72
    %s92 = sphi 0, %s94
    %s95 = sphi 0, %s92
    %s96 = sphi 0, %s95
    %s112 = sphi 0, %s96
  $region4: #{a_call__.4} parent=0 // loop_header_branch
    %12 = sbr.rel (%p10) target = $region8
  $region5: #{a_call__.4} parent=0 // loop_body
    %s14 = ssub.s32 %s9, 1
    %s15 = ssub.s32 %s9, 2
    %s16 = sadd.s32 %s9, 1
    %s17 = ssub.s32 %s9, %s16
    %p18 = scmp.eq.s32.totalorder %s17, 0
    %s20 = sadd.s32 %s19, 1
    %s21 = scalar_select %p18, %s19, %s20
    %p24 = pneg %p18
    %p25 = scmp.eq.s32.totalorder %s9, 1
    %p26 = por %p24, %p25
    %p27 = scmp.ne.s32.totalorder %s19, %s22
    %p28 = scmp.eq.s32.totalorder %s9, 0
    %p29 = por %p27, %p28
    %p30 = scmp.ne.s32.totalorder %s19, %s22
    %p31 = scmp.eq.s32.totalorder %s14, 1
    %p32 = por %p30, %p31
    %p33 = scmp.ne.s32.totalorder %s22, %s23
    %p34 = scmp.eq.s32.totalorder %s14, 0
    %p35 = por %p33, %p34
    %p36 = scmp.ne.s32.totalorder %s22, %s23
    %p37 = scmp.eq.s32.totalorder %s15, 1
    %p38 = por %p36, %p37
    %p40 = scmp.ne.s32.totalorder %s23, %s39
    %p41 = scmp.eq.s32.totalorder %s15, 0
    %p42 = por %p40, %p41
    %s43 = ssub.s32 %s9, %s16
    %p44 = scmp.eq.s32.totalorder %s43, 0
    %s46 = sadd.s32 %s45, 1
    %s47 = scalar_select %p44, %s45, %s46
    %p50 = pneg %p44
    %p51 = scmp.eq.s32.totalorder %s9, 1
    %p52 = por %p50, %p51
    %p53 = scmp.ne.s32.totalorder %s45, %s48
    %p54 = scmp.eq.s32.totalorder %s9, 0
    %p55 = por %p53, %p54
    %p56 = scmp.ne.s32.totalorder %s45, %s48
    %p57 = scmp.eq.s32.totalorder %s14, 1
    %p58 = por %p56, %p57
    %p59 = scmp.ne.s32.totalorder %s48, %s49
    %p60 = scmp.eq.s32.totalorder %s14, 0
    %p61 = por %p59, %p60
    %p62 = scmp.ne.s32.totalorder %s48, %s49
    %p63 = scmp.eq.s32.totalorder %s15, 1
    %p64 = por %p62, %p63
    %p66 = scmp.ne.s32.totalorder %s49, %s65
    %p67 = scmp.eq.s32.totalorder %s15, 0
    %p68 = por %p66, %p67
    %s70 = sadd.s32 %s69, 1
    %p73 = scmp.eq.s32.totalorder %s9, 1
    %p74 = scmp.ne.s32.totalorder %s69, %s71
    %p75 = scmp.eq.s32.totalorder %s9, 0
    %p76 = por %p74, %p75
    %p77 = scmp.ne.s32.totalorder %s69, %s71
    %p78 = scmp.eq.s32.totalorder %s14, 1
    %p79 = por %p77, %p78
    %p80 = scmp.ne.s32.totalorder %s71, %s72
    %p81 = scmp.eq.s32.totalorder %s14, 0
    %p82 = por %p80, %p81
    %p83 = scmp.ne.s32.totalorder %s71, %s72
    %p84 = scmp.eq.s32.totalorder %s15, 1
    %p85 = por %p83, %p84
    %p87 = scmp.ne.s32.totalorder %s72, %s86
    %p88 = scmp.eq.s32.totalorder %s15, 0
    %p89 = por %p87, %p88
    %s90 = ssub.s32 %s9, %s16
    %p91 = scmp.eq.s32.totalorder %s90, 0
    %s93 = sadd.s32 %s92, 1
    %s94 = scalar_select %p91, %s92, %s93
    %p97 = pneg %p91
    %p98 = scmp.eq.s32.totalorder %s9, 1
    %p99 = por %p97, %p98
    %p100 = scmp.ne.s32.totalorder %s92, %s95
    %p101 = scmp.eq.s32.totalorder %s9, 0
    %p102 = por %p100, %p101
    %p103 = scmp.ne.s32.totalorder %s92, %s95
    %p104 = scmp.eq.s32.totalorder %s14, 1
    %p105 = por %p103, %p104
    %p106 = scmp.ne.s32.totalorder %s95, %s96
    %p107 = scmp.eq.s32.totalorder %s14, 0
    %p108 = por %p106, %p107
    %p109 = scmp.ne.s32.totalorder %s95, %s96
    %p110 = scmp.eq.s32.totalorder %s15, 1
    %p111 = por %p109, %p110
    %p113 = scmp.ne.s32.totalorder %s96, %s112
    %p114 = scmp.eq.s32.totalorder %s15, 0
    %p115 = por %p113, %p114
    %p116 = scmp.le.s32.totalorder 1, %s9
    %p117 = scmp.lt.s32.totalorder %s9, 3
    %p118 = pnand %p116, %p117
    %p119 = pneg %p118
    // Predicated region
    $region9: #{a_call__.4} parent=5 // pred_check
      _
    $region10: #{a_call__.4} parent=5 // pred_check_branch
      %121 = sbr.rel (%p118) target = $region12
    $region11: #{a_call__.4} parent=5 // pred_region
      %s122 = ssub.s32 %s9, 1
      // Predicated region
      $region13: #{a_call__.4} parent=11 // pred_check
        %p123 = pneg %p82
      $region14: #{a_call__.4} parent=11 // pred_check_branch
        %125 = sbr.rel (%p123) target = $region16
      $region15: #{a_call__.4} parent=11 // pred_region
        _
      $region16: #{a_call__.4} parent=11 // pred_fallthru
        _
    $region12: #{a_call__.4} parent=5 // pred_fallthru
      _
    %p126 = scmp.lt.s32.totalorder %s9, 2
    // Predicated region
    $region17: #{a_call__.4} parent=5 // pred_check
      %p127 = pneg %p126
    $region18: #{a_call__.4} parent=5 // pred_check_branch
      %129 = sbr.rel (%p127) target = $region20
    $region19: #{a_call__.4} parent=5 // pred_region
      // Predicated region
      $region21: #{a_call__.4} parent=19 // pred_check
        %p130 = pneg %p29
      $region22: #{a_call__.4} parent=19 // pred_check_branch
        %132 = sbr.rel (%p130) target = $region24
      $region23: #{a_call__.4} parent=19 // pred_region
        %p133 = scmp.lt.s32.totalorder %s9, 1
        %s134 = scalar_select %p133, %s9, 1
        %s135 = smul.addr %s134, 128
        %s136 = smul.addr %s135, 8
        %s137 = scalar_lea.vmem %s0, %s136
      $region24: #{a_call__.4} parent=19 // pred_fallthru
        _
      // Predicated region
      $region25: #{a_call__.4} parent=19 // pred_check
        %p138 = pneg %p55
      $region26: #{a_call__.4} parent=19 // pred_check_branch
        %140 = sbr.rel (%p138) target = $region28
      $region27: #{a_call__.4} parent=19 // pred_region
        %p141 = scmp.lt.s32.totalorder %s9, 1
        %s142 = scalar_select %p141, %s9, 1
        %s143 = smul.addr %s142, 192
        %s144 = smul.addr %s143, 8
        %s145 = scalar_lea.vmem %s1, %s144
      $region28: #{a_call__.4} parent=19 // pred_fallthru
        _
    $region20: #{a_call__.4} parent=5 // pred_fallthru
      _
    %p146 = scmp.le.s32.totalorder 1, %s9
    %p147 = scmp.lt.s32.totalorder %s9, 3
    %p148 = pnand %p146, %p147
    %p149 = pneg %p148
    // Predicated region
    $region29: #{a_call__.4} parent=5 // pred_check
      _
    $region30: #{a_call__.4} parent=5 // pred_check_branch
      %151 = sbr.rel (%p148) target = $region32
    $region31: #{a_call__.4} parent=5 // pred_region
      %s152 = ssub.s32 %s9, 1
      %p153 = scmp.lt.s32.totalorder %s14, 1
      %s154 = scalar_select %p153, %s14, 1
      %s155 = smul.addr %s154, 128
      %s156 = smul.addr %s155, 8
      %s157 = scalar_lea.vmem %s0, %s156
      %p158 = pneg %p35
      %p159 = pneg %p32
      %p160 = scmp.lt.s32.totalorder %s14, 1
      %s161 = scalar_select %p160, %s14, 1
      %s162 = smul.addr %s161, 192
      %s163 = smul.addr %s162, 8
      %s164 = scalar_lea.vmem %s1, %s163
      %p165 = pneg %p61
      %p166 = pneg %p58
      %p167 = pneg %p82
      %p168 = pneg %p79
      %p169 = pneg %p108
      %p170 = pneg %p105
      %p171 = scmp.lt.s32.totalorder %s14, 1
      %s172 = scalar_select %p171, %s14, 1
      %s173 = smul.addr %s172, 64
      %s174 = smul.addr %s173, 8
      %s175 = scalar_lea.vmem %s3, %s174
      %p176 = scmp.lt.s32.totalorder %s14, 1
      %s177 = scalar_select %p176, %s14, 1
      %s178 = smul.addr %s177, 128
      %s179 = smul.addr %s178, 8
      %s180 = scalar_lea.vmem %s0, %s179
      %p181 = scmp.lt.s32.totalorder %s14, 1
      %s182 = scalar_select %p181, %s14, 1
      %s183 = smul.addr %s182, 192
      %s184 = smul.addr %s183, 8
      %s185 = scalar_lea.vmem %s1, %s184
      %p186 = scmp.lt.s32.totalorder %s14, 1
      %s187 = scalar_select %p186, %s14, 1
      %s188 = smul.addr %s187, 64
      %s189 = smul.addr %s188, 8
      %s190 = scalar_lea.vmem %s3, %s189
      %v191 = vld [vmem:[%s185] sm:$0xff]
      %v192 = vld [vmem:[%s185 + $0x8] sm:$0xff]
      %v193 = vld [vmem:[%s185 + $0x10] sm:$0xff]
      %v194 = vld [vmem:[%s185 + $0x18] sm:$0xff]
      %v195 = vld [vmem:[%s185 + $0x20] sm:$0xff]
      %v196 = vld [vmem:[%s185 + $0x28] sm:$0xff]
      %v197 = vld [vmem:[%s185 + $0x30] sm:$0xff]
      %v198 = vld [vmem:[%s185 + $0x38] sm:$0xff]
      %v199 = vld [vmem:[%s185 + $0x40] sm:$0xff]
      %v200 = vld [vmem:[%s185 + $0x48] sm:$0xff]
      %v201 = vld [vmem:[%s185 + $0x50] sm:$0xff]
      %v202 = vld [vmem:[%s185 + $0x58] sm:$0xff]
      %v203 = vld [vmem:[%s185 + $0x60] sm:$0xff]
      %v204 = vld [vmem:[%s185 + $0x68] sm:$0xff]
      %v205 = vld [vmem:[%s185 + $0x70] sm:$0xff]
      %v206 = vld [vmem:[%s185 + $0x78] sm:$0xff]
      %v207 = vld [vmem:[%s185 + $0x80] sm:$0xff]
      %v208 = vld [vmem:[%s185 + $0x88] sm:$0xff]
      %v209 = vld [vmem:[%s185 + $0x90] sm:$0xff]
      %v210 = vld [vmem:[%s185 + $0x98] sm:$0xff]
      %v211 = vld [vmem:[%s185 + $0xa0] sm:$0xff]
      %v212 = vld [vmem:[%s185 + $0xa8] sm:$0xff]
      %v213 = vld [vmem:[%s185 + $0xb0] sm:$0xff]
      %v214 = vld [vmem:[%s185 + $0xb8] sm:$0xff]
      %v215 = vld [vmem:[%s185 + $0xc0] sm:$0xff]
      %v216 = vld [vmem:[%s185 + $0xc8] sm:$0xff]
      %v217 = vld [vmem:[%s185 + $0xd0] sm:$0xff]
      %v218 = vld [vmem:[%s185 + $0xd8] sm:$0xff]
      %v219 = vld [vmem:[%s185 + $0xe0] sm:$0xff]
      %v220 = vld [vmem:[%s185 + $0xe8] sm:$0xff]
      %v221 = vld [vmem:[%s185 + $0xf0] sm:$0xff]
      %v222 = vld [vmem:[%s185 + $0xf8] sm:$0xff]
      %v223 = vld [vmem:[%s185 + $0x100] sm:$0xff]
      %v224 = vld [vmem:[%s185 + $0x108] sm:$0xff]
      %v225 = vld [vmem:[%s185 + $0x110] sm:$0xff]
      %v226 = vld [vmem:[%s185 + $0x118] sm:$0xff]
      %v227 = vld [vmem:[%s185 + $0x120] sm:$0xff]
      %v228 = vld [vmem:[%s185 + $0x128] sm:$0xff]
      %v229 = vld [vmem:[%s185 + $0x130] sm:$0xff]
      %v230 = vld [vmem:[%s185 + $0x138] sm:$0xff]
      %v231 = vld [vmem:[%s185 + $0x140] sm:$0xff]
      %v232 = vld [vmem:[%s185 + $0x148] sm:$0xff]
      %v233 = vld [vmem:[%s185 + $0x150] sm:$0xff]
      %v234 = vld [vmem:[%s185 + $0x158] sm:$0xff]
      %v235 = vld [vmem:[%s185 + $0x160] sm:$0xff]
      %v236 = vld [vmem:[%s185 + $0x168] sm:$0xff]
      %v237 = vld [vmem:[%s185 + $0x170] sm:$0xff]
      %v238 = vld [vmem:[%s185 + $0x178] sm:$0xff]
      %v239 = vld [vmem:[%s185 + $0x180] sm:$0xff]
      %v240 = vld [vmem:[%s185 + $0x188] sm:$0xff]
      %v241 = vld [vmem:[%s185 + $0x190] sm:$0xff]
      %v242 = vld [vmem:[%s185 + $0x198] sm:$0xff]
      %v243 = vld [vmem:[%s185 + $0x1a0] sm:$0xff]
      %v244 = vld [vmem:[%s185 + $0x1a8] sm:$0xff]
      %v245 = vld [vmem:[%s185 + $0x1b0] sm:$0xff]
      %v246 = vld [vmem:[%s185 + $0x1b8] sm:$0xff]
      %v247 = vld [vmem:[%s185 + $0x1c0] sm:$0xff]
      %v248 = vld [vmem:[%s185 + $0x1c8] sm:$0xff]
      %v249 = vld [vmem:[%s185 + $0x1d0] sm:$0xff]
      %v250 = vld [vmem:[%s185 + $0x1d8] sm:$0xff]
      %v251 = vld [vmem:[%s185 + $0x1e0] sm:$0xff]
      %v252 = vld [vmem:[%s185 + $0x1e8] sm:$0xff]
      %v253 = vld [vmem:[%s185 + $0x1f0] sm:$0xff]
      %v254 = vld [vmem:[%s185 + $0x1f8] sm:$0xff]
      %v255 = vld [vmem:[%s185 + $0x200] sm:$0xff]
      %v256 = vld [vmem:[%s185 + $0x208] sm:$0xff]
      %v257 = vld [vmem:[%s185 + $0x210] sm:$0xff]
      %v258 = vld [vmem:[%s185 + $0x218] sm:$0xff]
      %v259 = vld [vmem:[%s185 + $0x220] sm:$0xff]
      %v260 = vld [vmem:[%s185 + $0x228] sm:$0xff]
      %v261 = vld [vmem:[%s185 + $0x230] sm:$0xff]
      %v262 = vld [vmem:[%s185 + $0x238] sm:$0xff]
      %v263 = vld [vmem:[%s185 + $0x240] sm:$0xff]
      %v264 = vld [vmem:[%s185 + $0x248] sm:$0xff]
      %v265 = vld [vmem:[%s185 + $0x250] sm:$0xff]
      %v266 = vld [vmem:[%s185 + $0x258] sm:$0xff]
      %v267 = vld [vmem:[%s185 + $0x260] sm:$0xff]
      %v268 = vld [vmem:[%s185 + $0x268] sm:$0xff]
      %v269 = vld [vmem:[%s185 + $0x270] sm:$0xff]
      %v270 = vld [vmem:[%s185 + $0x278] sm:$0xff]
      %v271 = vld [vmem:[%s185 + $0x280] sm:$0xff]
      %v272 = vld [vmem:[%s185 + $0x288] sm:$0xff]
      %v273 = vld [vmem:[%s185 + $0x290] sm:$0xff]
      %v274 = vld [vmem:[%s185 + $0x298] sm:$0xff]
      %v275 = vld [vmem:[%s185 + $0x2a0] sm:$0xff]
      %v276 = vld [vmem:[%s185 + $0x2a8] sm:$0xff]
      %v277 = vld [vmem:[%s185 + $0x2b0] sm:$0xff]
      %v278 = vld [vmem:[%s185 + $0x2b8] sm:$0xff]
      %v279 = vld [vmem:[%s185 + $0x2c0] sm:$0xff]
      %v280 = vld [vmem:[%s185 + $0x2c8] sm:$0xff]
      %v281 = vld [vmem:[%s185 + $0x2d0] sm:$0xff]
      %v282 = vld [vmem:[%s185 + $0x2d8] sm:$0xff]
      %v283 = vld [vmem:[%s185 + $0x2e0] sm:$0xff]
      %v284 = vld [vmem:[%s185 + $0x2e8] sm:$0xff]
      %v285 = vld [vmem:[%s185 + $0x2f0] sm:$0xff]
      %v286 = vld [vmem:[%s185 + $0x2f8] sm:$0xff]
      %v287 = vld [vmem:[%s185 + $0x300] sm:$0xff]
      %v288 = vld [vmem:[%s185 + $0x308] sm:$0xff]
      %v289 = vld [vmem:[%s185 + $0x310] sm:$0xff]
      %v290 = vld [vmem:[%s185 + $0x318] sm:$0xff]
      %v291 = vld [vmem:[%s185 + $0x320] sm:$0xff]
      %v292 = vld [vmem:[%s185 + $0x328] sm:$0xff]
      %v293 = vld [vmem:[%s185 + $0x330] sm:$0xff]
      %v294 = vld [vmem:[%s185 + $0x338] sm:$0xff]
      %v295 = vld [vmem:[%s185 + $0x340] sm:$0xff]
      %v296 = vld [vmem:[%s185 + $0x348] sm:$0xff]
      %v297 = vld [vmem:[%s185 + $0x350] sm:$0xff]
      %v298 = vld [vmem:[%s185 + $0x358] sm:$0xff]
      %v299 = vld [vmem:[%s185 + $0x360] sm:$0xff]
      %v300 = vld [vmem:[%s185 + $0x368] sm:$0xff]
      %v301 = vld [vmem:[%s185 + $0x370] sm:$0xff]
      %v302 = vld [vmem:[%s185 + $0x378] sm:$0xff]
      %v303 = vld [vmem:[%s185 + $0x380] sm:$0xff]
      %v304 = vld [vmem:[%s185 + $0x388] sm:$0xff]
      %v305 = vld [vmem:[%s185 + $0x390] sm:$0xff]
      %v306 = vld [vmem:[%s185 + $0x398] sm:$0xff]
      %v307 = vld [vmem:[%s185 + $0x3a0] sm:$0xff]
      %v308 = vld [vmem:[%s185 + $0x3a8] sm:$0xff]
      %v309 = vld [vmem:[%s185 + $0x3b0] sm:$0xff]
      %v310 = vld [vmem:[%s185 + $0x3b8] sm:$0xff]
      %v311 = vld [vmem:[%s185 + $0x3c0] sm:$0xff]
      %v312 = vld [vmem:[%s185 + $0x3c8] sm:$0xff]
      %v313 = vld [vmem:[%s185 + $0x3d0] sm:$0xff]
      %v314 = vld [vmem:[%s185 + $0x3d8] sm:$0xff]
      %v315 = vld [vmem:[%s185 + $0x3e0] sm:$0xff]
      %v316 = vld [vmem:[%s185 + $0x3e8] sm:$0xff]
      %v317 = vld [vmem:[%s185 + $0x3f0] sm:$0xff]
      %v318 = vld [vmem:[%s185 + $0x3f8] sm:$0xff]
      %v319 = vld [vmem:[%s185 + $0x400] sm:$0xff]
      %v320 = vld [vmem:[%s185 + $0x408] sm:$0xff]
      %v321 = vld [vmem:[%s185 + $0x410] sm:$0xff]
      %v322 = vld [vmem:[%s185 + $0x418] sm:$0xff]
      %v323 = vld [vmem:[%s185 + $0x420] sm:$0xff]
      %v324 = vld [vmem:[%s185 + $0x428] sm:$0xff]
      %v325 = vld [vmem:[%s185 + $0x430] sm:$0xff]
      %v326 = vld [vmem:[%s185 + $0x438] sm:$0xff]
      %v327 = vld [vmem:[%s185 + $0x440] sm:$0xff]
      %v328 = vld [vmem:[%s185 + $0x448] sm:$0xff]
      %v329 = vld [vmem:[%s185 + $0x450] sm:$0xff]
      %v330 = vld [vmem:[%s185 + $0x458] sm:$0xff]
      %v331 = vld [vmem:[%s185 + $0x460] sm:$0xff]
      %v332 = vld [vmem:[%s185 + $0x468] sm:$0xff]
      %v333 = vld [vmem:[%s185 + $0x470] sm:$0xff]
      %v334 = vld [vmem:[%s185 + $0x478] sm:$0xff]
      %v335 = vld [vmem:[%s185 + $0x480] sm:$0xff]
      %v336 = vld [vmem:[%s185 + $0x488] sm:$0xff]
      %v337 = vld [vmem:[%s185 + $0x490] sm:$0xff]
      %v338 = vld [vmem:[%s185 + $0x498] sm:$0xff]
      %v339 = vld [vmem:[%s185 + $0x4a0] sm:$0xff]
      %v340 = vld [vmem:[%s185 + $0x4a8] sm:$0xff]
      %v341 = vld [vmem:[%s185 + $0x4b0] sm:$0xff]
      %v342 = vld [vmem:[%s185 + $0x4b8] sm:$0xff]
      %v343 = vld [vmem:[%s185 + $0x4c0] sm:$0xff]
      %v344 = vld [vmem:[%s185 + $0x4c8] sm:$0xff]
      %v345 = vld [vmem:[%s185 + $0x4d0] sm:$0xff]
      %v346 = vld [vmem:[%s185 + $0x4d8] sm:$0xff]
      %v347 = vld [vmem:[%s185 + $0x4e0] sm:$0xff]
      %v348 = vld [vmem:[%s185 + $0x4e8] sm:$0xff]
      %v349 = vld [vmem:[%s185 + $0x4f0] sm:$0xff]
      %v350 = vld [vmem:[%s185 + $0x4f8] sm:$0xff]
      %v351 = vld [vmem:[%s185 + $0x500] sm:$0xff]
      %v352 = vld [vmem:[%s185 + $0x508] sm:$0xff]
      %v353 = vld [vmem:[%s185 + $0x510] sm:$0xff]
      %v354 = vld [vmem:[%s185 + $0x518] sm:$0xff]
      %v355 = vld [vmem:[%s185 + $0x520] sm:$0xff]
      %v356 = vld [vmem:[%s185 + $0x528] sm:$0xff]
      %v357 = vld [vmem:[%s185 + $0x530] sm:$0xff]
      %v358 = vld [vmem:[%s185 + $0x538] sm:$0xff]
      %v359 = vld [vmem:[%s185 + $0x540] sm:$0xff]
      %v360 = vld [vmem:[%s185 + $0x548] sm:$0xff]
      %v361 = vld [vmem:[%s185 + $0x550] sm:$0xff]
      %v362 = vld [vmem:[%s185 + $0x558] sm:$0xff]
      %v363 = vld [vmem:[%s185 + $0x560] sm:$0xff]
      %v364 = vld [vmem:[%s185 + $0x568] sm:$0xff]
      %v365 = vld [vmem:[%s185 + $0x570] sm:$0xff]
      %v366 = vld [vmem:[%s185 + $0x578] sm:$0xff]
      %v367 = vld [vmem:[%s185 + $0x580] sm:$0xff]
      %v368 = vld [vmem:[%s185 + $0x588] sm:$0xff]
      %v369 = vld [vmem:[%s185 + $0x590] sm:$0xff]
      %v370 = vld [vmem:[%s185 + $0x598] sm:$0xff]
      %v371 = vld [vmem:[%s185 + $0x5a0] sm:$0xff]
      %v372 = vld [vmem:[%s185 + $0x5a8] sm:$0xff]
      %v373 = vld [vmem:[%s185 + $0x5b0] sm:$0xff]
      %v374 = vld [vmem:[%s185 + $0x5b8] sm:$0xff]
      %v375 = vld [vmem:[%s185 + $0x5c0] sm:$0xff]
      %v376 = vld [vmem:[%s185 + $0x5c8] sm:$0xff]
      %v377 = vld [vmem:[%s185 + $0x5d0] sm:$0xff]
      %v378 = vld [vmem:[%s185 + $0x5d8] sm:$0xff]
      %v379 = vld [vmem:[%s185 + $0x5e0] sm:$0xff]
      %v380 = vld [vmem:[%s185 + $0x5e8] sm:$0xff]
      %v381 = vld [vmem:[%s185 + $0x5f0] sm:$0xff]
      %v382 = vld [vmem:[%s185 + $0x5f8] sm:$0xff]
      %v383 = vmul.f32 %v191, %v191
      %v384 = vmul.f32 %v192, %v192
      %v385 = vmul.f32 %v193, %v193
      %v386 = vmul.f32 %v194, %v194
      %v387 = vmul.f32 %v195, %v195
      %v388 = vmul.f32 %v196, %v196
      %v389 = vmul.f32 %v197, %v197
      %v390 = vmul.f32 %v198, %v198
      %v391 = vmul.f32 %v199, %v199
      %v392 = vmul.f32 %v200, %v200
      %v393 = vmul.f32 %v201, %v201
      %v394 = vmul.f32 %v202, %v202
      %v395 = vmul.f32 %v203, %v203
      %v396 = vmul.f32 %v204, %v204
      %v397 = vmul.f32 %v205, %v205
      %v398 = vmul.f32 %v206, %v206
      %v399 = vmul.f32 %v207, %v207
      %v400 = vmul.f32 %v208, %v208
      %v401 = vmul.f32 %v209, %v209
      %v402 = vmul.f32 %v210, %v210
      %v403 = vmul.f32 %v211, %v211
      %v404 = vmul.f32 %v212, %v212
      %v405 = vmul.f32 %v213, %v213
      %v406 = vmul.f32 %v214, %v214
      %v407 = vmul.f32 %v215, %v215
      %v408 = vmul.f32 %v216, %v216
      %v409 = vmul.f32 %v217, %v217
      %v410 = vmul.f32 %v218, %v218
      %v411 = vmul.f32 %v219, %v219
      %v412 = vmul.f32 %v220, %v220
      %v413 = vmul.f32 %v221, %v221
      %v414 = vmul.f32 %v222, %v222
      %v415 = vmul.f32 %v223, %v223
      %v416 = vmul.f32 %v224, %v224
      %v417 = vmul.f32 %v225, %v225
      %v418 = vmul.f32 %v226, %v226
      %v419 = vmul.f32 %v227, %v227
      %v420 = vmul.f32 %v228, %v228
      %v421 = vmul.f32 %v229, %v229
      %v422 = vmul.f32 %v230, %v230
      %v423 = vmul.f32 %v231, %v231
      %v424 = vmul.f32 %v232, %v232
      %v425 = vmul.f32 %v233, %v233
      %v426 = vmul.f32 %v234, %v234
      %v427 = vmul.f32 %v235, %v235
      %v428 = vmul.f32 %v236, %v236
      %v429 = vmul.f32 %v237, %v237
      %v430 = vmul.f32 %v238, %v238
      %v431 = vmul.f32 %v239, %v239
      %v432 = vmul.f32 %v240, %v240
      %v433 = vmul.f32 %v241, %v241
      %v434 = vmul.f32 %v242, %v242
      %v435 = vmul.f32 %v243, %v243
      %v436 = vmul.f32 %v244, %v244
      %v437 = vmul.f32 %v245, %v245
      %v438 = vmul.f32 %v246, %v246
      %v439 = vmul.f32 %v247, %v247
      %v440 = vmul.f32 %v248, %v248
      %v441 = vmul.f32 %v249, %v249
      %v442 = vmul.f32 %v250, %v250
      %v443 = vmul.f32 %v251, %v251
      %v444 = vmul.f32 %v252, %v252
      %v445 = vmul.f32 %v253, %v253
      %v446 = vmul.f32 %v254, %v254
      %v447 = vmul.f32 %v255, %v255
      %v448 = vmul.f32 %v256, %v256
      %v449 = vmul.f32 %v257, %v257
      %v450 = vmul.f32 %v258, %v258
      %v451 = vmul.f32 %v259, %v259
      %v452 = vmul.f32 %v260, %v260
      %v453 = vmul.f32 %v261, %v261
      %v454 = vmul.f32 %v262, %v262
      %v455 = vmul.f32 %v263, %v263
      %v456 = vmul.f32 %v264, %v264
      %v457 = vmul.f32 %v265, %v265
      %v458 = vmul.f32 %v266, %v266
      %v459 = vmul.f32 %v267, %v267
      %v460 = vmul.f32 %v268, %v268
      %v461 = vmul.f32 %v269, %v269
      %v462 = vmul.f32 %v270, %v270
      %v463 = vmul.f32 %v271, %v271
      %v464 = vmul.f32 %v272, %v272
      %v465 = vmul.f32 %v273, %v273
      %v466 = vmul.f32 %v274, %v274
      %v467 = vmul.f32 %v275, %v275
      %v468 = vmul.f32 %v276, %v276
      %v469 = vmul.f32 %v277, %v277
      %v470 = vmul.f32 %v278, %v278
      %v471 = vmul.f32 %v279, %v279
      %v472 = vmul.f32 %v280, %v280
      %v473 = vmul.f32 %v281, %v281
      %v474 = vmul.f32 %v282, %v282
      %v475 = vmul.f32 %v283, %v283
      %v476 = vmul.f32 %v284, %v284
      %v477 = vmul.f32 %v285, %v285
      %v478 = vmul.f32 %v286, %v286
      %v479 = vmul.f32 %v287, %v287
      %v480 = vmul.f32 %v288, %v288
      %v481 = vmul.f32 %v289, %v289
      %v482 = vmul.f32 %v290, %v290
      %v483 = vmul.f32 %v291, %v291
      %v484 = vmul.f32 %v292, %v292
      %v485 = vmul.f32 %v293, %v293
      %v486 = vmul.f32 %v294, %v294
      %v487 = vmul.f32 %v295, %v295
      %v488 = vmul.f32 %v296, %v296
      %v489 = vmul.f32 %v297, %v297
      %v490 = vmul.f32 %v298, %v298
      %v491 = vmul.f32 %v299, %v299
      %v492 = vmul.f32 %v300, %v300
      %v493 = vmul.f32 %v301, %v301
      %v494 = vmul.f32 %v302, %v302
      %v495 = vmul.f32 %v303, %v303
      %v496 = vmul.f32 %v304, %v304
      %v497 = vmul.f32 %v305, %v305
      %v498 = vmul.f32 %v306, %v306
      %v499 = vmul.f32 %v307, %v307
      %v500 = vmul.f32 %v308, %v308
      %v501 = vmul.f32 %v309, %v309
      %v502 = vmul.f32 %v310, %v310
      %v503 = vmul.f32 %v311, %v311
      %v504 = vmul.f32 %v312, %v312
      %v505 = vmul.f32 %v313, %v313
      %v506 = vmul.f32 %v314, %v314
      %v507 = vmul.f32 %v315, %v315
      %v508 = vmul.f32 %v316, %v316
      %v509 = vmul.f32 %v317, %v317
      %v510 = vmul.f32 %v318, %v318
      %v511 = vadd.f32 %v383, %v447
      %v512 = vadd.f32 %v384, %v448
      %v513 = vadd.f32 %v385, %v449
      %v514 = vadd.f32 %v386, %v450
      %v515 = vadd.f32 %v387, %v451
      %v516 = vadd.f32 %v388, %v452
      %v517 = vadd.f32 %v389, %v453
      %v518 = vadd.f32 %v390, %v454
      %v519 = vadd.f32 %v391, %v455
      %v520 = vadd.f32 %v392, %v456
      %v521 = vadd.f32 %v393, %v457
      %v522 = vadd.f32 %v394, %v458
      %v523 = vadd.f32 %v395, %v459
      %v524 = vadd.f32 %v396, %v460
      %v525 = vadd.f32 %v397, %v461
      %v526 = vadd.f32 %v398, %v462
      %v527 = vadd.f32 %v399, %v463
      %v528 = vadd.f32 %v400, %v464
      %v529 = vadd.f32 %v401, %v465
      %v530 = vadd.f32 %v402, %v466
      %v531 = vadd.f32 %v403, %v467
      %v532 = vadd.f32 %v404, %v468
      %v533 = vadd.f32 %v405, %v469
      %v534 = vadd.f32 %v406, %v470
      %v535 = vadd.f32 %v407, %v471
      %v536 = vadd.f32 %v408, %v472
      %v537 = vadd.f32 %v409, %v473
      %v538 = vadd.f32 %v410, %v474
      %v539 = vadd.f32 %v411, %v475
      %v540 = vadd.f32 %v412, %v476
      %v541 = vadd.f32 %v413, %v477
      %v542 = vadd.f32 %v414, %v478
      %v543 = vadd.f32 %v415, %v479
      %v544 = vadd.f32 %v416, %v480
      %v545 = vadd.f32 %v417, %v481
      %v546 = vadd.f32 %v418, %v482
      %v547 = vadd.f32 %v419, %v483
      %v548 = vadd.f32 %v420, %v484
      %v549 = vadd.f32 %v421, %v485
      %v550 = vadd.f32 %v422, %v486
      %v551 = vadd.f32 %v423, %v487
      %v552 = vadd.f32 %v424, %v488
      %v553 = vadd.f32 %v425, %v489
      %v554 = vadd.f32 %v426, %v490
      %v555 = vadd.f32 %v427, %v491
      %v556 = vadd.f32 %v428, %v492
      %v557 = vadd.f32 %v429, %v493
      %v558 = vadd.f32 %v430, %v494
      %v559 = vadd.f32 %v431, %v495
      %v560 = vadd.f32 %v432, %v496
      %v561 = vadd.f32 %v433, %v497
      %v562 = vadd.f32 %v434, %v498
      %v563 = vadd.f32 %v435, %v499
      %v564 = vadd.f32 %v436, %v500
      %v565 = vadd.f32 %v437, %v501
      %v566 = vadd.f32 %v438, %v502
      %v567 = vadd.f32 %v439, %v503
      %v568 = vadd.f32 %v440, %v504
      %v569 = vadd.f32 %v441, %v505
      %v570 = vadd.f32 %v442, %v506
      %v571 = vadd.f32 %v443, %v507
      %v572 = vadd.f32 %v444, %v508
      %v573 = vadd.f32 %v445, %v509
      %v574 = vadd.f32 %v446, %v510
      %v575 = vmul.f32 %v319, %v319
      %v576 = vmul.f32 %v320, %v320
      %v577 = vmul.f32 %v321, %v321
      %v578 = vmul.f32 %v322, %v322
      %v579 = vmul.f32 %v323, %v323
      %v580 = vmul.f32 %v324, %v324
      %v581 = vmul.f32 %v325, %v325
      %v582 = vmul.f32 %v326, %v326
      %v583 = vmul.f32 %v327, %v327
      %v584 = vmul.f32 %v328, %v328
      %v585 = vmul.f32 %v329, %v329
      %v586 = vmul.f32 %v330, %v330
      %v587 = vmul.f32 %v331, %v331
      %v588 = vmul.f32 %v332, %v332
      %v589 = vmul.f32 %v333, %v333
      %v590 = vmul.f32 %v334, %v334
      %v591 = vmul.f32 %v335, %v335
      %v592 = vmul.f32 %v336, %v336
      %v593 = vmul.f32 %v337, %v337
      %v594 = vmul.f32 %v338, %v338
      %v595 = vmul.f32 %v339, %v339
      %v596 = vmul.f32 %v340, %v340
      %v597 = vmul.f32 %v341, %v341
      %v598 = vmul.f32 %v342, %v342
      %v599 = vmul.f32 %v343, %v343
      %v600 = vmul.f32 %v344, %v344
      %v601 = vmul.f32 %v345, %v345
      %v602 = vmul.f32 %v346, %v346
      %v603 = vmul.f32 %v347, %v347
      %v604 = vmul.f32 %v348, %v348
      %v605 = vmul.f32 %v349, %v349
      %v606 = vmul.f32 %v350, %v350
      %v607 = vmul.f32 %v351, %v351
      %v608 = vmul.f32 %v352, %v352
      %v609 = vmul.f32 %v353, %v353
      %v610 = vmul.f32 %v354, %v354
      %v611 = vmul.f32 %v355, %v355
      %v612 = vmul.f32 %v356, %v356
      %v613 = vmul.f32 %v357, %v357
      %v614 = vmul.f32 %v358, %v358
      %v615 = vmul.f32 %v359, %v359
      %v616 = vmul.f32 %v360, %v360
      %v617 = vmul.f32 %v361, %v361
      %v618 = vmul.f32 %v362, %v362
      %v619 = vmul.f32 %v363, %v363
      %v620 = vmul.f32 %v364, %v364
      %v621 = vmul.f32 %v365, %v365
      %v622 = vmul.f32 %v366, %v366
      %v623 = vmul.f32 %v367, %v367
      %v624 = vmul.f32 %v368, %v368
      %v625 = vmul.f32 %v369, %v369
      %v626 = vmul.f32 %v370, %v370
      %v627 = vmul.f32 %v371, %v371
      %v628 = vmul.f32 %v372, %v372
      %v629 = vmul.f32 %v373, %v373
      %v630 = vmul.f32 %v374, %v374
      %v631 = vmul.f32 %v375, %v375
      %v632 = vmul.f32 %v376, %v376
      %v633 = vmul.f32 %v377, %v377
      %v634 = vmul.f32 %v378, %v378
      %v635 = vmul.f32 %v379, %v379
      %v636 = vmul.f32 %v380, %v380
      %v637 = vmul.f32 %v381, %v381
      %v638 = vmul.f32 %v382, %v382
      %v639 = vadd.f32 %v511, %v575
      %v640 = vadd.f32 %v512, %v576
      %v641 = vadd.f32 %v513, %v577
      %v642 = vadd.f32 %v514, %v578
      %v643 = vadd.f32 %v515, %v579
      %v644 = vadd.f32 %v516, %v580
      %v645 = vadd.f32 %v517, %v581
      %v646 = vadd.f32 %v518, %v582
      %v647 = vadd.f32 %v519, %v583
      %v648 = vadd.f32 %v520, %v584
      %v649 = vadd.f32 %v521, %v585
      %v650 = vadd.f32 %v522, %v586
      %v651 = vadd.f32 %v523, %v587
      %v652 = vadd.f32 %v524, %v588
      %v653 = vadd.f32 %v525, %v589
      %v654 = vadd.f32 %v526, %v590
      %v655 = vadd.f32 %v527, %v591
      %v656 = vadd.f32 %v528, %v592
      %v657 = vadd.f32 %v529, %v593
      %v658 = vadd.f32 %v530, %v594
      %v659 = vadd.f32 %v531, %v595
      %v660 = vadd.f32 %v532, %v596
      %v661 = vadd.f32 %v533, %v597
      %v662 = vadd.f32 %v534, %v598
      %v663 = vadd.f32 %v535, %v599
      %v664 = vadd.f32 %v536, %v600
      %v665 = vadd.f32 %v537, %v601
      %v666 = vadd.f32 %v538, %v602
      %v667 = vadd.f32 %v539, %v603
      %v668 = vadd.f32 %v540, %v604
      %v669 = vadd.f32 %v541, %v605
      %v670 = vadd.f32 %v542, %v606
      %v671 = vadd.f32 %v543, %v607
      %v672 = vadd.f32 %v544, %v608
      %v673 = vadd.f32 %v545, %v609
      %v674 = vadd.f32 %v546, %v610
      %v675 = vadd.f32 %v547, %v611
      %v676 = vadd.f32 %v548, %v612
      %v677 = vadd.f32 %v549, %v613
      %v678 = vadd.f32 %v550, %v614
      %v679 = vadd.f32 %v551, %v615
      %v680 = vadd.f32 %v552, %v616
      %v681 = vadd.f32 %v553, %v617
      %v682 = vadd.f32 %v554, %v618
      %v683 = vadd.f32 %v555, %v619
      %v684 = vadd.f32 %v556, %v620
      %v685 = vadd.f32 %v557, %v621
      %v686 = vadd.f32 %v558, %v622
      %v687 = vadd.f32 %v559, %v623
      %v688 = vadd.f32 %v560, %v624
      %v689 = vadd.f32 %v561, %v625
      %v690 = vadd.f32 %v562, %v626
      %v691 = vadd.f32 %v563, %v627
      %v692 = vadd.f32 %v564, %v628
      %v693 = vadd.f32 %v565, %v629
      %v694 = vadd.f32 %v566, %v630
      %v695 = vadd.f32 %v567, %v631
      %v696 = vadd.f32 %v568, %v632
      %v697 = vadd.f32 %v569, %v633
      %v698 = vadd.f32 %v570, %v634
      %v699 = vadd.f32 %v571, %v635
      %v700 = vadd.f32 %v572, %v636
      %v701 = vadd.f32 %v573, %v637
      %v702 = vadd.f32 %v574, %v638
      %v703 = vadd.f32 %v639, 1.1920929e-07
      %v704 = vadd.f32 %v640, 1.1920929e-07
      %v705 = vadd.f32 %v641, 1.1920929e-07
      %v706 = vadd.f32 %v642, 1.1920929e-07
      %v707 = vadd.f32 %v643, 1.1920929e-07
      %v708 = vadd.f32 %v644, 1.1920929e-07
      %v709 = vadd.f32 %v645, 1.1920929e-07
      %v710 = vadd.f32 %v646, 1.1920929e-07
      %v711 = vadd.f32 %v647, 1.1920929e-07
      %v712 = vadd.f32 %v648, 1.1920929e-07
      %v713 = vadd.f32 %v649, 1.1920929e-07
      %v714 = vadd.f32 %v650, 1.1920929e-07
      %v715 = vadd.f32 %v651, 1.1920929e-07
      %v716 = vadd.f32 %v652, 1.1920929e-07
      %v717 = vadd.f32 %v653, 1.1920929e-07
      %v718 = vadd.f32 %v654, 1.1920929e-07
      %v719 = vadd.f32 %v655, 1.1920929e-07
      %v720 = vadd.f32 %v656, 1.1920929e-07
      %v721 = vadd.f32 %v657, 1.1920929e-07
      %v722 = vadd.f32 %v658, 1.1920929e-07
      %v723 = vadd.f32 %v659, 1.1920929e-07
      %v724 = vadd.f32 %v660, 1.1920929e-07
      %v725 = vadd.f32 %v661, 1.1920929e-07
      %v726 = vadd.f32 %v662, 1.1920929e-07
      %v727 = vadd.f32 %v663, 1.1920929e-07
      %v728 = vadd.f32 %v664, 1.1920929e-07
      %v729 = vadd.f32 %v665, 1.1920929e-07
      %v730 = vadd.f32 %v666, 1.1920929e-07
      %v731 = vadd.f32 %v667, 1.1920929e-07
      %v732 = vadd.f32 %v668, 1.1920929e-07
      %v733 = vadd.f32 %v669, 1.1920929e-07
      %v734 = vadd.f32 %v670, 1.1920929e-07
      %v735 = vadd.f32 %v671, 1.1920929e-07
      %v736 = vadd.f32 %v672, 1.1920929e-07
      %v737 = vadd.f32 %v673, 1.1920929e-07
      %v738 = vadd.f32 %v674, 1.1920929e-07
      %v739 = vadd.f32 %v675, 1.1920929e-07
      %v740 = vadd.f32 %v676, 1.1920929e-07
      %v741 = vadd.f32 %v677, 1.1920929e-07
      %v742 = vadd.f32 %v678, 1.1920929e-07
      %v743 = vadd.f32 %v679, 1.1920929e-07
      %v744 = vadd.f32 %v680, 1.1920929e-07
      %v745 = vadd.f32 %v681, 1.1920929e-07
      %v746 = vadd.f32 %v682, 1.1920929e-07
      %v747 = vadd.f32 %v683, 1.1920929e-07
      %v748 = vadd.f32 %v684, 1.1920929e-07
      %v749 = vadd.f32 %v685, 1.1920929e-07
      %v750 = vadd.f32 %v686, 1.1920929e-07
      %v751 = vadd.f32 %v687, 1.1920929e-07
      %v752 = vadd.f32 %v688, 1.1920929e-07
      %v753 = vadd.f32 %v689, 1.1920929e-07
      %v754 = vadd.f32 %v690, 1.1920929e-07
      %v755 = vadd.f32 %v691, 1.1920929e-07
      %v756 = vadd.f32 %v692, 1.1920929e-07
      %v757 = vadd.f32 %v693, 1.1920929e-07
      %v758 = vadd.f32 %v694, 1.1920929e-07
      %v759 = vadd.f32 %v695, 1.1920929e-07
      %v760 = vadd.f32 %v696, 1.1920929e-07
      %v761 = vadd.f32 %v697, 1.1920929e-07
      %v762 = vadd.f32 %v698, 1.1920929e-07
      %v763 = vadd.f32 %v699, 1.1920929e-07
      %v764 = vadd.f32 %v700, 1.1920929e-07
      %v765 = vadd.f32 %v701, 1.1920929e-07
      %v766 = vadd.f32 %v702, 1.1920929e-07
      %v767 = vrsqrt.pop %v703
      %v768 = vmul.f32 %v767, %v703
      %v769 = vmul.f32 %v768, %v767
      %v770 = vmul.f32 0.5, %v769
      %v771 = vsub.f32 1.5, %v770
      %v772 = vmul.f32 %v767, %v771
      %v773 = vmul.f32 %v703, %v772
      %vm774 = vcmp.eq.f32.partialorder %v703, inf
      %v775 = vsel %vm774, %v703, %v773
      %vm776 = vcmp.eq.f32.partialorder %v703, 0.0
      %v777 = vand.u32 %v703, 2147483648
      %v778 = vsel %vm776, %v777, %v775
      %v779 = vrsqrt.pop %v704
      %v780 = vmul.f32 %v779, %v704
      %v781 = vmul.f32 %v780, %v779
      %v782 = vmul.f32 0.5, %v781
      %v783 = vsub.f32 1.5, %v782
      %v784 = vmul.f32 %v779, %v783
      %v785 = vmul.f32 %v704, %v784
      %vm786 = vcmp.eq.f32.partialorder %v704, inf
      %v787 = vsel %vm786, %v704, %v785
      %vm788 = vcmp.eq.f32.partialorder %v704, 0.0
      %v789 = vand.u32 %v704, 2147483648
      %v790 = vsel %vm788, %v789, %v787
      %v791 = vrsqrt.pop %v705
      %v792 = vmul.f32 %v791, %v705
      %v793 = vmul.f32 %v792, %v791
      %v794 = vmul.f32 0.5, %v793
      %v795 = vsub.f32 1.5, %v794
      %v796 = vmul.f32 %v791, %v795
      %v797 = vmul.f32 %v705, %v796
      %vm798 = vcmp.eq.f32.partialorder %v705, inf
      %v799 = vsel %vm798, %v705, %v797
      %vm800 = vcmp.eq.f32.partialorder %v705, 0.0
      %v801 = vand.u32 %v705, 2147483648
      %v802 = vsel %vm800, %v801, %v799
      %v803 = vrsqrt.pop %v706
      %v804 = vmul.f32 %v803, %v706
      %v805 = vmul.f32 %v804, %v803
      %v806 = vmul.f32 0.5, %v805
      %v807 = vsub.f32 1.5, %v806
      %v808 = vmul.f32 %v803, %v807
      %v809 = vmul.f32 %v706, %v808
      %vm810 = vcmp.eq.f32.partialorder %v706, inf
      %v811 = vsel %vm810, %v706, %v809
      %vm812 = vcmp.eq.f32.partialorder %v706, 0.0
      %v813 = vand.u32 %v706, 2147483648
      %v814 = vsel %vm812, %v813, %v811
      %v815 = vrsqrt.pop %v707
      %v816 = vmul.f32 %v815, %v707
      %v817 = vmul.f32 %v816, %v815
      %v818 = vmul.f32 0.5, %v817
      %v819 = vsub.f32 1.5, %v818
      %v820 = vmul.f32 %v815, %v819
      %v821 = vmul.f32 %v707, %v820
      %vm822 = vcmp.eq.f32.partialorder %v707, inf
      %v823 = vsel %vm822, %v707, %v821
      %vm824 = vcmp.eq.f32.partialorder %v707, 0.0
      %v825 = vand.u32 %v707, 2147483648
      %v826 = vsel %vm824, %v825, %v823
      %v827 = vrsqrt.pop %v708
      %v828 = vmul.f32 %v827, %v708
      %v829 = vmul.f32 %v828, %v827
      %v830 = vmul.f32 0.5, %v829
      %v831 = vsub.f32 1.5, %v830
      %v832 = vmul.f32 %v827, %v831
      %v833 = vmul.f32 %v708, %v832
      %vm834 = vcmp.eq.f32.partialorder %v708, inf
      %v835 = vsel %vm834, %v708, %v833
      %vm836 = vcmp.eq.f32.partialorder %v708, 0.0
      %v837 = vand.u32 %v708, 2147483648
      %v838 = vsel %vm836, %v837, %v835
      %v839 = vrsqrt.pop %v709
      %v840 = vmul.f32 %v839, %v709
      %v841 = vmul.f32 %v840, %v839
      %v842 = vmul.f32 0.5, %v841
      %v843 = vsub.f32 1.5, %v842
      %v844 = vmul.f32 %v839, %v843
      %v845 = vmul.f32 %v709, %v844
      %vm846 = vcmp.eq.f32.partialorder %v709, inf
      %v847 = vsel %vm846, %v709, %v845
      %vm848 = vcmp.eq.f32.partialorder %v709, 0.0
      %v849 = vand.u32 %v709, 2147483648
      %v850 = vsel %vm848, %v849, %v847
      %v851 = vrsqrt.pop %v710
      %v852 = vmul.f32 %v851, %v710
      %v853 = vmul.f32 %v852, %v851
      %v854 = vmul.f32 0.5, %v853
      %v855 = vsub.f32 1.5, %v854
      %v856 = vmul.f32 %v851, %v855
      %v857 = vmul.f32 %v710, %v856
      %vm858 = vcmp.eq.f32.partialorder %v710, inf
      %v859 = vsel %vm858, %v710, %v857
      %vm860 = vcmp.eq.f32.partialorder %v710, 0.0
      %v861 = vand.u32 %v710, 2147483648
      %v862 = vsel %vm860, %v861, %v859
      %v863 = vrsqrt.pop %v711
      %v864 = vmul.f32 %v863, %v711
      %v865 = vmul.f32 %v864, %v863
      %v866 = vmul.f32 0.5, %v865
      %v867 = vsub.f32 1.5, %v866
      %v868 = vmul.f32 %v863, %v867
      %v869 = vmul.f32 %v711, %v868
      %vm870 = vcmp.eq.f32.partialorder %v711, inf
      %v871 = vsel %vm870, %v711, %v869
      %vm872 = vcmp.eq.f32.partialorder %v711, 0.0
      %v873 = vand.u32 %v711, 2147483648
      %v874 = vsel %vm872, %v873, %v871
      %v875 = vrsqrt.pop %v712
      %v876 = vmul.f32 %v875, %v712
      %v877 = vmul.f32 %v876, %v875
      %v878 = vmul.f32 0.5, %v877
      %v879 = vsub.f32 1.5, %v878
      %v880 = vmul.f32 %v875, %v879
      %v881 = vmul.f32 %v712, %v880
      %vm882 = vcmp.eq.f32.partialorder %v712, inf
      %v883 = vsel %vm882, %v712, %v881
      %vm884 = vcmp.eq.f32.partialorder %v712, 0.0
      %v885 = vand.u32 %v712, 2147483648
      %v886 = vsel %vm884, %v885, %v883
      %v887 = vrsqrt.pop %v713
      %v888 = vmul.f32 %v887, %v713
      %v889 = vmul.f32 %v888, %v887
      %v890 = vmul.f32 0.5, %v889
      %v891 = vsub.f32 1.5, %v890
      %v892 = vmul.f32 %v887, %v891
      %v893 = vmul.f32 %v713, %v892
      %vm894 = vcmp.eq.f32.partialorder %v713, inf
      %v895 = vsel %vm894, %v713, %v893
      %vm896 = vcmp.eq.f32.partialorder %v713, 0.0
      %v897 = vand.u32 %v713, 2147483648
      %v898 = vsel %vm896, %v897, %v895
      %v899 = vrsqrt.pop %v714
      %v900 = vmul.f32 %v899, %v714
      %v901 = vmul.f32 %v900, %v899
      %v902 = vmul.f32 0.5, %v901
      %v903 = vsub.f32 1.5, %v902
      %v904 = vmul.f32 %v899, %v903
      %v905 = vmul.f32 %v714, %v904
      %vm906 = vcmp.eq.f32.partialorder %v714, inf
      %v907 = vsel %vm906, %v714, %v905
      %vm908 = vcmp.eq.f32.partialorder %v714, 0.0
      %v909 = vand.u32 %v714, 2147483648
      %v910 = vsel %vm908, %v909, %v907
      %v911 = vrsqrt.pop %v715
      %v912 = vmul.f32 %v911, %v715
      %v913 = vmul.f32 %v912, %v911
      %v914 = vmul.f32 0.5, %v913
      %v915 = vsub.f32 1.5, %v914
      %v916 = vmul.f32 %v911, %v915
      %v917 = vmul.f32 %v715, %v916
      %vm918 = vcmp.eq.f32.partialorder %v715, inf
      %v919 = vsel %vm918, %v715, %v917
      %vm920 = vcmp.eq.f32.partialorder %v715, 0.0
      %v921 = vand.u32 %v715, 2147483648
      %v922 = vsel %vm920, %v921, %v919
      %v923 = vrsqrt.pop %v716
      %v924 = vmul.f32 %v923, %v716
      %v925 = vmul.f32 %v924, %v923
      %v926 = vmul.f32 0.5, %v925
      %v927 = vsub.f32 1.5, %v926
      %v928 = vmul.f32 %v923, %v927
      %v929 = vmul.f32 %v716, %v928
      %vm930 = vcmp.eq.f32.partialorder %v716, inf
      %v931 = vsel %vm930, %v716, %v929
      %vm932 = vcmp.eq.f32.partialorder %v716, 0.0
      %v933 = vand.u32 %v716, 2147483648
      %v934 = vsel %vm932, %v933, %v931
      %v935 = vrsqrt.pop %v717
      %v936 = vmul.f32 %v935, %v717
      %v937 = vmul.f32 %v936, %v935
      %v938 = vmul.f32 0.5, %v937
      %v939 = vsub.f32 1.5, %v938
      %v940 = vmul.f32 %v935, %v939
      %v941 = vmul.f32 %v717, %v940
      %vm942 = vcmp.eq.f32.partialorder %v717, inf
      %v943 = vsel %vm942, %v717, %v941
      %vm944 = vcmp.eq.f32.partialorder %v717, 0.0
      %v945 = vand.u32 %v717, 2147483648
      %v946 = vsel %vm944, %v945, %v943
      %v947 = vrsqrt.pop %v718
      %v948 = vmul.f32 %v947, %v718
      %v949 = vmul.f32 %v948, %v947
      %v950 = vmul.f32 0.5, %v949
      %v951 = vsub.f32 1.5, %v950
      %v952 = vmul.f32 %v947, %v951
      %v953 = vmul.f32 %v718, %v952
      %vm954 = vcmp.eq.f32.partialorder %v718, inf
      %v955 = vsel %vm954, %v718, %v953
      %vm956 = vcmp.eq.f32.partialorder %v718, 0.0
      %v957 = vand.u32 %v718, 2147483648
      %v958 = vsel %vm956, %v957, %v955
      %v959 = vrsqrt.pop %v719
      %v960 = vmul.f32 %v959, %v719
      %v961 = vmul.f32 %v960, %v959
      %v962 = vmul.f32 0.5, %v961
      %v963 = vsub.f32 1.5, %v962
      %v964 = vmul.f32 %v959, %v963
      %v965 = vmul.f32 %v719, %v964
      %vm966 = vcmp.eq.f32.partialorder %v719, inf
      %v967 = vsel %vm966, %v719, %v965
      %vm968 = vcmp.eq.f32.partialorder %v719, 0.0
      %v969 = vand.u32 %v719, 2147483648
      %v970 = vsel %vm968, %v969, %v967
      %v971 = vrsqrt.pop %v720
      %v972 = vmul.f32 %v971, %v720
      %v973 = vmul.f32 %v972, %v971
      %v974 = vmul.f32 0.5, %v973
      %v975 = vsub.f32 1.5, %v974
      %v976 = vmul.f32 %v971, %v975
      %v977 = vmul.f32 %v720, %v976
      %vm978 = vcmp.eq.f32.partialorder %v720, inf
      %v979 = vsel %vm978, %v720, %v977
      %vm980 = vcmp.eq.f32.partialorder %v720, 0.0
      %v981 = vand.u32 %v720, 2147483648
      %v982 = vsel %vm980, %v981, %v979
      %v983 = vrsqrt.pop %v721
      %v984 = vmul.f32 %v983, %v721
      %v985 = vmul.f32 %v984, %v983
      %v986 = vmul.f32 0.5, %v985
      %v987 = vsub.f32 1.5, %v986
      %v988 = vmul.f32 %v983, %v987
      %v989 = vmul.f32 %v721, %v988
      %vm990 = vcmp.eq.f32.partialorder %v721, inf
      %v991 = vsel %vm990, %v721, %v989
      %vm992 = vcmp.eq.f32.partialorder %v721, 0.0
      %v993 = vand.u32 %v721, 2147483648
      %v994 = vsel %vm992, %v993, %v991
      %v995 = vrsqrt.pop %v722
      %v996 = vmul.f32 %v995, %v722
      %v997 = vmul.f32 %v996, %v995
      %v998 = vmul.f32 0.5, %v997
      %v999 = vsub.f32 1.5, %v998
      %v1000 = vmul.f32 %v995, %v999
      %v1001 = vmul.f32 %v722, %v1000
      %vm1002 = vcmp.eq.f32.partialorder %v722, inf
      %v1003 = vsel %vm1002, %v722, %v1001
      %vm1004 = vcmp.eq.f32.partialorder %v722, 0.0
      %v1005 = vand.u32 %v722, 2147483648
      %v1006 = vsel %vm1004, %v1005, %v1003
      %v1007 = vrsqrt.pop %v723
      %v1008 = vmul.f32 %v1007, %v723
      %v1009 = vmul.f32 %v1008, %v1007
      %v1010 = vmul.f32 0.5, %v1009
      %v1011 = vsub.f32 1.5, %v1010
      %v1012 = vmul.f32 %v1007, %v1011
      %v1013 = vmul.f32 %v723, %v1012
      %vm1014 = vcmp.eq.f32.partialorder %v723, inf
      %v1015 = vsel %vm1014, %v723, %v1013
      %vm1016 = vcmp.eq.f32.partialorder %v723, 0.0
      %v1017 = vand.u32 %v723, 2147483648
      %v1018 = vsel %vm1016, %v1017, %v1015
      %v1019 = vrsqrt.pop %v724
      %v1020 = vmul.f32 %v1019, %v724
      %v1021 = vmul.f32 %v1020, %v1019
      %v1022 = vmul.f32 0.5, %v1021
      %v1023 = vsub.f32 1.5, %v1022
      %v1024 = vmul.f32 %v1019, %v1023
      %v1025 = vmul.f32 %v724, %v1024
      %vm1026 = vcmp.eq.f32.partialorder %v724, inf
      %v1027 = vsel %vm1026, %v724, %v1025
      %vm1028 = vcmp.eq.f32.partialorder %v724, 0.0
      %v1029 = vand.u32 %v724, 2147483648
      %v1030 = vsel %vm1028, %v1029, %v1027
      %v1031 = vrsqrt.pop %v725
      %v1032 = vmul.f32 %v1031, %v725
      %v1033 = vmul.f32 %v1032, %v1031
      %v1034 = vmul.f32 0.5, %v1033
      %v1035 = vsub.f32 1.5, %v1034
      %v1036 = vmul.f32 %v1031, %v1035
      %v1037 = vmul.f32 %v725, %v1036
      %vm1038 = vcmp.eq.f32.partialorder %v725, inf
      %v1039 = vsel %vm1038, %v725, %v1037
      %vm1040 = vcmp.eq.f32.partialorder %v725, 0.0
      %v1041 = vand.u32 %v725, 2147483648
      %v1042 = vsel %vm1040, %v1041, %v1039
      %v1043 = vrsqrt.pop %v726
      %v1044 = vmul.f32 %v1043, %v726
      %v1045 = vmul.f32 %v1044, %v1043
      %v1046 = vmul.f32 0.5, %v1045
      %v1047 = vsub.f32 1.5, %v1046
      %v1048 = vmul.f32 %v1043, %v1047
      %v1049 = vmul.f32 %v726, %v1048
      %vm1050 = vcmp.eq.f32.partialorder %v726, inf
      %v1051 = vsel %vm1050, %v726, %v1049
      %vm1052 = vcmp.eq.f32.partialorder %v726, 0.0
      %v1053 = vand.u32 %v726, 2147483648
      %v1054 = vsel %vm1052, %v1053, %v1051
      %v1055 = vrsqrt.pop %v727
      %v1056 = vmul.f32 %v1055, %v727
      %v1057 = vmul.f32 %v1056, %v1055
      %v1058 = vmul.f32 0.5, %v1057
      %v1059 = vsub.f32 1.5, %v1058
      %v1060 = vmul.f32 %v1055, %v1059
      %v1061 = vmul.f32 %v727, %v1060
      %vm1062 = vcmp.eq.f32.partialorder %v727, inf
      %v1063 = vsel %vm1062, %v727, %v1061
      %vm1064 = vcmp.eq.f32.partialorder %v727, 0.0
      %v1065 = vand.u32 %v727, 2147483648
      %v1066 = vsel %vm1064, %v1065, %v1063
      %v1067 = vrsqrt.pop %v728
      %v1068 = vmul.f32 %v1067, %v728
      %v1069 = vmul.f32 %v1068, %v1067
      %v1070 = vmul.f32 0.5, %v1069
      %v1071 = vsub.f32 1.5, %v1070
      %v1072 = vmul.f32 %v1067, %v1071
      %v1073 = vmul.f32 %v728, %v1072
      %vm1074 = vcmp.eq.f32.partialorder %v728, inf
      %v1075 = vsel %vm1074, %v728, %v1073
      %vm1076 = vcmp.eq.f32.partialorder %v728, 0.0
      %v1077 = vand.u32 %v728, 2147483648
      %v1078 = vsel %vm1076, %v1077, %v1075
      %v1079 = vrsqrt.pop %v729
      %v1080 = vmul.f32 %v1079, %v729
      %v1081 = vmul.f32 %v1080, %v1079
      %v1082 = vmul.f32 0.5, %v1081
      %v1083 = vsub.f32 1.5, %v1082
      %v1084 = vmul.f32 %v1079, %v1083
      %v1085 = vmul.f32 %v729, %v1084
      %vm1086 = vcmp.eq.f32.partialorder %v729, inf
      %v1087 = vsel %vm1086, %v729, %v1085
      %vm1088 = vcmp.eq.f32.partialorder %v729, 0.0
      %v1089 = vand.u32 %v729, 2147483648
      %v1090 = vsel %vm1088, %v1089, %v1087
      %v1091 = vrsqrt.pop %v730
      %v1092 = vmul.f32 %v1091, %v730
      %v1093 = vmul.f32 %v1092, %v1091
      %v1094 = vmul.f32 0.5, %v1093
      %v1095 = vsub.f32 1.5, %v1094
      %v1096 = vmul.f32 %v1091, %v1095
      %v1097 = vmul.f32 %v730, %v1096
      %vm1098 = vcmp.eq.f32.partialorder %v730, inf
      %v1099 = vsel %vm1098, %v730, %v1097
      %vm1100 = vcmp.eq.f32.partialorder %v730, 0.0
      %v1101 = vand.u32 %v730, 2147483648
      %v1102 = vsel %vm1100, %v1101, %v1099
      %v1103 = vrsqrt.pop %v731
      %v1104 = vmul.f32 %v1103, %v731
      %v1105 = vmul.f32 %v1104, %v1103
      %v1106 = vmul.f32 0.5, %v1105
      %v1107 = vsub.f32 1.5, %v1106
      %v1108 = vmul.f32 %v1103, %v1107
      %v1109 = vmul.f32 %v731, %v1108
      %vm1110 = vcmp.eq.f32.partialorder %v731, inf
      %v1111 = vsel %vm1110, %v731, %v1109
      %vm1112 = vcmp.eq.f32.partialorder %v731, 0.0
      %v1113 = vand.u32 %v731, 2147483648
      %v1114 = vsel %vm1112, %v1113, %v1111
      %v1115 = vrsqrt.pop %v732
      %v1116 = vmul.f32 %v1115, %v732
      %v1117 = vmul.f32 %v1116, %v1115
      %v1118 = vmul.f32 0.5, %v1117
      %v1119 = vsub.f32 1.5, %v1118
      %v1120 = vmul.f32 %v1115, %v1119
      %v1121 = vmul.f32 %v732, %v1120
      %vm1122 = vcmp.eq.f32.partialorder %v732, inf
      %v1123 = vsel %vm1122, %v732, %v1121
      %vm1124 = vcmp.eq.f32.partialorder %v732, 0.0
      %v1125 = vand.u32 %v732, 2147483648
      %v1126 = vsel %vm1124, %v1125, %v1123
      %v1127 = vrsqrt.pop %v733
      %v1128 = vmul.f32 %v1127, %v733
      %v1129 = vmul.f32 %v1128, %v1127
      %v1130 = vmul.f32 0.5, %v1129
      %v1131 = vsub.f32 1.5, %v1130
      %v1132 = vmul.f32 %v1127, %v1131
      %v1133 = vmul.f32 %v733, %v1132
      %vm1134 = vcmp.eq.f32.partialorder %v733, inf
      %v1135 = vsel %vm1134, %v733, %v1133
      %vm1136 = vcmp.eq.f32.partialorder %v733, 0.0
      %v1137 = vand.u32 %v733, 2147483648
      %v1138 = vsel %vm1136, %v1137, %v1135
      %v1139 = vrsqrt.pop %v734
      %v1140 = vmul.f32 %v1139, %v734
      %v1141 = vmul.f32 %v1140, %v1139
      %v1142 = vmul.f32 0.5, %v1141
      %v1143 = vsub.f32 1.5, %v1142
      %v1144 = vmul.f32 %v1139, %v1143
      %v1145 = vmul.f32 %v734, %v1144
      %vm1146 = vcmp.eq.f32.partialorder %v734, inf
      %v1147 = vsel %vm1146, %v734, %v1145
      %vm1148 = vcmp.eq.f32.partialorder %v734, 0.0
      %v1149 = vand.u32 %v734, 2147483648
      %v1150 = vsel %vm1148, %v1149, %v1147
      %v1151 = vrsqrt.pop %v735
      %v1152 = vmul.f32 %v1151, %v735
      %v1153 = vmul.f32 %v1152, %v1151
      %v1154 = vmul.f32 0.5, %v1153
      %v1155 = vsub.f32 1.5, %v1154
      %v1156 = vmul.f32 %v1151, %v1155
      %v1157 = vmul.f32 %v735, %v1156
      %vm1158 = vcmp.eq.f32.partialorder %v735, inf
      %v1159 = vsel %vm1158, %v735, %v1157
      %vm1160 = vcmp.eq.f32.partialorder %v735, 0.0
      %v1161 = vand.u32 %v735, 2147483648
      %v1162 = vsel %vm1160, %v1161, %v1159
      %v1163 = vrsqrt.pop %v736
      %v1164 = vmul.f32 %v1163, %v736
      %v1165 = vmul.f32 %v1164, %v1163
      %v1166 = vmul.f32 0.5, %v1165
      %v1167 = vsub.f32 1.5, %v1166
      %v1168 = vmul.f32 %v1163, %v1167
      %v1169 = vmul.f32 %v736, %v1168
      %vm1170 = vcmp.eq.f32.partialorder %v736, inf
      %v1171 = vsel %vm1170, %v736, %v1169
      %vm1172 = vcmp.eq.f32.partialorder %v736, 0.0
      %v1173 = vand.u32 %v736, 2147483648
      %v1174 = vsel %vm1172, %v1173, %v1171
      %v1175 = vrsqrt.pop %v737
      %v1176 = vmul.f32 %v1175, %v737
      %v1177 = vmul.f32 %v1176, %v1175
      %v1178 = vmul.f32 0.5, %v1177
      %v1179 = vsub.f32 1.5, %v1178
      %v1180 = vmul.f32 %v1175, %v1179
      %v1181 = vmul.f32 %v737, %v1180
      %vm1182 = vcmp.eq.f32.partialorder %v737, inf
      %v1183 = vsel %vm1182, %v737, %v1181
      %vm1184 = vcmp.eq.f32.partialorder %v737, 0.0
      %v1185 = vand.u32 %v737, 2147483648
      %v1186 = vsel %vm1184, %v1185, %v1183
      %v1187 = vrsqrt.pop %v738
      %v1188 = vmul.f32 %v1187, %v738
      %v1189 = vmul.f32 %v1188, %v1187
      %v1190 = vmul.f32 0.5, %v1189
      %v1191 = vsub.f32 1.5, %v1190
      %v1192 = vmul.f32 %v1187, %v1191
      %v1193 = vmul.f32 %v738, %v1192
      %vm1194 = vcmp.eq.f32.partialorder %v738, inf
      %v1195 = vsel %vm1194, %v738, %v1193
      %vm1196 = vcmp.eq.f32.partialorder %v738, 0.0
      %v1197 = vand.u32 %v738, 2147483648
      %v1198 = vsel %vm1196, %v1197, %v1195
      %v1199 = vrsqrt.pop %v739
      %v1200 = vmul.f32 %v1199, %v739
      %v1201 = vmul.f32 %v1200, %v1199
      %v1202 = vmul.f32 0.5, %v1201
      %v1203 = vsub.f32 1.5, %v1202
      %v1204 = vmul.f32 %v1199, %v1203
      %v1205 = vmul.f32 %v739, %v1204
      %vm1206 = vcmp.eq.f32.partialorder %v739, inf
      %v1207 = vsel %vm1206, %v739, %v1205
      %vm1208 = vcmp.eq.f32.partialorder %v739, 0.0
      %v1209 = vand.u32 %v739, 2147483648
      %v1210 = vsel %vm1208, %v1209, %v1207
      %v1211 = vrsqrt.pop %v740
      %v1212 = vmul.f32 %v1211, %v740
      %v1213 = vmul.f32 %v1212, %v1211
      %v1214 = vmul.f32 0.5, %v1213
      %v1215 = vsub.f32 1.5, %v1214
      %v1216 = vmul.f32 %v1211, %v1215
      %v1217 = vmul.f32 %v740, %v1216
      %vm1218 = vcmp.eq.f32.partialorder %v740, inf
      %v1219 = vsel %vm1218, %v740, %v1217
      %vm1220 = vcmp.eq.f32.partialorder %v740, 0.0
      %v1221 = vand.u32 %v740, 2147483648
      %v1222 = vsel %vm1220, %v1221, %v1219
      %v1223 = vrsqrt.pop %v741
      %v1224 = vmul.f32 %v1223, %v741
      %v1225 = vmul.f32 %v1224, %v1223
      %v1226 = vmul.f32 0.5, %v1225
      %v1227 = vsub.f32 1.5, %v1226
      %v1228 = vmul.f32 %v1223, %v1227
      %v1229 = vmul.f32 %v741, %v1228
      %vm1230 = vcmp.eq.f32.partialorder %v741, inf
      %v1231 = vsel %vm1230, %v741, %v1229
      %vm1232 = vcmp.eq.f32.partialorder %v741, 0.0
      %v1233 = vand.u32 %v741, 2147483648
      %v1234 = vsel %vm1232, %v1233, %v1231
      %v1235 = vrsqrt.pop %v742
      %v1236 = vmul.f32 %v1235, %v742
      %v1237 = vmul.f32 %v1236, %v1235
      %v1238 = vmul.f32 0.5, %v1237
      %v1239 = vsub.f32 1.5, %v1238
      %v1240 = vmul.f32 %v1235, %v1239
      %v1241 = vmul.f32 %v742, %v1240
      %vm1242 = vcmp.eq.f32.partialorder %v742, inf
      %v1243 = vsel %vm1242, %v742, %v1241
      %vm1244 = vcmp.eq.f32.partialorder %v742, 0.0
      %v1245 = vand.u32 %v742, 2147483648
      %v1246 = vsel %vm1244, %v1245, %v1243
      %v1247 = vrsqrt.pop %v743
      %v1248 = vmul.f32 %v1247, %v743
      %v1249 = vmul.f32 %v1248, %v1247
      %v1250 = vmul.f32 0.5, %v1249
      %v1251 = vsub.f32 1.5, %v1250
      %v1252 = vmul.f32 %v1247, %v1251
      %v1253 = vmul.f32 %v743, %v1252
      %vm1254 = vcmp.eq.f32.partialorder %v743, inf
      %v1255 = vsel %vm1254, %v743, %v1253
      %vm1256 = vcmp.eq.f32.partialorder %v743, 0.0
      %v1257 = vand.u32 %v743, 2147483648
      %v1258 = vsel %vm1256, %v1257, %v1255
      %v1259 = vrsqrt.pop %v744
      %v1260 = vmul.f32 %v1259, %v744
      %v1261 = vmul.f32 %v1260, %v1259
      %v1262 = vmul.f32 0.5, %v1261
      %v1263 = vsub.f32 1.5, %v1262
      %v1264 = vmul.f32 %v1259, %v1263
      %v1265 = vmul.f32 %v744, %v1264
      %vm1266 = vcmp.eq.f32.partialorder %v744, inf
      %v1267 = vsel %vm1266, %v744, %v1265
      %vm1268 = vcmp.eq.f32.partialorder %v744, 0.0
      %v1269 = vand.u32 %v744, 2147483648
      %v1270 = vsel %vm1268, %v1269, %v1267
      %v1271 = vrsqrt.pop %v745
      %v1272 = vmul.f32 %v1271, %v745
      %v1273 = vmul.f32 %v1272, %v1271
      %v1274 = vmul.f32 0.5, %v1273
      %v1275 = vsub.f32 1.5, %v1274
      %v1276 = vmul.f32 %v1271, %v1275
      %v1277 = vmul.f32 %v745, %v1276
      %vm1278 = vcmp.eq.f32.partialorder %v745, inf
      %v1279 = vsel %vm1278, %v745, %v1277
      %vm1280 = vcmp.eq.f32.partialorder %v745, 0.0
      %v1281 = vand.u32 %v745, 2147483648
      %v1282 = vsel %vm1280, %v1281, %v1279
      %v1283 = vrsqrt.pop %v746
      %v1284 = vmul.f32 %v1283, %v746
      %v1285 = vmul.f32 %v1284, %v1283
      %v1286 = vmul.f32 0.5, %v1285
      %v1287 = vsub.f32 1.5, %v1286
      %v1288 = vmul.f32 %v1283, %v1287
      %v1289 = vmul.f32 %v746, %v1288
      %vm1290 = vcmp.eq.f32.partialorder %v746, inf
      %v1291 = vsel %vm1290, %v746, %v1289
      %vm1292 = vcmp.eq.f32.partialorder %v746, 0.0
      %v1293 = vand.u32 %v746, 2147483648
      %v1294 = vsel %vm1292, %v1293, %v1291
      %v1295 = vrsqrt.pop %v747
      %v1296 = vmul.f32 %v1295, %v747
      %v1297 = vmul.f32 %v1296, %v1295
      %v1298 = vmul.f32 0.5, %v1297
      %v1299 = vsub.f32 1.5, %v1298
      %v1300 = vmul.f32 %v1295, %v1299
      %v1301 = vmul.f32 %v747, %v1300
      %vm1302 = vcmp.eq.f32.partialorder %v747, inf
      %v1303 = vsel %vm1302, %v747, %v1301
      %vm1304 = vcmp.eq.f32.partialorder %v747, 0.0
      %v1305 = vand.u32 %v747, 2147483648
      %v1306 = vsel %vm1304, %v1305, %v1303
      %v1307 = vrsqrt.pop %v748
      %v1308 = vmul.f32 %v1307, %v748
      %v1309 = vmul.f32 %v1308, %v1307
      %v1310 = vmul.f32 0.5, %v1309
      %v1311 = vsub.f32 1.5, %v1310
      %v1312 = vmul.f32 %v1307, %v1311
      %v1313 = vmul.f32 %v748, %v1312
      %vm1314 = vcmp.eq.f32.partialorder %v748, inf
      %v1315 = vsel %vm1314, %v748, %v1313
      %vm1316 = vcmp.eq.f32.partialorder %v748, 0.0
      %v1317 = vand.u32 %v748, 2147483648
      %v1318 = vsel %vm1316, %v1317, %v1315
      %v1319 = vrsqrt.pop %v749
      %v1320 = vmul.f32 %v1319, %v749
      %v1321 = vmul.f32 %v1320, %v1319
      %v1322 = vmul.f32 0.5, %v1321
      %v1323 = vsub.f32 1.5, %v1322
      %v1324 = vmul.f32 %v1319, %v1323
      %v1325 = vmul.f32 %v749, %v1324
      %vm1326 = vcmp.eq.f32.partialorder %v749, inf
      %v1327 = vsel %vm1326, %v749, %v1325
      %vm1328 = vcmp.eq.f32.partialorder %v749, 0.0
      %v1329 = vand.u32 %v749, 2147483648
      %v1330 = vsel %vm1328, %v1329, %v1327
      %v1331 = vrsqrt.pop %v750
      %v1332 = vmul.f32 %v1331, %v750
      %v1333 = vmul.f32 %v1332, %v1331
      %v1334 = vmul.f32 0.5, %v1333
      %v1335 = vsub.f32 1.5, %v1334
      %v1336 = vmul.f32 %v1331, %v1335
      %v1337 = vmul.f32 %v750, %v1336
      %vm1338 = vcmp.eq.f32.partialorder %v750, inf
      %v1339 = vsel %vm1338, %v750, %v1337
      %vm1340 = vcmp.eq.f32.partialorder %v750, 0.0
      %v1341 = vand.u32 %v750, 2147483648
      %v1342 = vsel %vm1340, %v1341, %v1339
      %v1343 = vrsqrt.pop %v751
      %v1344 = vmul.f32 %v1343, %v751
      %v1345 = vmul.f32 %v1344, %v1343
      %v1346 = vmul.f32 0.5, %v1345
      %v1347 = vsub.f32 1.5, %v1346
      %v1348 = vmul.f32 %v1343, %v1347
      %v1349 = vmul.f32 %v751, %v1348
      %vm1350 = vcmp.eq.f32.partialorder %v751, inf
      %v1351 = vsel %vm1350, %v751, %v1349
      %vm1352 = vcmp.eq.f32.partialorder %v751, 0.0
      %v1353 = vand.u32 %v751, 2147483648
      %v1354 = vsel %vm1352, %v1353, %v1351
      %v1355 = vrsqrt.pop %v752
      %v1356 = vmul.f32 %v1355, %v752
      %v1357 = vmul.f32 %v1356, %v1355
      %v1358 = vmul.f32 0.5, %v1357
      %v1359 = vsub.f32 1.5, %v1358
      %v1360 = vmul.f32 %v1355, %v1359
      %v1361 = vmul.f32 %v752, %v1360
      %vm1362 = vcmp.eq.f32.partialorder %v752, inf
      %v1363 = vsel %vm1362, %v752, %v1361
      %vm1364 = vcmp.eq.f32.partialorder %v752, 0.0
      %v1365 = vand.u32 %v752, 2147483648
      %v1366 = vsel %vm1364, %v1365, %v1363
      %v1367 = vrsqrt.pop %v753
      %v1368 = vmul.f32 %v1367, %v753
      %v1369 = vmul.f32 %v1368, %v1367
      %v1370 = vmul.f32 0.5, %v1369
      %v1371 = vsub.f32 1.5, %v1370
      %v1372 = vmul.f32 %v1367, %v1371
      %v1373 = vmul.f32 %v753, %v1372
      %vm1374 = vcmp.eq.f32.partialorder %v753, inf
      %v1375 = vsel %vm1374, %v753, %v1373
      %vm1376 = vcmp.eq.f32.partialorder %v753, 0.0
      %v1377 = vand.u32 %v753, 2147483648
      %v1378 = vsel %vm1376, %v1377, %v1375
      %v1379 = vrsqrt.pop %v754
      %v1380 = vmul.f32 %v1379, %v754
      %v1381 = vmul.f32 %v1380, %v1379
      %v1382 = vmul.f32 0.5, %v1381
      %v1383 = vsub.f32 1.5, %v1382
      %v1384 = vmul.f32 %v1379, %v1383
      %v1385 = vmul.f32 %v754, %v1384
      %vm1386 = vcmp.eq.f32.partialorder %v754, inf
      %v1387 = vsel %vm1386, %v754, %v1385
      %vm1388 = vcmp.eq.f32.partialorder %v754, 0.0
      %v1389 = vand.u32 %v754, 2147483648
      %v1390 = vsel %vm1388, %v1389, %v1387
      %v1391 = vrsqrt.pop %v755
      %v1392 = vmul.f32 %v1391, %v755
      %v1393 = vmul.f32 %v1392, %v1391
      %v1394 = vmul.f32 0.5, %v1393
      %v1395 = vsub.f32 1.5, %v1394
      %v1396 = vmul.f32 %v1391, %v1395
      %v1397 = vmul.f32 %v755, %v1396
      %vm1398 = vcmp.eq.f32.partialorder %v755, inf
      %v1399 = vsel %vm1398, %v755, %v1397
      %vm1400 = vcmp.eq.f32.partialorder %v755, 0.0
      %v1401 = vand.u32 %v755, 2147483648
      %v1402 = vsel %vm1400, %v1401, %v1399
      %v1403 = vrsqrt.pop %v756
      %v1404 = vmul.f32 %v1403, %v756
      %v1405 = vmul.f32 %v1404, %v1403
      %v1406 = vmul.f32 0.5, %v1405
      %v1407 = vsub.f32 1.5, %v1406
      %v1408 = vmul.f32 %v1403, %v1407
      %v1409 = vmul.f32 %v756, %v1408
      %vm1410 = vcmp.eq.f32.partialorder %v756, inf
      %v1411 = vsel %vm1410, %v756, %v1409
      %vm1412 = vcmp.eq.f32.partialorder %v756, 0.0
      %v1413 = vand.u32 %v756, 2147483648
      %v1414 = vsel %vm1412, %v1413, %v1411
      %v1415 = vrsqrt.pop %v757
      %v1416 = vmul.f32 %v1415, %v757
      %v1417 = vmul.f32 %v1416, %v1415
      %v1418 = vmul.f32 0.5, %v1417
      %v1419 = vsub.f32 1.5, %v1418
      %v1420 = vmul.f32 %v1415, %v1419
      %v1421 = vmul.f32 %v757, %v1420
      %vm1422 = vcmp.eq.f32.partialorder %v757, inf
      %v1423 = vsel %vm1422, %v757, %v1421
      %vm1424 = vcmp.eq.f32.partialorder %v757, 0.0
      %v1425 = vand.u32 %v757, 2147483648
      %v1426 = vsel %vm1424, %v1425, %v1423
      %v1427 = vrsqrt.pop %v758
      %v1428 = vmul.f32 %v1427, %v758
      %v1429 = vmul.f32 %v1428, %v1427
      %v1430 = vmul.f32 0.5, %v1429
      %v1431 = vsub.f32 1.5, %v1430
      %v1432 = vmul.f32 %v1427, %v1431
      %v1433 = vmul.f32 %v758, %v1432
      %vm1434 = vcmp.eq.f32.partialorder %v758, inf
      %v1435 = vsel %vm1434, %v758, %v1433
      %vm1436 = vcmp.eq.f32.partialorder %v758, 0.0
      %v1437 = vand.u32 %v758, 2147483648
      %v1438 = vsel %vm1436, %v1437, %v1435
      %v1439 = vrsqrt.pop %v759
      %v1440 = vmul.f32 %v1439, %v759
      %v1441 = vmul.f32 %v1440, %v1439
      %v1442 = vmul.f32 0.5, %v1441
      %v1443 = vsub.f32 1.5, %v1442
      %v1444 = vmul.f32 %v1439, %v1443
      %v1445 = vmul.f32 %v759, %v1444
      %vm1446 = vcmp.eq.f32.partialorder %v759, inf
      %v1447 = vsel %vm1446, %v759, %v1445
      %vm1448 = vcmp.eq.f32.partialorder %v759, 0.0
      %v1449 = vand.u32 %v759, 2147483648
      %v1450 = vsel %vm1448, %v1449, %v1447
      %v1451 = vrsqrt.pop %v760
      %v1452 = vmul.f32 %v1451, %v760
      %v1453 = vmul.f32 %v1452, %v1451
      %v1454 = vmul.f32 0.5, %v1453
      %v1455 = vsub.f32 1.5, %v1454
      %v1456 = vmul.f32 %v1451, %v1455
      %v1457 = vmul.f32 %v760, %v1456
      %vm1458 = vcmp.eq.f32.partialorder %v760, inf
      %v1459 = vsel %vm1458, %v760, %v1457
      %vm1460 = vcmp.eq.f32.partialorder %v760, 0.0
      %v1461 = vand.u32 %v760, 2147483648
      %v1462 = vsel %vm1460, %v1461, %v1459
      %v1463 = vrsqrt.pop %v761
      %v1464 = vmul.f32 %v1463, %v761
      %v1465 = vmul.f32 %v1464, %v1463
      %v1466 = vmul.f32 0.5, %v1465
      %v1467 = vsub.f32 1.5, %v1466
      %v1468 = vmul.f32 %v1463, %v1467
      %v1469 = vmul.f32 %v761, %v1468
      %vm1470 = vcmp.eq.f32.partialorder %v761, inf
      %v1471 = vsel %vm1470, %v761, %v1469
      %vm1472 = vcmp.eq.f32.partialorder %v761, 0.0
      %v1473 = vand.u32 %v761, 2147483648
      %v1474 = vsel %vm1472, %v1473, %v1471
      %v1475 = vrsqrt.pop %v762
      %v1476 = vmul.f32 %v1475, %v762
      %v1477 = vmul.f32 %v1476, %v1475
      %v1478 = vmul.f32 0.5, %v1477
      %v1479 = vsub.f32 1.5, %v1478
      %v1480 = vmul.f32 %v1475, %v1479
      %v1481 = vmul.f32 %v762, %v1480
      %vm1482 = vcmp.eq.f32.partialorder %v762, inf
      %v1483 = vsel %vm1482, %v762, %v1481
      %vm1484 = vcmp.eq.f32.partialorder %v762, 0.0
      %v1485 = vand.u32 %v762, 2147483648
      %v1486 = vsel %vm1484, %v1485, %v1483
      %v1487 = vrsqrt.pop %v763
      %v1488 = vmul.f32 %v1487, %v763
      %v1489 = vmul.f32 %v1488, %v1487
      %v1490 = vmul.f32 0.5, %v1489
      %v1491 = vsub.f32 1.5, %v1490
      %v1492 = vmul.f32 %v1487, %v1491
      %v1493 = vmul.f32 %v763, %v1492
      %vm1494 = vcmp.eq.f32.partialorder %v763, inf
      %v1495 = vsel %vm1494, %v763, %v1493
      %vm1496 = vcmp.eq.f32.partialorder %v763, 0.0
      %v1497 = vand.u32 %v763, 2147483648
      %v1498 = vsel %vm1496, %v1497, %v1495
      %v1499 = vrsqrt.pop %v764
      %v1500 = vmul.f32 %v1499, %v764
      %v1501 = vmul.f32 %v1500, %v1499
      %v1502 = vmul.f32 0.5, %v1501
      %v1503 = vsub.f32 1.5, %v1502
      %v1504 = vmul.f32 %v1499, %v1503
      %v1505 = vmul.f32 %v764, %v1504
      %vm1506 = vcmp.eq.f32.partialorder %v764, inf
      %v1507 = vsel %vm1506, %v764, %v1505
      %vm1508 = vcmp.eq.f32.partialorder %v764, 0.0
      %v1509 = vand.u32 %v764, 2147483648
      %v1510 = vsel %vm1508, %v1509, %v1507
      %v1511 = vrsqrt.pop %v765
      %v1512 = vmul.f32 %v1511, %v765
      %v1513 = vmul.f32 %v1512, %v1511
      %v1514 = vmul.f32 0.5, %v1513
      %v1515 = vsub.f32 1.5, %v1514
      %v1516 = vmul.f32 %v1511, %v1515
      %v1517 = vmul.f32 %v765, %v1516
      %vm1518 = vcmp.eq.f32.partialorder %v765, inf
      %v1519 = vsel %vm1518, %v765, %v1517
      %vm1520 = vcmp.eq.f32.partialorder %v765, 0.0
      %v1521 = vand.u32 %v765, 2147483648
      %v1522 = vsel %vm1520, %v1521, %v1519
      %v1523 = vrsqrt.pop %v766
      %v1524 = vmul.f32 %v1523, %v766
      %v1525 = vmul.f32 %v1524, %v1523
      %v1526 = vmul.f32 0.5, %v1525
      %v1527 = vsub.f32 1.5, %v1526
      %v1528 = vmul.f32 %v1523, %v1527
      %v1529 = vmul.f32 %v766, %v1528
      %vm1530 = vcmp.eq.f32.partialorder %v766, inf
      %v1531 = vsel %vm1530, %v766, %v1529
      %vm1532 = vcmp.eq.f32.partialorder %v766, 0.0
      %v1533 = vand.u32 %v766, 2147483648
      %v1534 = vsel %vm1532, %v1533, %v1531
      %v1535 = vld [vmem:[%s180] sm:$0xff]
      %v1536 = vld [vmem:[%s180 + $0x8] sm:$0xff]
      %v1537 = vld [vmem:[%s180 + $0x10] sm:$0xff]
      %v1538 = vld [vmem:[%s180 + $0x18] sm:$0xff]
      %v1539 = vld [vmem:[%s180 + $0x20] sm:$0xff]
      %v1540 = vld [vmem:[%s180 + $0x28] sm:$0xff]
      %v1541 = vld [vmem:[%s180 + $0x30] sm:$0xff]
      %v1542 = vld [vmem:[%s180 + $0x38] sm:$0xff]
      %v1543 = vld [vmem:[%s180 + $0x40] sm:$0xff]
      %v1544 = vld [vmem:[%s180 + $0x48] sm:$0xff]
      %v1545 = vld [vmem:[%s180 + $0x50] sm:$0xff]
      %v1546 = vld [vmem:[%s180 + $0x58] sm:$0xff]
      %v1547 = vld [vmem:[%s180 + $0x60] sm:$0xff]
      %v1548 = vld [vmem:[%s180 + $0x68] sm:$0xff]
      %v1549 = vld [vmem:[%s180 + $0x70] sm:$0xff]
      %v1550 = vld [vmem:[%s180 + $0x78] sm:$0xff]
      %v1551 = vld [vmem:[%s180 + $0x80] sm:$0xff]
      %v1552 = vld [vmem:[%s180 + $0x88] sm:$0xff]
      %v1553 = vld [vmem:[%s180 + $0x90] sm:$0xff]
      %v1554 = vld [vmem:[%s180 + $0x98] sm:$0xff]
      %v1555 = vld [vmem:[%s180 + $0xa0] sm:$0xff]
      %v1556 = vld [vmem:[%s180 + $0xa8] sm:$0xff]
      %v1557 = vld [vmem:[%s180 + $0xb0] sm:$0xff]
      %v1558 = vld [vmem:[%s180 + $0xb8] sm:$0xff]
      %v1559 = vld [vmem:[%s180 + $0xc0] sm:$0xff]
      %v1560 = vld [vmem:[%s180 + $0xc8] sm:$0xff]
      %v1561 = vld [vmem:[%s180 + $0xd0] sm:$0xff]
      %v1562 = vld [vmem:[%s180 + $0xd8] sm:$0xff]
      %v1563 = vld [vmem:[%s180 + $0xe0] sm:$0xff]
      %v1564 = vld [vmem:[%s180 + $0xe8] sm:$0xff]
      %v1565 = vld [vmem:[%s180 + $0xf0] sm:$0xff]
      %v1566 = vld [vmem:[%s180 + $0xf8] sm:$0xff]
      %v1567 = vld [vmem:[%s180 + $0x100] sm:$0xff]
      %v1568 = vld [vmem:[%s180 + $0x108] sm:$0xff]
      %v1569 = vld [vmem:[%s180 + $0x110] sm:$0xff]
      %v1570 = vld [vmem:[%s180 + $0x118] sm:$0xff]
      %v1571 = vld [vmem:[%s180 + $0x120] sm:$0xff]
      %v1572 = vld [vmem:[%s180 + $0x128] sm:$0xff]
      %v1573 = vld [vmem:[%s180 + $0x130] sm:$0xff]
      %v1574 = vld [vmem:[%s180 + $0x138] sm:$0xff]
      %v1575 = vld [vmem:[%s180 + $0x140] sm:$0xff]
      %v1576 = vld [vmem:[%s180 + $0x148] sm:$0xff]
      %v1577 = vld [vmem:[%s180 + $0x150] sm:$0xff]
      %v1578 = vld [vmem:[%s180 + $0x158] sm:$0xff]
      %v1579 = vld [vmem:[%s180 + $0x160] sm:$0xff]
      %v1580 = vld [vmem:[%s180 + $0x168] sm:$0xff]
      %v1581 = vld [vmem:[%s180 + $0x170] sm:$0xff]
      %v1582 = vld [vmem:[%s180 + $0x178] sm:$0xff]
      %v1583 = vld [vmem:[%s180 + $0x180] sm:$0xff]
      %v1584 = vld [vmem:[%s180 + $0x188] sm:$0xff]
      %v1585 = vld [vmem:[%s180 + $0x190] sm:$0xff]
      %v1586 = vld [vmem:[%s180 + $0x198] sm:$0xff]
      %v1587 = vld [vmem:[%s180 + $0x1a0] sm:$0xff]
      %v1588 = vld [vmem:[%s180 + $0x1a8] sm:$0xff]
      %v1589 = vld [vmem:[%s180 + $0x1b0] sm:$0xff]
      %v1590 = vld [vmem:[%s180 + $0x1b8] sm:$0xff]
      %v1591 = vld [vmem:[%s180 + $0x1c0] sm:$0xff]
      %v1592 = vld [vmem:[%s180 + $0x1c8] sm:$0xff]
      %v1593 = vld [vmem:[%s180 + $0x1d0] sm:$0xff]
      %v1594 = vld [vmem:[%s180 + $0x1d8] sm:$0xff]
      %v1595 = vld [vmem:[%s180 + $0x1e0] sm:$0xff]
      %v1596 = vld [vmem:[%s180 + $0x1e8] sm:$0xff]
      %v1597 = vld [vmem:[%s180 + $0x1f0] sm:$0xff]
      %v1598 = vld [vmem:[%s180 + $0x1f8] sm:$0xff]
      %v1599 = vld [vmem:[%s180 + $0x200] sm:$0xff]
      %v1600 = vld [vmem:[%s180 + $0x208] sm:$0xff]
      %v1601 = vld [vmem:[%s180 + $0x210] sm:$0xff]
      %v1602 = vld [vmem:[%s180 + $0x218] sm:$0xff]
      %v1603 = vld [vmem:[%s180 + $0x220] sm:$0xff]
      %v1604 = vld [vmem:[%s180 + $0x228] sm:$0xff]
      %v1605 = vld [vmem:[%s180 + $0x230] sm:$0xff]
      %v1606 = vld [vmem:[%s180 + $0x238] sm:$0xff]
      %v1607 = vld [vmem:[%s180 + $0x240] sm:$0xff]
      %v1608 = vld [vmem:[%s180 + $0x248] sm:$0xff]
      %v1609 = vld [vmem:[%s180 + $0x250] sm:$0xff]
      %v1610 = vld [vmem:[%s180 + $0x258] sm:$0xff]
      %v1611 = vld [vmem:[%s180 + $0x260] sm:$0xff]
      %v1612 = vld [vmem:[%s180 + $0x268] sm:$0xff]
      %v1613 = vld [vmem:[%s180 + $0x270] sm:$0xff]
      %v1614 = vld [vmem:[%s180 + $0x278] sm:$0xff]
      %v1615 = vld [vmem:[%s180 + $0x280] sm:$0xff]
      %v1616 = vld [vmem:[%s180 + $0x288] sm:$0xff]
      %v1617 = vld [vmem:[%s180 + $0x290] sm:$0xff]
      %v1618 = vld [vmem:[%s180 + $0x298] sm:$0xff]
      %v1619 = vld [vmem:[%s180 + $0x2a0] sm:$0xff]
      %v1620 = vld [vmem:[%s180 + $0x2a8] sm:$0xff]
      %v1621 = vld [vmem:[%s180 + $0x2b0] sm:$0xff]
      %v1622 = vld [vmem:[%s180 + $0x2b8] sm:$0xff]
      %v1623 = vld [vmem:[%s180 + $0x2c0] sm:$0xff]
      %v1624 = vld [vmem:[%s180 + $0x2c8] sm:$0xff]
      %v1625 = vld [vmem:[%s180 + $0x2d0] sm:$0xff]
      %v1626 = vld [vmem:[%s180 + $0x2d8] sm:$0xff]
      %v1627 = vld [vmem:[%s180 + $0x2e0] sm:$0xff]
      %v1628 = vld [vmem:[%s180 + $0x2e8] sm:$0xff]
      %v1629 = vld [vmem:[%s180 + $0x2f0] sm:$0xff]
      %v1630 = vld [vmem:[%s180 + $0x2f8] sm:$0xff]
      %v1631 = vld [vmem:[%s180 + $0x300] sm:$0xff]
      %v1632 = vld [vmem:[%s180 + $0x308] sm:$0xff]
      %v1633 = vld [vmem:[%s180 + $0x310] sm:$0xff]
      %v1634 = vld [vmem:[%s180 + $0x318] sm:$0xff]
      %v1635 = vld [vmem:[%s180 + $0x320] sm:$0xff]
      %v1636 = vld [vmem:[%s180 + $0x328] sm:$0xff]
      %v1637 = vld [vmem:[%s180 + $0x330] sm:$0xff]
      %v1638 = vld [vmem:[%s180 + $0x338] sm:$0xff]
      %v1639 = vld [vmem:[%s180 + $0x340] sm:$0xff]
      %v1640 = vld [vmem:[%s180 + $0x348] sm:$0xff]
      %v1641 = vld [vmem:[%s180 + $0x350] sm:$0xff]
      %v1642 = vld [vmem:[%s180 + $0x358] sm:$0xff]
      %v1643 = vld [vmem:[%s180 + $0x360] sm:$0xff]
      %v1644 = vld [vmem:[%s180 + $0x368] sm:$0xff]
      %v1645 = vld [vmem:[%s180 + $0x370] sm:$0xff]
      %v1646 = vld [vmem:[%s180 + $0x378] sm:$0xff]
      %v1647 = vld [vmem:[%s180 + $0x380] sm:$0xff]
      %v1648 = vld [vmem:[%s180 + $0x388] sm:$0xff]
      %v1649 = vld [vmem:[%s180 + $0x390] sm:$0xff]
      %v1650 = vld [vmem:[%s180 + $0x398] sm:$0xff]
      %v1651 = vld [vmem:[%s180 + $0x3a0] sm:$0xff]
      %v1652 = vld [vmem:[%s180 + $0x3a8] sm:$0xff]
      %v1653 = vld [vmem:[%s180 + $0x3b0] sm:$0xff]
      %v1654 = vld [vmem:[%s180 + $0x3b8] sm:$0xff]
      %v1655 = vld [vmem:[%s180 + $0x3c0] sm:$0xff]
      %v1656 = vld [vmem:[%s180 + $0x3c8] sm:$0xff]
      %v1657 = vld [vmem:[%s180 + $0x3d0] sm:$0xff]
      %v1658 = vld [vmem:[%s180 + $0x3d8] sm:$0xff]
      %v1659 = vld [vmem:[%s180 + $0x3e0] sm:$0xff]
      %v1660 = vld [vmem:[%s180 + $0x3e8] sm:$0xff]
      %v1661 = vld [vmem:[%s180 + $0x3f0] sm:$0xff]
      %v1662 = vld [vmem:[%s180 + $0x3f8] sm:$0xff]
      %v1663 = vmin.f32 %v1535, %v1539
      %v1664 = vmin.f32 %v1536, %v1540
      %v1665 = vmin.f32 %v1537, %v1541
      %v1666 = vmin.f32 %v1538, %v1542
      %v1667 = vmin.f32 %v1663, %v1543
      %v1668 = vmin.f32 %v1664, %v1544
      %v1669 = vmin.f32 %v1665, %v1545
      %v1670 = vmin.f32 %v1666, %v1546
      %v1671 = vmin.f32 %v1667, %v1547
      %v1672 = vmin.f32 %v1668, %v1548
      %v1673 = vmin.f32 %v1669, %v1549
      %v1674 = vmin.f32 %v1670, %v1550
      %v1675 = vmin.f32 %v1671, %v1551
      %v1676 = vmin.f32 %v1672, %v1552
      %v1677 = vmin.f32 %v1673, %v1553
      %v1678 = vmin.f32 %v1674, %v1554
      %v1679 = vmin.f32 %v1675, %v1555
      %v1680 = vmin.f32 %v1676, %v1556
      %v1681 = vmin.f32 %v1677, %v1557
      %v1682 = vmin.f32 %v1678, %v1558
      %v1683 = vmin.f32 %v1679, %v1559
      %v1684 = vmin.f32 %v1680, %v1560
      %v1685 = vmin.f32 %v1681, %v1561
      %v1686 = vmin.f32 %v1682, %v1562
      %v1687 = vmin.f32 %v1683, %v1563
      %v1688 = vmin.f32 %v1684, %v1564
      %v1689 = vmin.f32 %v1685, %v1565
      %v1690 = vmin.f32 %v1686, %v1566
      %v1691 = vmin.f32 %v1687, %v1567
      %v1692 = vmin.f32 %v1688, %v1568
      %v1693 = vmin.f32 %v1689, %v1569
      %v1694 = vmin.f32 %v1690, %v1570
      %v1695 = vmin.f32 %v1691, %v1571
      %v1696 = vmin.f32 %v1692, %v1572
      %v1697 = vmin.f32 %v1693, %v1573
      %v1698 = vmin.f32 %v1694, %v1574
      %v1699 = vmin.f32 %v1695, %v1575
      %v1700 = vmin.f32 %v1696, %v1576
      %v1701 = vmin.f32 %v1697, %v1577
      %v1702 = vmin.f32 %v1698, %v1578
      %v1703 = vmin.f32 %v1699, %v1579
      %v1704 = vmin.f32 %v1700, %v1580
      %v1705 = vmin.f32 %v1701, %v1581
      %v1706 = vmin.f32 %v1702, %v1582
      %v1707 = vmin.f32 %v1703, %v1583
      %v1708 = vmin.f32 %v1704, %v1584
      %v1709 = vmin.f32 %v1705, %v1585
      %v1710 = vmin.f32 %v1706, %v1586
      %v1711 = vmin.f32 %v1707, %v1587
      %v1712 = vmin.f32 %v1708, %v1588
      %v1713 = vmin.f32 %v1709, %v1589
      %v1714 = vmin.f32 %v1710, %v1590
      %v1715 = vmin.f32 %v1711, %v1591
      %v1716 = vmin.f32 %v1712, %v1592
      %v1717 = vmin.f32 %v1713, %v1593
      %v1718 = vmin.f32 %v1714, %v1594
      %v1719 = vmin.f32 %v1715, %v1595
      %v1720 = vmin.f32 %v1716, %v1596
      %v1721 = vmin.f32 %v1717, %v1597
      %v1722 = vmin.f32 %v1718, %v1598
      %v1723 = vmin.f32 %v1719, %v1720
      %v1724 = vmin.f32 %v1721, %v1722
      %v1725 = vmin.f32 %v1723, %v1724
      %1726 = vmin.xlane.f32.xlu0 %v1725
      %v1727 = vpop.xlane.xlu0 %1726
      %v1728 = vrot.slane %v1727, 4
      %v1729 = vmin.f32 %v1727, %v1728
      %v1730 = vrot.slane %v1729, 2
      %v1731 = vmin.f32 %v1729, %v1730
      %v1732 = vrot.slane %v1731, 1
      %v1733 = vmin.f32 %v1731, %v1732
      %s1734 = vtos %v1733
      %v1735 = vstv %s1734
      %v1736 = vmax.f32 %v1535, %v1539
      %v1737 = vmax.f32 %v1536, %v1540
      %v1738 = vmax.f32 %v1537, %v1541
      %v1739 = vmax.f32 %v1538, %v1542
      %v1740 = vmax.f32 %v1736, %v1543
      %v1741 = vmax.f32 %v1737, %v1544
      %v1742 = vmax.f32 %v1738, %v1545
      %v1743 = vmax.f32 %v1739, %v1546
      %v1744 = vmax.f32 %v1740, %v1547
      %v1745 = vmax.f32 %v1741, %v1548
      %v1746 = vmax.f32 %v1742, %v1549
      %v1747 = vmax.f32 %v1743, %v1550
      %v1748 = vmax.f32 %v1744, %v1551
      %v1749 = vmax.f32 %v1745, %v1552
      %v1750 = vmax.f32 %v1746, %v1553
      %v1751 = vmax.f32 %v1747, %v1554
      %v1752 = vmax.f32 %v1748, %v1555
      %v1753 = vmax.f32 %v1749, %v1556
      %v1754 = vmax.f32 %v1750, %v1557
      %v1755 = vmax.f32 %v1751, %v1558
      %v1756 = vmax.f32 %v1752, %v1559
      %v1757 = vmax.f32 %v1753, %v1560
      %v1758 = vmax.f32 %v1754, %v1561
      %v1759 = vmax.f32 %v1755, %v1562
      %v1760 = vmax.f32 %v1756, %v1563
      %v1761 = vmax.f32 %v1757, %v1564
      %v1762 = vmax.f32 %v1758, %v1565
      %v1763 = vmax.f32 %v1759, %v1566
      %v1764 = vmax.f32 %v1760, %v1567
      %v1765 = vmax.f32 %v1761, %v1568
      %v1766 = vmax.f32 %v1762, %v1569
      %v1767 = vmax.f32 %v1763, %v1570
      %v1768 = vmax.f32 %v1764, %v1571
      %v1769 = vmax.f32 %v1765, %v1572
      %v1770 = vmax.f32 %v1766, %v1573
      %v1771 = vmax.f32 %v1767, %v1574
      %v1772 = vmax.f32 %v1768, %v1575
      %v1773 = vmax.f32 %v1769, %v1576
      %v1774 = vmax.f32 %v1770, %v1577
      %v1775 = vmax.f32 %v1771, %v1578
      %v1776 = vmax.f32 %v1772, %v1579
      %v1777 = vmax.f32 %v1773, %v1580
      %v1778 = vmax.f32 %v1774, %v1581
      %v1779 = vmax.f32 %v1775, %v1582
      %v1780 = vmax.f32 %v1776, %v1583
      %v1781 = vmax.f32 %v1777, %v1584
      %v1782 = vmax.f32 %v1778, %v1585
      %v1783 = vmax.f32 %v1779, %v1586
      %v1784 = vmax.f32 %v1780, %v1587
      %v1785 = vmax.f32 %v1781, %v1588
      %v1786 = vmax.f32 %v1782, %v1589
      %v1787 = vmax.f32 %v1783, %v1590
      %v1788 = vmax.f32 %v1784, %v1591
      %v1789 = vmax.f32 %v1785, %v1592
      %v1790 = vmax.f32 %v1786, %v1593
      %v1791 = vmax.f32 %v1787, %v1594
      %v1792 = vmax.f32 %v1788, %v1595
      %v1793 = vmax.f32 %v1789, %v1596
      %v1794 = vmax.f32 %v1790, %v1597
      %v1795 = vmax.f32 %v1791, %v1598
      %v1796 = vmax.f32 %v1792, %v1793
      %v1797 = vmax.f32 %v1794, %v1795
      %v1798 = vmax.f32 %v1796, %v1797
      %1799 = vmax.xlane.f32.xlu0 %v1798
      %v1800 = vpop.xlane.xlu0 %1799
      %v1801 = vrot.slane %v1800, 4
      %v1802 = vmax.f32 %v1800, %v1801
      %v1803 = vrot.slane %v1802, 2
      %v1804 = vmax.f32 %v1802, %v1803
      %v1805 = vrot.slane %v1804, 1
      %v1806 = vmax.f32 %v1804, %v1805
      %s1807 = vtos %v1806
      %v1808 = vstv %s1807
      %v1809 = vmin.f32 %v1599, %v1603
      %v1810 = vmin.f32 %v1600, %v1604
      %v1811 = vmin.f32 %v1601, %v1605
      %v1812 = vmin.f32 %v1602, %v1606
      %v1813 = vmin.f32 %v1809, %v1607
      %v1814 = vmin.f32 %v1810, %v1608
      %v1815 = vmin.f32 %v1811, %v1609
      %v1816 = vmin.f32 %v1812, %v1610
      %v1817 = vmin.f32 %v1813, %v1611
      %v1818 = vmin.f32 %v1814, %v1612
      %v1819 = vmin.f32 %v1815, %v1613
      %v1820 = vmin.f32 %v1816, %v1614
      %v1821 = vmin.f32 %v1817, %v1615
      %v1822 = vmin.f32 %v1818, %v1616
      %v1823 = vmin.f32 %v1819, %v1617
      %v1824 = vmin.f32 %v1820, %v1618
      %v1825 = vmin.f32 %v1821, %v1619
      %v1826 = vmin.f32 %v1822, %v1620
      %v1827 = vmin.f32 %v1823, %v1621
      %v1828 = vmin.f32 %v1824, %v1622
      %v1829 = vmin.f32 %v1825, %v1623
      %v1830 = vmin.f32 %v1826, %v1624
      %v1831 = vmin.f32 %v1827, %v1625
      %v1832 = vmin.f32 %v1828, %v1626
      %v1833 = vmin.f32 %v1829, %v1627
      %v1834 = vmin.f32 %v1830, %v1628
      %v1835 = vmin.f32 %v1831, %v1629
      %v1836 = vmin.f32 %v1832, %v1630
      %v1837 = vmin.f32 %v1833, %v1631
      %v1838 = vmin.f32 %v1834, %v1632
      %v1839 = vmin.f32 %v1835, %v1633
      %v1840 = vmin.f32 %v1836, %v1634
      %v1841 = vmin.f32 %v1837, %v1635
      %v1842 = vmin.f32 %v1838, %v1636
      %v1843 = vmin.f32 %v1839, %v1637
      %v1844 = vmin.f32 %v1840, %v1638
      %v1845 = vmin.f32 %v1841, %v1639
      %v1846 = vmin.f32 %v1842, %v1640
      %v1847 = vmin.f32 %v1843, %v1641
      %v1848 = vmin.f32 %v1844, %v1642
      %v1849 = vmin.f32 %v1845, %v1643
      %v1850 = vmin.f32 %v1846, %v1644
      %v1851 = vmin.f32 %v1847, %v1645
      %v1852 = vmin.f32 %v1848, %v1646
      %v1853 = vmin.f32 %v1849, %v1647
      %v1854 = vmin.f32 %v1850, %v1648
      %v1855 = vmin.f32 %v1851, %v1649
      %v1856 = vmin.f32 %v1852, %v1650
      %v1857 = vmin.f32 %v1853, %v1651
      %v1858 = vmin.f32 %v1854, %v1652
      %v1859 = vmin.f32 %v1855, %v1653
      %v1860 = vmin.f32 %v1856, %v1654
      %v1861 = vmin.f32 %v1857, %v1655
      %v1862 = vmin.f32 %v1858, %v1656
      %v1863 = vmin.f32 %v1859, %v1657
      %v1864 = vmin.f32 %v1860, %v1658
      %v1865 = vmin.f32 %v1861, %v1659
      %v1866 = vmin.f32 %v1862, %v1660
      %v1867 = vmin.f32 %v1863, %v1661
      %v1868 = vmin.f32 %v1864, %v1662
      %v1869 = vmin.f32 %v1865, %v1866
      %v1870 = vmin.f32 %v1867, %v1868
      %v1871 = vmin.f32 %v1869, %v1870
      %1872 = vmin.xlane.f32.xlu0 %v1871
      %v1873 = vpop.xlane.xlu0 %1872
      %v1874 = vrot.slane %v1873, 4
      %v1875 = vmin.f32 %v1873, %v1874
      %v1876 = vrot.slane %v1875, 2
      %v1877 = vmin.f32 %v1875, %v1876
      %v1878 = vrot.slane %v1877, 1
      %v1879 = vmin.f32 %v1877, %v1878
      %s1880 = vtos %v1879
      %v1881 = vstv %s1880
      %v1882 = vmax.f32 %v1599, %v1603
      %v1883 = vmax.f32 %v1600, %v1604
      %v1884 = vmax.f32 %v1601, %v1605
      %v1885 = vmax.f32 %v1602, %v1606
      %v1886 = vmax.f32 %v1882, %v1607
      %v1887 = vmax.f32 %v1883, %v1608
      %v1888 = vmax.f32 %v1884, %v1609
      %v1889 = vmax.f32 %v1885, %v1610
      %v1890 = vmax.f32 %v1886, %v1611
      %v1891 = vmax.f32 %v1887, %v1612
      %v1892 = vmax.f32 %v1888, %v1613
      %v1893 = vmax.f32 %v1889, %v1614
      %v1894 = vmax.f32 %v1890, %v1615
      %v1895 = vmax.f32 %v1891, %v1616
      %v1896 = vmax.f32 %v1892, %v1617
      %v1897 = vmax.f32 %v1893, %v1618
      %v1898 = vmax.f32 %v1894, %v1619
      %v1899 = vmax.f32 %v1895, %v1620
      %v1900 = vmax.f32 %v1896, %v1621
      %v1901 = vmax.f32 %v1897, %v1622
      %v1902 = vmax.f32 %v1898, %v1623
      %v1903 = vmax.f32 %v1899, %v1624
      %v1904 = vmax.f32 %v1900, %v1625
      %v1905 = vmax.f32 %v1901, %v1626
      %v1906 = vmax.f32 %v1902, %v1627
      %v1907 = vmax.f32 %v1903, %v1628
      %v1908 = vmax.f32 %v1904, %v1629
      %v1909 = vmax.f32 %v1905, %v1630
      %v1910 = vmax.f32 %v1906, %v1631
      %v1911 = vmax.f32 %v1907, %v1632
      %v1912 = vmax.f32 %v1908, %v1633
      %v1913 = vmax.f32 %v1909, %v1634
      %v1914 = vmax.f32 %v1910, %v1635
      %v1915 = vmax.f32 %v1911, %v1636
      %v1916 = vmax.f32 %v1912, %v1637
      %v1917 = vmax.f32 %v1913, %v1638
      %v1918 = vmax.f32 %v1914, %v1639
      %v1919 = vmax.f32 %v1915, %v1640
      %v1920 = vmax.f32 %v1916, %v1641
      %v1921 = vmax.f32 %v1917, %v1642
      %v1922 = vmax.f32 %v1918, %v1643
      %v1923 = vmax.f32 %v1919, %v1644
      %v1924 = vmax.f32 %v1920, %v1645
      %v1925 = vmax.f32 %v1921, %v1646
      %v1926 = vmax.f32 %v1922, %v1647
      %v1927 = vmax.f32 %v1923, %v1648
      %v1928 = vmax.f32 %v1924, %v1649
      %v1929 = vmax.f32 %v1925, %v1650
      %v1930 = vmax.f32 %v1926, %v1651
      %v1931 = vmax.f32 %v1927, %v1652
      %v1932 = vmax.f32 %v1928, %v1653
      %v1933 = vmax.f32 %v1929, %v1654
      %v1934 = vmax.f32 %v1930, %v1655
      %v1935 = vmax.f32 %v1931, %v1656
      %v1936 = vmax.f32 %v1932, %v1657
      %v1937 = vmax.f32 %v1933, %v1658
      %v1938 = vmax.f32 %v1934, %v1659
      %v1939 = vmax.f32 %v1935, %v1660
      %v1940 = vmax.f32 %v1936, %v1661
      %v1941 = vmax.f32 %v1937, %v1662
      %v1942 = vmax.f32 %v1938, %v1939
      %v1943 = vmax.f32 %v1940, %v1941
      %v1944 = vmax.f32 %v1942, %v1943
      %1945 = vmax.xlane.f32.xlu0 %v1944
      %v1946 = vpop.xlane.xlu0 %1945
      %v1947 = vrot.slane %v1946, 4
      %v1948 = vmax.f32 %v1946, %v1947
      %v1949 = vrot.slane %v1948, 2
      %v1950 = vmax.f32 %v1948, %v1949
      %v1951 = vrot.slane %v1950, 1
      %v1952 = vmax.f32 %v1950, %v1951
      %s1953 = vtos %v1952
      %v1954 = vstv %s1953
      %v1955 = vsub.f32 %v1808, %v1735
      %v1956 = vadd.f32 %v1955, 1.1920929e-07
      %v1957 = vrcp.pop %v1956
      %v1958 = vmul.f32 %v1956, %v1957
      %v1959 = vsub.f32 1.0, %v1958
      %v1960 = vmul.f32 %v1957, %v1959
      %v1961 = vadd.f32 %v1957, %v1960
      %vm1962 = vweird.f32 %v1956
      %vm1963 = vweird.f32 %v1957
      %vm1964 = vmor %vm1962, %vm1963
      %v1965 = vsel %vm1964, %v1957, %v1961
      %v1966 = vand.u32 2147483647, %v1956
      %vm1967 = vcmp.eq.f32.partialorder %v1966, 8.507059e+37
      %v1968 = vand.u32 %v1956, 2147483648
      %v1969 = vor.u32 1.1754944e-38, %v1968
      %v1970 = vsel %vm1967, %v1969, %v1965
      %v1971 = vmul.f32 1.0, %v1970
      %v1972 = vsub.f32 %v1954, %v1881
      %v1973 = vadd.f32 %v1972, 1.1920929e-07
      %v1974 = vrcp.pop %v1973
      %v1975 = vmul.f32 %v1973, %v1974
      %v1976 = vsub.f32 1.0, %v1975
      %v1977 = vmul.f32 %v1974, %v1976
      %v1978 = vadd.f32 %v1974, %v1977
      %vm1979 = vweird.f32 %v1973
      %vm1980 = vweird.f32 %v1974
      %vm1981 = vmor %vm1979, %vm1980
      %v1982 = vsel %vm1981, %v1974, %v1978
      %v1983 = vand.u32 2147483647, %v1973
      %vm1984 = vcmp.eq.f32.partialorder %v1983, 8.507059e+37
      %v1985 = vand.u32 %v1973, 2147483648
      %v1986 = vor.u32 1.1754944e-38, %v1985
      %v1987 = vsel %vm1984, %v1986, %v1982
      %v1988 = vmul.f32 1.0, %v1987
      %v1989 = vsub.f32 %v1535, %v1735
      %v1990 = vsub.f32 %v1536, %v1735
      %v1991 = vsub.f32 %v1537, %v1735
      %v1992 = vsub.f32 %v1538, %v1735
      %v1993 = vsub.f32 %v1539, %v1735
      %v1994 = vsub.f32 %v1540, %v1735
      %v1995 = vsub.f32 %v1541, %v1735
      %v1996 = vsub.f32 %v1542, %v1735
      %v1997 = vsub.f32 %v1543, %v1735
      %v1998 = vsub.f32 %v1544, %v1735
      %v1999 = vsub.f32 %v1545, %v1735
      %v2000 = vsub.f32 %v1546, %v1735
      %v2001 = vsub.f32 %v1547, %v1735
      %v2002 = vsub.f32 %v1548, %v1735
      %v2003 = vsub.f32 %v1549, %v1735
      %v2004 = vsub.f32 %v1550, %v1735
      %v2005 = vsub.f32 %v1551, %v1735
      %v2006 = vsub.f32 %v1552, %v1735
      %v2007 = vsub.f32 %v1553, %v1735
      %v2008 = vsub.f32 %v1554, %v1735
      %v2009 = vsub.f32 %v1555, %v1735
      %v2010 = vsub.f32 %v1556, %v1735
      %v2011 = vsub.f32 %v1557, %v1735
      %v2012 = vsub.f32 %v1558, %v1735
      %v2013 = vsub.f32 %v1559, %v1735
      %v2014 = vsub.f32 %v1560, %v1735
      %v2015 = vsub.f32 %v1561, %v1735
      %v2016 = vsub.f32 %v1562, %v1735
      %v2017 = vsub.f32 %v1563, %v1735
      %v2018 = vsub.f32 %v1564, %v1735
      %v2019 = vsub.f32 %v1565, %v1735
      %v2020 = vsub.f32 %v1566, %v1735
      %v2021 = vsub.f32 %v1567, %v1735
      %v2022 = vsub.f32 %v1568, %v1735
      %v2023 = vsub.f32 %v1569, %v1735
      %v2024 = vsub.f32 %v1570, %v1735
      %v2025 = vsub.f32 %v1571, %v1735
      %v2026 = vsub.f32 %v1572, %v1735
      %v2027 = vsub.f32 %v1573, %v1735
      %v2028 = vsub.f32 %v1574, %v1735
      %v2029 = vsub.f32 %v1575, %v1735
      %v2030 = vsub.f32 %v1576, %v1735
      %v2031 = vsub.f32 %v1577, %v1735
      %v2032 = vsub.f32 %v1578, %v1735
      %v2033 = vsub.f32 %v1579, %v1735
      %v2034 = vsub.f32 %v1580, %v1735
      %v2035 = vsub.f32 %v1581, %v1735
      %v2036 = vsub.f32 %v1582, %v1735
      %v2037 = vsub.f32 %v1583, %v1735
      %v2038 = vsub.f32 %v1584, %v1735
      %v2039 = vsub.f32 %v1585, %v1735
      %v2040 = vsub.f32 %v1586, %v1735
      %v2041 = vsub.f32 %v1587, %v1735
      %v2042 = vsub.f32 %v1588, %v1735
      %v2043 = vsub.f32 %v1589, %v1735
      %v2044 = vsub.f32 %v1590, %v1735
      %v2045 = vsub.f32 %v1591, %v1735
      %v2046 = vsub.f32 %v1592, %v1735
      %v2047 = vsub.f32 %v1593, %v1735
      %v2048 = vsub.f32 %v1594, %v1735
      %v2049 = vsub.f32 %v1595, %v1735
      %v2050 = vsub.f32 %v1596, %v1735
      %v2051 = vsub.f32 %v1597, %v1735
      %v2052 = vsub.f32 %v1598, %v1735
      %v2053 = vmul.f32 %v1989, %v1971
      %v2054 = vmul.f32 %v1990, %v1971
      %v2055 = vmul.f32 %v1991, %v1971
      %v2056 = vmul.f32 %v1992, %v1971
      %v2057 = vmul.f32 %v1993, %v1971
      %v2058 = vmul.f32 %v1994, %v1971
      %v2059 = vmul.f32 %v1995, %v1971
      %v2060 = vmul.f32 %v1996, %v1971
      %v2061 = vmul.f32 %v1997, %v1971
      %v2062 = vmul.f32 %v1998, %v1971
      %v2063 = vmul.f32 %v1999, %v1971
      %v2064 = vmul.f32 %v2000, %v1971
      %v2065 = vmul.f32 %v2001, %v1971
      %v2066 = vmul.f32 %v2002, %v1971
      %v2067 = vmul.f32 %v2003, %v1971
      %v2068 = vmul.f32 %v2004, %v1971
      %v2069 = vmul.f32 %v2005, %v1971
      %v2070 = vmul.f32 %v2006, %v1971
      %v2071 = vmul.f32 %v2007, %v1971
      %v2072 = vmul.f32 %v2008, %v1971
      %v2073 = vmul.f32 %v2009, %v1971
      %v2074 = vmul.f32 %v2010, %v1971
      %v2075 = vmul.f32 %v2011, %v1971
      %v2076 = vmul.f32 %v2012, %v1971
      %v2077 = vmul.f32 %v2013, %v1971
      %v2078 = vmul.f32 %v2014, %v1971
      %v2079 = vmul.f32 %v2015, %v1971
      %v2080 = vmul.f32 %v2016, %v1971
      %v2081 = vmul.f32 %v2017, %v1971
      %v2082 = vmul.f32 %v2018, %v1971
      %v2083 = vmul.f32 %v2019, %v1971
      %v2084 = vmul.f32 %v2020, %v1971
      %v2085 = vmul.f32 %v2021, %v1971
      %v2086 = vmul.f32 %v2022, %v1971
      %v2087 = vmul.f32 %v2023, %v1971
      %v2088 = vmul.f32 %v2024, %v1971
      %v2089 = vmul.f32 %v2025, %v1971
      %v2090 = vmul.f32 %v2026, %v1971
      %v2091 = vmul.f32 %v2027, %v1971
      %v2092 = vmul.f32 %v2028, %v1971
      %v2093 = vmul.f32 %v2029, %v1971
      %v2094 = vmul.f32 %v2030, %v1971
      %v2095 = vmul.f32 %v2031, %v1971
      %v2096 = vmul.f32 %v2032, %v1971
      %v2097 = vmul.f32 %v2033, %v1971
      %v2098 = vmul.f32 %v2034, %v1971
      %v2099 = vmul.f32 %v2035, %v1971
      %v2100 = vmul.f32 %v2036, %v1971
      %v2101 = vmul.f32 %v2037, %v1971
      %v2102 = vmul.f32 %v2038, %v1971
      %v2103 = vmul.f32 %v2039, %v1971
      %v2104 = vmul.f32 %v2040, %v1971
      %v2105 = vmul.f32 %v2041, %v1971
      %v2106 = vmul.f32 %v2042, %v1971
      %v2107 = vmul.f32 %v2043, %v1971
      %v2108 = vmul.f32 %v2044, %v1971
      %v2109 = vmul.f32 %v2045, %v1971
      %v2110 = vmul.f32 %v2046, %v1971
      %v2111 = vmul.f32 %v2047, %v1971
      %v2112 = vmul.f32 %v2048, %v1971
      %v2113 = vmul.f32 %v2049, %v1971
      %v2114 = vmul.f32 %v2050, %v1971
      %v2115 = vmul.f32 %v2051, %v1971
      %v2116 = vmul.f32 %v2052, %v1971
      %v2117 = vsub.f32 %v1599, %v1881
      %v2118 = vsub.f32 %v1600, %v1881
      %v2119 = vsub.f32 %v1601, %v1881
      %v2120 = vsub.f32 %v1602, %v1881
      %v2121 = vsub.f32 %v1603, %v1881
      %v2122 = vsub.f32 %v1604, %v1881
      %v2123 = vsub.f32 %v1605, %v1881
      %v2124 = vsub.f32 %v1606, %v1881
      %v2125 = vsub.f32 %v1607, %v1881
      %v2126 = vsub.f32 %v1608, %v1881
      %v2127 = vsub.f32 %v1609, %v1881
      %v2128 = vsub.f32 %v1610, %v1881
      %v2129 = vsub.f32 %v1611, %v1881
      %v2130 = vsub.f32 %v1612, %v1881
      %v2131 = vsub.f32 %v1613, %v1881
      %v2132 = vsub.f32 %v1614, %v1881
      %v2133 = vsub.f32 %v1615, %v1881
      %v2134 = vsub.f32 %v1616, %v1881
      %v2135 = vsub.f32 %v1617, %v1881
      %v2136 = vsub.f32 %v1618, %v1881
      %v2137 = vsub.f32 %v1619, %v1881
      %v2138 = vsub.f32 %v1620, %v1881
      %v2139 = vsub.f32 %v1621, %v1881
      %v2140 = vsub.f32 %v1622, %v1881
      %v2141 = vsub.f32 %v1623, %v1881
      %v2142 = vsub.f32 %v1624, %v1881
      %v2143 = vsub.f32 %v1625, %v1881
      %v2144 = vsub.f32 %v1626, %v1881
      %v2145 = vsub.f32 %v1627, %v1881
      %v2146 = vsub.f32 %v1628, %v1881
      %v2147 = vsub.f32 %v1629, %v1881
      %v2148 = vsub.f32 %v1630, %v1881
      %v2149 = vsub.f32 %v1631, %v1881
      %v2150 = vsub.f32 %v1632, %v1881
      %v2151 = vsub.f32 %v1633, %v1881
      %v2152 = vsub.f32 %v1634, %v1881
      %v2153 = vsub.f32 %v1635, %v1881
      %v2154 = vsub.f32 %v1636, %v1881
      %v2155 = vsub.f32 %v1637, %v1881
      %v2156 = vsub.f32 %v1638, %v1881
      %v2157 = vsub.f32 %v1639, %v1881
      %v2158 = vsub.f32 %v1640, %v1881
      %v2159 = vsub.f32 %v1641, %v1881
      %v2160 = vsub.f32 %v1642, %v1881
      %v2161 = vsub.f32 %v1643, %v1881
      %v2162 = vsub.f32 %v1644, %v1881
      %v2163 = vsub.f32 %v1645, %v1881
      %v2164 = vsub.f32 %v1646, %v1881
      %v2165 = vsub.f32 %v1647, %v1881
      %v2166 = vsub.f32 %v1648, %v1881
      %v2167 = vsub.f32 %v1649, %v1881
      %v2168 = vsub.f32 %v1650, %v1881
      %v2169 = vsub.f32 %v1651, %v1881
      %v2170 = vsub.f32 %v1652, %v1881
      %v2171 = vsub.f32 %v1653, %v1881
      %v2172 = vsub.f32 %v1654, %v1881
      %v2173 = vsub.f32 %v1655, %v1881
      %v2174 = vsub.f32 %v1656, %v1881
      %v2175 = vsub.f32 %v1657, %v1881
      %v2176 = vsub.f32 %v1658, %v1881
      %v2177 = vsub.f32 %v1659, %v1881
      %v2178 = vsub.f32 %v1660, %v1881
      %v2179 = vsub.f32 %v1661, %v1881
      %v2180 = vsub.f32 %v1662, %v1881
      %v2181 = vmul.f32 %v2117, %v1988
      %v2182 = vmul.f32 %v2118, %v1988
      %v2183 = vmul.f32 %v2119, %v1988
      %v2184 = vmul.f32 %v2120, %v1988
      %v2185 = vmul.f32 %v2121, %v1988
      %v2186 = vmul.f32 %v2122, %v1988
      %v2187 = vmul.f32 %v2123, %v1988
      %v2188 = vmul.f32 %v2124, %v1988
      %v2189 = vmul.f32 %v2125, %v1988
      %v2190 = vmul.f32 %v2126, %v1988
      %v2191 = vmul.f32 %v2127, %v1988
      %v2192 = vmul.f32 %v2128, %v1988
      %v2193 = vmul.f32 %v2129, %v1988
      %v2194 = vmul.f32 %v2130, %v1988
      %v2195 = vmul.f32 %v2131, %v1988
      %v2196 = vmul.f32 %v2132, %v1988
      %v2197 = vmul.f32 %v2133, %v1988
      %v2198 = vmul.f32 %v2134, %v1988
      %v2199 = vmul.f32 %v2135, %v1988
      %v2200 = vmul.f32 %v2136, %v1988
      %v2201 = vmul.f32 %v2137, %v1988
      %v2202 = vmul.f32 %v2138, %v1988
      %v2203 = vmul.f32 %v2139, %v1988
      %v2204 = vmul.f32 %v2140, %v1988
      %v2205 = vmul.f32 %v2141, %v1988
      %v2206 = vmul.f32 %v2142, %v1988
      %v2207 = vmul.f32 %v2143, %v1988
      %v2208 = vmul.f32 %v2144, %v1988
      %v2209 = vmul.f32 %v2145, %v1988
      %v2210 = vmul.f32 %v2146, %v1988
      %v2211 = vmul.f32 %v2147, %v1988
      %v2212 = vmul.f32 %v2148, %v1988
      %v2213 = vmul.f32 %v2149, %v1988
      %v2214 = vmul.f32 %v2150, %v1988
      %v2215 = vmul.f32 %v2151, %v1988
      %v2216 = vmul.f32 %v2152, %v1988
      %v2217 = vmul.f32 %v2153, %v1988
      %v2218 = vmul.f32 %v2154, %v1988
      %v2219 = vmul.f32 %v2155, %v1988
      %v2220 = vmul.f32 %v2156, %v1988
      %v2221 = vmul.f32 %v2157, %v1988
      %v2222 = vmul.f32 %v2158, %v1988
      %v2223 = vmul.f32 %v2159, %v1988
      %v2224 = vmul.f32 %v2160, %v1988
      %v2225 = vmul.f32 %v2161, %v1988
      %v2226 = vmul.f32 %v2162, %v1988
      %v2227 = vmul.f32 %v2163, %v1988
      %v2228 = vmul.f32 %v2164, %v1988
      %v2229 = vmul.f32 %v2165, %v1988
      %v2230 = vmul.f32 %v2166, %v1988
      %v2231 = vmul.f32 %v2167, %v1988
      %v2232 = vmul.f32 %v2168, %v1988
      %v2233 = vmul.f32 %v2169, %v1988
      %v2234 = vmul.f32 %v2170, %v1988
      %v2235 = vmul.f32 %v2171, %v1988
      %v2236 = vmul.f32 %v2172, %v1988
      %v2237 = vmul.f32 %v2173, %v1988
      %v2238 = vmul.f32 %v2174, %v1988
      %v2239 = vmul.f32 %v2175, %v1988
      %v2240 = vmul.f32 %v2176, %v1988
      %v2241 = vmul.f32 %v2177, %v1988
      %v2242 = vmul.f32 %v2178, %v1988
      %v2243 = vmul.f32 %v2179, %v1988
      %v2244 = vmul.f32 %v2180, %v1988
      %v2245 = vmul.f32 %v2053, %v2053
      %v2246 = vmul.f32 %v2054, %v2054
      %v2247 = vmul.f32 %v2055, %v2055
      %v2248 = vmul.f32 %v2056, %v2056
      %v2249 = vmul.f32 %v2057, %v2057
      %v2250 = vmul.f32 %v2058, %v2058
      %v2251 = vmul.f32 %v2059, %v2059
      %v2252 = vmul.f32 %v2060, %v2060
      %v2253 = vmul.f32 %v2061, %v2061
      %v2254 = vmul.f32 %v2062, %v2062
      %v2255 = vmul.f32 %v2063, %v2063
      %v2256 = vmul.f32 %v2064, %v2064
      %v2257 = vmul.f32 %v2065, %v2065
      %v2258 = vmul.f32 %v2066, %v2066
      %v2259 = vmul.f32 %v2067, %v2067
      %v2260 = vmul.f32 %v2068, %v2068
      %v2261 = vmul.f32 %v2069, %v2069
      %v2262 = vmul.f32 %v2070, %v2070
      %v2263 = vmul.f32 %v2071, %v2071
      %v2264 = vmul.f32 %v2072, %v2072
      %v2265 = vmul.f32 %v2073, %v2073
      %v2266 = vmul.f32 %v2074, %v2074
      %v2267 = vmul.f32 %v2075, %v2075
      %v2268 = vmul.f32 %v2076, %v2076
      %v2269 = vmul.f32 %v2077, %v2077
      %v2270 = vmul.f32 %v2078, %v2078
      %v2271 = vmul.f32 %v2079, %v2079
      %v2272 = vmul.f32 %v2080, %v2080
      %v2273 = vmul.f32 %v2081, %v2081
      %v2274 = vmul.f32 %v2082, %v2082
      %v2275 = vmul.f32 %v2083, %v2083
      %v2276 = vmul.f32 %v2084, %v2084
      %v2277 = vmul.f32 %v2085, %v2085
      %v2278 = vmul.f32 %v2086, %v2086
      %v2279 = vmul.f32 %v2087, %v2087
      %v2280 = vmul.f32 %v2088, %v2088
      %v2281 = vmul.f32 %v2089, %v2089
      %v2282 = vmul.f32 %v2090, %v2090
      %v2283 = vmul.f32 %v2091, %v2091
      %v2284 = vmul.f32 %v2092, %v2092
      %v2285 = vmul.f32 %v2093, %v2093
      %v2286 = vmul.f32 %v2094, %v2094
      %v2287 = vmul.f32 %v2095, %v2095
      %v2288 = vmul.f32 %v2096, %v2096
      %v2289 = vmul.f32 %v2097, %v2097
      %v2290 = vmul.f32 %v2098, %v2098
      %v2291 = vmul.f32 %v2099, %v2099
      %v2292 = vmul.f32 %v2100, %v2100
      %v2293 = vmul.f32 %v2101, %v2101
      %v2294 = vmul.f32 %v2102, %v2102
      %v2295 = vmul.f32 %v2103, %v2103
      %v2296 = vmul.f32 %v2104, %v2104
      %v2297 = vmul.f32 %v2105, %v2105
      %v2298 = vmul.f32 %v2106, %v2106
      %v2299 = vmul.f32 %v2107, %v2107
      %v2300 = vmul.f32 %v2108, %v2108
      %v2301 = vmul.f32 %v2109, %v2109
      %v2302 = vmul.f32 %v2110, %v2110
      %v2303 = vmul.f32 %v2111, %v2111
      %v2304 = vmul.f32 %v2112, %v2112
      %v2305 = vmul.f32 %v2113, %v2113
      %v2306 = vmul.f32 %v2114, %v2114
      %v2307 = vmul.f32 %v2115, %v2115
      %v2308 = vmul.f32 %v2116, %v2116
      %v2309 = vmul.f32 %v2181, %v2181
      %v2310 = vmul.f32 %v2182, %v2182
      %v2311 = vmul.f32 %v2183, %v2183
      %v2312 = vmul.f32 %v2184, %v2184
      %v2313 = vmul.f32 %v2185, %v2185
      %v2314 = vmul.f32 %v2186, %v2186
      %v2315 = vmul.f32 %v2187, %v2187
      %v2316 = vmul.f32 %v2188, %v2188
      %v2317 = vmul.f32 %v2189, %v2189
      %v2318 = vmul.f32 %v2190, %v2190
      %v2319 = vmul.f32 %v2191, %v2191
      %v2320 = vmul.f32 %v2192, %v2192
      %v2321 = vmul.f32 %v2193, %v2193
      %v2322 = vmul.f32 %v2194, %v2194
      %v2323 = vmul.f32 %v2195, %v2195
      %v2324 = vmul.f32 %v2196, %v2196
      %v2325 = vmul.f32 %v2197, %v2197
      %v2326 = vmul.f32 %v2198, %v2198
      %v2327 = vmul.f32 %v2199, %v2199
      %v2328 = vmul.f32 %v2200, %v2200
      %v2329 = vmul.f32 %v2201, %v2201
      %v2330 = vmul.f32 %v2202, %v2202
      %v2331 = vmul.f32 %v2203, %v2203
      %v2332 = vmul.f32 %v2204, %v2204
      %v2333 = vmul.f32 %v2205, %v2205
      %v2334 = vmul.f32 %v2206, %v2206
      %v2335 = vmul.f32 %v2207, %v2207
      %v2336 = vmul.f32 %v2208, %v2208
      %v2337 = vmul.f32 %v2209, %v2209
      %v2338 = vmul.f32 %v2210, %v2210
      %v2339 = vmul.f32 %v2211, %v2211
      %v2340 = vmul.f32 %v2212, %v2212
      %v2341 = vmul.f32 %v2213, %v2213
      %v2342 = vmul.f32 %v2214, %v2214
      %v2343 = vmul.f32 %v2215, %v2215
      %v2344 = vmul.f32 %v2216, %v2216
      %v2345 = vmul.f32 %v2217, %v2217
      %v2346 = vmul.f32 %v2218, %v2218
      %v2347 = vmul.f32 %v2219, %v2219
      %v2348 = vmul.f32 %v2220, %v2220
      %v2349 = vmul.f32 %v2221, %v2221
      %v2350 = vmul.f32 %v2222, %v2222
      %v2351 = vmul.f32 %v2223, %v2223
      %v2352 = vmul.f32 %v2224, %v2224
      %v2353 = vmul.f32 %v2225, %v2225
      %v2354 = vmul.f32 %v2226, %v2226
      %v2355 = vmul.f32 %v2227, %v2227
      %v2356 = vmul.f32 %v2228, %v2228
      %v2357 = vmul.f32 %v2229, %v2229
      %v2358 = vmul.f32 %v2230, %v2230
      %v2359 = vmul.f32 %v2231, %v2231
      %v2360 = vmul.f32 %v2232, %v2232
      %v2361 = vmul.f32 %v2233, %v2233
      %v2362 = vmul.f32 %v2234, %v2234
      %v2363 = vmul.f32 %v2235, %v2235
      %v2364 = vmul.f32 %v2236, %v2236
      %v2365 = vmul.f32 %v2237, %v2237
      %v2366 = vmul.f32 %v2238, %v2238
      %v2367 = vmul.f32 %v2239, %v2239
      %v2368 = vmul.f32 %v2240, %v2240
      %v2369 = vmul.f32 %v2241, %v2241
      %v2370 = vmul.f32 %v2242, %v2242
      %v2371 = vmul.f32 %v2243, %v2243
      %v2372 = vmul.f32 %v2244, %v2244
      %v2373 = vadd.f32 %v2245, %v2309
      %v2374 = vadd.f32 %v2246, %v2310
      %v2375 = vadd.f32 %v2247, %v2311
      %v2376 = vadd.f32 %v2248, %v2312
      %v2377 = vadd.f32 %v2249, %v2313
      %v2378 = vadd.f32 %v2250, %v2314
      %v2379 = vadd.f32 %v2251, %v2315
      %v2380 = vadd.f32 %v2252, %v2316
      %v2381 = vadd.f32 %v2253, %v2317
      %v2382 = vadd.f32 %v2254, %v2318
      %v2383 = vadd.f32 %v2255, %v2319
      %v2384 = vadd.f32 %v2256, %v2320
      %v2385 = vadd.f32 %v2257, %v2321
      %v2386 = vadd.f32 %v2258, %v2322
      %v2387 = vadd.f32 %v2259, %v2323
      %v2388 = vadd.f32 %v2260, %v2324
      %v2389 = vadd.f32 %v2261, %v2325
      %v2390 = vadd.f32 %v2262, %v2326
      %v2391 = vadd.f32 %v2263, %v2327
      %v2392 = vadd.f32 %v2264, %v2328
      %v2393 = vadd.f32 %v2265, %v2329
      %v2394 = vadd.f32 %v2266, %v2330
      %v2395 = vadd.f32 %v2267, %v2331
      %v2396 = vadd.f32 %v2268, %v2332
      %v2397 = vadd.f32 %v2269, %v2333
      %v2398 = vadd.f32 %v2270, %v2334
      %v2399 = vadd.f32 %v2271, %v2335
      %v2400 = vadd.f32 %v2272, %v2336
      %v2401 = vadd.f32 %v2273, %v2337
      %v2402 = vadd.f32 %v2274, %v2338
      %v2403 = vadd.f32 %v2275, %v2339
      %v2404 = vadd.f32 %v2276, %v2340
      %v2405 = vadd.f32 %v2277, %v2341
      %v2406 = vadd.f32 %v2278, %v2342
      %v2407 = vadd.f32 %v2279, %v2343
      %v2408 = vadd.f32 %v2280, %v2344
      %v2409 = vadd.f32 %v2281, %v2345
      %v2410 = vadd.f32 %v2282, %v2346
      %v2411 = vadd.f32 %v2283, %v2347
      %v2412 = vadd.f32 %v2284, %v2348
      %v2413 = vadd.f32 %v2285, %v2349
      %v2414 = vadd.f32 %v2286, %v2350
      %v2415 = vadd.f32 %v2287, %v2351
      %v2416 = vadd.f32 %v2288, %v2352
      %v2417 = vadd.f32 %v2289, %v2353
      %v2418 = vadd.f32 %v2290, %v2354
      %v2419 = vadd.f32 %v2291, %v2355
      %v2420 = vadd.f32 %v2292, %v2356
      %v2421 = vadd.f32 %v2293, %v2357
      %v2422 = vadd.f32 %v2294, %v2358
      %v2423 = vadd.f32 %v2295, %v2359
      %v2424 = vadd.f32 %v2296, %v2360
      %v2425 = vadd.f32 %v2297, %v2361
      %v2426 = vadd.f32 %v2298, %v2362
      %v2427 = vadd.f32 %v2299, %v2363
      %v2428 = vadd.f32 %v2300, %v2364
      %v2429 = vadd.f32 %v2301, %v2365
      %v2430 = vadd.f32 %v2302, %v2366
      %v2431 = vadd.f32 %v2303, %v2367
      %v2432 = vadd.f32 %v2304, %v2368
      %v2433 = vadd.f32 %v2305, %v2369
      %v2434 = vadd.f32 %v2306, %v2370
      %v2435 = vadd.f32 %v2307, %v2371
      %v2436 = vadd.f32 %v2308, %v2372
      %v2437 = vsub.f32 0.0, %v2373
      %v2438 = vsub.f32 0.0, %v2374
      %v2439 = vsub.f32 0.0, %v2375
      %v2440 = vsub.f32 0.0, %v2376
      %v2441 = vsub.f32 0.0, %v2377
      %v2442 = vsub.f32 0.0, %v2378
      %v2443 = vsub.f32 0.0, %v2379
      %v2444 = vsub.f32 0.0, %v2380
      %v2445 = vsub.f32 0.0, %v2381
      %v2446 = vsub.f32 0.0, %v2382
      %v2447 = vsub.f32 0.0, %v2383
      %v2448 = vsub.f32 0.0, %v2384
      %v2449 = vsub.f32 0.0, %v2385
      %v2450 = vsub.f32 0.0, %v2386
      %v2451 = vsub.f32 0.0, %v2387
      %v2452 = vsub.f32 0.0, %v2388
      %v2453 = vsub.f32 0.0, %v2389
      %v2454 = vsub.f32 0.0, %v2390
      %v2455 = vsub.f32 0.0, %v2391
      %v2456 = vsub.f32 0.0, %v2392
      %v2457 = vsub.f32 0.0, %v2393
      %v2458 = vsub.f32 0.0, %v2394
      %v2459 = vsub.f32 0.0, %v2395
      %v2460 = vsub.f32 0.0, %v2396
      %v2461 = vsub.f32 0.0, %v2397
      %v2462 = vsub.f32 0.0, %v2398
      %v2463 = vsub.f32 0.0, %v2399
      %v2464 = vsub.f32 0.0, %v2400
      %v2465 = vsub.f32 0.0, %v2401
      %v2466 = vsub.f32 0.0, %v2402
      %v2467 = vsub.f32 0.0, %v2403
      %v2468 = vsub.f32 0.0, %v2404
      %v2469 = vsub.f32 0.0, %v2405
      %v2470 = vsub.f32 0.0, %v2406
      %v2471 = vsub.f32 0.0, %v2407
      %v2472 = vsub.f32 0.0, %v2408
      %v2473 = vsub.f32 0.0, %v2409
      %v2474 = vsub.f32 0.0, %v2410
      %v2475 = vsub.f32 0.0, %v2411
      %v2476 = vsub.f32 0.0, %v2412
      %v2477 = vsub.f32 0.0, %v2413
      %v2478 = vsub.f32 0.0, %v2414
      %v2479 = vsub.f32 0.0, %v2415
      %v2480 = vsub.f32 0.0, %v2416
      %v2481 = vsub.f32 0.0, %v2417
      %v2482 = vsub.f32 0.0, %v2418
      %v2483 = vsub.f32 0.0, %v2419
      %v2484 = vsub.f32 0.0, %v2420
      %v2485 = vsub.f32 0.0, %v2421
      %v2486 = vsub.f32 0.0, %v2422
      %v2487 = vsub.f32 0.0, %v2423
      %v2488 = vsub.f32 0.0, %v2424
      %v2489 = vsub.f32 0.0, %v2425
      %v2490 = vsub.f32 0.0, %v2426
      %v2491 = vsub.f32 0.0, %v2427
      %v2492 = vsub.f32 0.0, %v2428
      %v2493 = vsub.f32 0.0, %v2429
      %v2494 = vsub.f32 0.0, %v2430
      %v2495 = vsub.f32 0.0, %v2431
      %v2496 = vsub.f32 0.0, %v2432
      %v2497 = vsub.f32 0.0, %v2433
      %v2498 = vsub.f32 0.0, %v2434
      %v2499 = vsub.f32 0.0, %v2435
      %v2500 = vsub.f32 0.0, %v2436
      %v2501 = vmul.f32 %v2437, 1000000.0
      %v2502 = vmul.f32 %v2438, 1000000.0
      %v2503 = vmul.f32 %v2439, 1000000.0
      %v2504 = vmul.f32 %v2440, 1000000.0
      %v2505 = vmul.f32 %v2441, 1000000.0
      %v2506 = vmul.f32 %v2442, 1000000.0
      %v2507 = vmul.f32 %v2443, 1000000.0
      %v2508 = vmul.f32 %v2444, 1000000.0
      %v2509 = vmul.f32 %v2445, 1000000.0
      %v2510 = vmul.f32 %v2446, 1000000.0
      %v2511 = vmul.f32 %v2447, 1000000.0
      %v2512 = vmul.f32 %v2448, 1000000.0
      %v2513 = vmul.f32 %v2449, 1000000.0
      %v2514 = vmul.f32 %v2450, 1000000.0
      %v2515 = vmul.f32 %v2451, 1000000.0
      %v2516 = vmul.f32 %v2452, 1000000.0
      %v2517 = vmul.f32 %v2453, 1000000.0
      %v2518 = vmul.f32 %v2454, 1000000.0
      %v2519 = vmul.f32 %v2455, 1000000.0
      %v2520 = vmul.f32 %v2456, 1000000.0
      %v2521 = vmul.f32 %v2457, 1000000.0
      %v2522 = vmul.f32 %v2458, 1000000.0
      %v2523 = vmul.f32 %v2459, 1000000.0
      %v2524 = vmul.f32 %v2460, 1000000.0
      %v2525 = vmul.f32 %v2461, 1000000.0
      %v2526 = vmul.f32 %v2462, 1000000.0
      %v2527 = vmul.f32 %v2463, 1000000.0
      %v2528 = vmul.f32 %v2464, 1000000.0
      %v2529 = vmul.f32 %v2465, 1000000.0
      %v2530 = vmul.f32 %v2466, 1000000.0
      %v2531 = vmul.f32 %v2467, 1000000.0
      %v2532 = vmul.f32 %v2468, 1000000.0
      %v2533 = vmul.f32 %v2469, 1000000.0
      %v2534 = vmul.f32 %v2470, 1000000.0
      %v2535 = vmul.f32 %v2471, 1000000.0
      %v2536 = vmul.f32 %v2472, 1000000.0
      %v2537 = vmul.f32 %v2473, 1000000.0
      %v2538 = vmul.f32 %v2474, 1000000.0
      %v2539 = vmul.f32 %v2475, 1000000.0
      %v2540 = vmul.f32 %v2476, 1000000.0
      %v2541 = vmul.f32 %v2477, 1000000.0
      %v2542 = vmul.f32 %v2478, 1000000.0
      %v2543 = vmul.f32 %v2479, 1000000.0
      %v2544 = vmul.f32 %v2480, 1000000.0
      %v2545 = vmul.f32 %v2481, 1000000.0
      %v2546 = vmul.f32 %v2482, 1000000.0
      %v2547 = vmul.f32 %v2483, 1000000.0
      %v2548 = vmul.f32 %v2484, 1000000.0
      %v2549 = vmul.f32 %v2485, 1000000.0
      %v2550 = vmul.f32 %v2486, 1000000.0
      %v2551 = vmul.f32 %v2487, 1000000.0
      %v2552 = vmul.f32 %v2488, 1000000.0
      %v2553 = vmul.f32 %v2489, 1000000.0
      %v2554 = vmul.f32 %v2490, 1000000.0
      %v2555 = vmul.f32 %v2491, 1000000.0
      %v2556 = vmul.f32 %v2492, 1000000.0
      %v2557 = vmul.f32 %v2493, 1000000.0
      %v2558 = vmul.f32 %v2494, 1000000.0
      %v2559 = vmul.f32 %v2495, 1000000.0
      %v2560 = vmul.f32 %v2496, 1000000.0
      %v2561 = vmul.f32 %v2497, 1000000.0
      %v2562 = vmul.f32 %v2498, 1000000.0
      %v2563 = vmul.f32 %v2499, 1000000.0
      %v2564 = vmul.f32 %v2500, 1000000.0
      %v2565 = vmul.f32 %v2501, 1.442695
      %v2566 = vpow.pop %v2565
      %v2567 = vmul.f32 %v2502, 1.442695
      %v2568 = vpow.pop %v2567
      %v2569 = vmul.f32 %v2503, 1.442695
      %v2570 = vpow.pop %v2569
      %v2571 = vmul.f32 %v2504, 1.442695
      %v2572 = vpow.pop %v2571
      %v2573 = vmul.f32 %v2505, 1.442695
      %v2574 = vpow.pop %v2573
      %v2575 = vmul.f32 %v2506, 1.442695
      %v2576 = vpow.pop %v2575
      %v2577 = vmul.f32 %v2507, 1.442695
      %v2578 = vpow.pop %v2577
      %v2579 = vmul.f32 %v2508, 1.442695
      %v2580 = vpow.pop %v2579
      %v2581 = vmul.f32 %v2509, 1.442695
      %v2582 = vpow.pop %v2581
      %v2583 = vmul.f32 %v2510, 1.442695
      %v2584 = vpow.pop %v2583
      %v2585 = vmul.f32 %v2511, 1.442695
      %v2586 = vpow.pop %v2585
      %v2587 = vmul.f32 %v2512, 1.442695
      %v2588 = vpow.pop %v2587
      %v2589 = vmul.f32 %v2513, 1.442695
      %v2590 = vpow.pop %v2589
      %v2591 = vmul.f32 %v2514, 1.442695
      %v2592 = vpow.pop %v2591
      %v2593 = vmul.f32 %v2515, 1.442695
      %v2594 = vpow.pop %v2593
      %v2595 = vmul.f32 %v2516, 1.442695
      %v2596 = vpow.pop %v2595
      %v2597 = vmul.f32 %v2517, 1.442695
      %v2598 = vpow.pop %v2597
      %v2599 = vmul.f32 %v2518, 1.442695
      %v2600 = vpow.pop %v2599
      %v2601 = vmul.f32 %v2519, 1.442695
      %v2602 = vpow.pop %v2601
      %v2603 = vmul.f32 %v2520, 1.442695
      %v2604 = vpow.pop %v2603
      %v2605 = vmul.f32 %v2521, 1.442695
      %v2606 = vpow.pop %v2605
      %v2607 = vmul.f32 %v2522, 1.442695
      %v2608 = vpow.pop %v2607
      %v2609 = vmul.f32 %v2523, 1.442695
      %v2610 = vpow.pop %v2609
      %v2611 = vmul.f32 %v2524, 1.442695
      %v2612 = vpow.pop %v2611
      %v2613 = vmul.f32 %v2525, 1.442695
      %v2614 = vpow.pop %v2613
      %v2615 = vmul.f32 %v2526, 1.442695
      %v2616 = vpow.pop %v2615
      %v2617 = vmul.f32 %v2527, 1.442695
      %v2618 = vpow.pop %v2617
      %v2619 = vmul.f32 %v2528, 1.442695
      %v2620 = vpow.pop %v2619
      %v2621 = vmul.f32 %v2529, 1.442695
      %v2622 = vpow.pop %v2621
      %v2623 = vmul.f32 %v2530, 1.442695
      %v2624 = vpow.pop %v2623
      %v2625 = vmul.f32 %v2531, 1.442695
      %v2626 = vpow.pop %v2625
      %v2627 = vmul.f32 %v2532, 1.442695
      %v2628 = vpow.pop %v2627
      %v2629 = vmul.f32 %v2533, 1.442695
      %v2630 = vpow.pop %v2629
      %v2631 = vmul.f32 %v2534, 1.442695
      %v2632 = vpow.pop %v2631
      %v2633 = vmul.f32 %v2535, 1.442695
      %v2634 = vpow.pop %v2633
      %v2635 = vmul.f32 %v2536, 1.442695
      %v2636 = vpow.pop %v2635
      %v2637 = vmul.f32 %v2537, 1.442695
      %v2638 = vpow.pop %v2637
      %v2639 = vmul.f32 %v2538, 1.442695
      %v2640 = vpow.pop %v2639
      %v2641 = vmul.f32 %v2539, 1.442695
      %v2642 = vpow.pop %v2641
      %v2643 = vmul.f32 %v2540, 1.442695
      %v2644 = vpow.pop %v2643
      %v2645 = vmul.f32 %v2541, 1.442695
      %v2646 = vpow.pop %v2645
      %v2647 = vmul.f32 %v2542, 1.442695
      %v2648 = vpow.pop %v2647
      %v2649 = vmul.f32 %v2543, 1.442695
      %v2650 = vpow.pop %v2649
      %v2651 = vmul.f32 %v2544, 1.442695
      %v2652 = vpow.pop %v2651
      %v2653 = vmul.f32 %v2545, 1.442695
      %v2654 = vpow.pop %v2653
      %v2655 = vmul.f32 %v2546, 1.442695
      %v2656 = vpow.pop %v2655
      %v2657 = vmul.f32 %v2547, 1.442695
      %v2658 = vpow.pop %v2657
      %v2659 = vmul.f32 %v2548, 1.442695
      %v2660 = vpow.pop %v2659
      %v2661 = vmul.f32 %v2549, 1.442695
      %v2662 = vpow.pop %v2661
      %v2663 = vmul.f32 %v2550, 1.442695
      %v2664 = vpow.pop %v2663
      %v2665 = vmul.f32 %v2551, 1.442695
      %v2666 = vpow.pop %v2665
      %v2667 = vmul.f32 %v2552, 1.442695
      %v2668 = vpow.pop %v2667
      %v2669 = vmul.f32 %v2553, 1.442695
      %v2670 = vpow.pop %v2669
      %v2671 = vmul.f32 %v2554, 1.442695
      %v2672 = vpow.pop %v2671
      %v2673 = vmul.f32 %v2555, 1.442695
      %v2674 = vpow.pop %v2673
      %v2675 = vmul.f32 %v2556, 1.442695
      %v2676 = vpow.pop %v2675
      %v2677 = vmul.f32 %v2557, 1.442695
      %v2678 = vpow.pop %v2677
      %v2679 = vmul.f32 %v2558, 1.442695
      %v2680 = vpow.pop %v2679
      %v2681 = vmul.f32 %v2559, 1.442695
      %v2682 = vpow.pop %v2681
      %v2683 = vmul.f32 %v2560, 1.442695
      %v2684 = vpow.pop %v2683
      %v2685 = vmul.f32 %v2561, 1.442695
      %v2686 = vpow.pop %v2685
      %v2687 = vmul.f32 %v2562, 1.442695
      %v2688 = vpow.pop %v2687
      %v2689 = vmul.f32 %v2563, 1.442695
      %v2690 = vpow.pop %v2689
      %v2691 = vmul.f32 %v2564, 1.442695
      %v2692 = vpow.pop %v2691
      %v2693 = vsub.f32 1.0, %v2566
      %v2694 = vsub.f32 1.0, %v2568
      %v2695 = vsub.f32 1.0, %v2570
      %v2696 = vsub.f32 1.0, %v2572
      %v2697 = vsub.f32 1.0, %v2574
      %v2698 = vsub.f32 1.0, %v2576
      %v2699 = vsub.f32 1.0, %v2578
      %v2700 = vsub.f32 1.0, %v2580
      %v2701 = vsub.f32 1.0, %v2582
      %v2702 = vsub.f32 1.0, %v2584
      %v2703 = vsub.f32 1.0, %v2586
      %v2704 = vsub.f32 1.0, %v2588
      %v2705 = vsub.f32 1.0, %v2590
      %v2706 = vsub.f32 1.0, %v2592
      %v2707 = vsub.f32 1.0, %v2594
      %v2708 = vsub.f32 1.0, %v2596
      %v2709 = vsub.f32 1.0, %v2598
      %v2710 = vsub.f32 1.0, %v2600
      %v2711 = vsub.f32 1.0, %v2602
      %v2712 = vsub.f32 1.0, %v2604
      %v2713 = vsub.f32 1.0, %v2606
      %v2714 = vsub.f32 1.0, %v2608
      %v2715 = vsub.f32 1.0, %v2610
      %v2716 = vsub.f32 1.0, %v2612
      %v2717 = vsub.f32 1.0, %v2614
      %v2718 = vsub.f32 1.0, %v2616
      %v2719 = vsub.f32 1.0, %v2618
      %v2720 = vsub.f32 1.0, %v2620
      %v2721 = vsub.f32 1.0, %v2622
      %v2722 = vsub.f32 1.0, %v2624
      %v2723 = vsub.f32 1.0, %v2626
      %v2724 = vsub.f32 1.0, %v2628
      %v2725 = vsub.f32 1.0, %v2630
      %v2726 = vsub.f32 1.0, %v2632
      %v2727 = vsub.f32 1.0, %v2634
      %v2728 = vsub.f32 1.0, %v2636
      %v2729 = vsub.f32 1.0, %v2638
      %v2730 = vsub.f32 1.0, %v2640
      %v2731 = vsub.f32 1.0, %v2642
      %v2732 = vsub.f32 1.0, %v2644
      %v2733 = vsub.f32 1.0, %v2646
      %v2734 = vsub.f32 1.0, %v2648
      %v2735 = vsub.f32 1.0, %v2650
      %v2736 = vsub.f32 1.0, %v2652
      %v2737 = vsub.f32 1.0, %v2654
      %v2738 = vsub.f32 1.0, %v2656
      %v2739 = vsub.f32 1.0, %v2658
      %v2740 = vsub.f32 1.0, %v2660
      %v2741 = vsub.f32 1.0, %v2662
      %v2742 = vsub.f32 1.0, %v2664
      %v2743 = vsub.f32 1.0, %v2666
      %v2744 = vsub.f32 1.0, %v2668
      %v2745 = vsub.f32 1.0, %v2670
      %v2746 = vsub.f32 1.0, %v2672
      %v2747 = vsub.f32 1.0, %v2674
      %v2748 = vsub.f32 1.0, %v2676
      %v2749 = vsub.f32 1.0, %v2678
      %v2750 = vsub.f32 1.0, %v2680
      %v2751 = vsub.f32 1.0, %v2682
      %v2752 = vsub.f32 1.0, %v2684
      %v2753 = vsub.f32 1.0, %v2686
      %v2754 = vsub.f32 1.0, %v2688
      %v2755 = vsub.f32 1.0, %v2690
      %v2756 = vsub.f32 1.0, %v2692
      %v2757 = vld [vmem:[%s2] sm:$0xff]
      %v2758 = vld [vmem:[%s2 + $0x8] sm:$0xff]
      %v2759 = vld [vmem:[%s2 + $0x10] sm:$0xff]
      %v2760 = vld [vmem:[%s2 + $0x18] sm:$0xff]
      %v2761 = vld [vmem:[%s2 + $0x20] sm:$0xff]
      %v2762 = vld [vmem:[%s2 + $0x28] sm:$0xff]
      %v2763 = vld [vmem:[%s2 + $0x30] sm:$0xff]
      %v2764 = vld [vmem:[%s2 + $0x38] sm:$0xff]
      %v2765 = vld [vmem:[%s2 + $0x40] sm:$0xff]
      %v2766 = vld [vmem:[%s2 + $0x48] sm:$0xff]
      %v2767 = vld [vmem:[%s2 + $0x50] sm:$0xff]
      %v2768 = vld [vmem:[%s2 + $0x58] sm:$0xff]
      %v2769 = vld [vmem:[%s2 + $0x60] sm:$0xff]
      %v2770 = vld [vmem:[%s2 + $0x68] sm:$0xff]
      %v2771 = vld [vmem:[%s2 + $0x70] sm:$0xff]
      %v2772 = vld [vmem:[%s2 + $0x78] sm:$0xff]
      %v2773 = vld [vmem:[%s2 + $0x80] sm:$0xff]
      %v2774 = vld [vmem:[%s2 + $0x88] sm:$0xff]
      %v2775 = vld [vmem:[%s2 + $0x90] sm:$0xff]
      %v2776 = vld [vmem:[%s2 + $0x98] sm:$0xff]
      %v2777 = vld [vmem:[%s2 + $0xa0] sm:$0xff]
      %v2778 = vld [vmem:[%s2 + $0xa8] sm:$0xff]
      %v2779 = vld [vmem:[%s2 + $0xb0] sm:$0xff]
      %v2780 = vld [vmem:[%s2 + $0xb8] sm:$0xff]
      %v2781 = vld [vmem:[%s2 + $0xc0] sm:$0xff]
      %v2782 = vld [vmem:[%s2 + $0xc8] sm:$0xff]
      %v2783 = vld [vmem:[%s2 + $0xd0] sm:$0xff]
      %v2784 = vld [vmem:[%s2 + $0xd8] sm:$0xff]
      %v2785 = vld [vmem:[%s2 + $0xe0] sm:$0xff]
      %v2786 = vld [vmem:[%s2 + $0xe8] sm:$0xff]
      %v2787 = vld [vmem:[%s2 + $0xf0] sm:$0xff]
      %v2788 = vld [vmem:[%s2 + $0xf8] sm:$0xff]
      %v2789 = vld [vmem:[%s2 + $0x100] sm:$0xff]
      %v2790 = vld [vmem:[%s2 + $0x108] sm:$0xff]
      %v2791 = vld [vmem:[%s2 + $0x110] sm:$0xff]
      %v2792 = vld [vmem:[%s2 + $0x118] sm:$0xff]
      %v2793 = vld [vmem:[%s2 + $0x120] sm:$0xff]
      %v2794 = vld [vmem:[%s2 + $0x128] sm:$0xff]
      %v2795 = vld [vmem:[%s2 + $0x130] sm:$0xff]
      %v2796 = vld [vmem:[%s2 + $0x138] sm:$0xff]
      %v2797 = vld [vmem:[%s2 + $0x140] sm:$0xff]
      %v2798 = vld [vmem:[%s2 + $0x148] sm:$0xff]
      %v2799 = vld [vmem:[%s2 + $0x150] sm:$0xff]
      %v2800 = vld [vmem:[%s2 + $0x158] sm:$0xff]
      %v2801 = vld [vmem:[%s2 + $0x160] sm:$0xff]
      %v2802 = vld [vmem:[%s2 + $0x168] sm:$0xff]
      %v2803 = vld [vmem:[%s2 + $0x170] sm:$0xff]
      %v2804 = vld [vmem:[%s2 + $0x178] sm:$0xff]
      %v2805 = vld [vmem:[%s2 + $0x180] sm:$0xff]
      %v2806 = vld [vmem:[%s2 + $0x188] sm:$0xff]
      %v2807 = vld [vmem:[%s2 + $0x190] sm:$0xff]
      %v2808 = vld [vmem:[%s2 + $0x198] sm:$0xff]
      %v2809 = vld [vmem:[%s2 + $0x1a0] sm:$0xff]
      %v2810 = vld [vmem:[%s2 + $0x1a8] sm:$0xff]
      %v2811 = vld [vmem:[%s2 + $0x1b0] sm:$0xff]
      %v2812 = vld [vmem:[%s2 + $0x1b8] sm:$0xff]
      %v2813 = vld [vmem:[%s2 + $0x1c0] sm:$0xff]
      %v2814 = vld [vmem:[%s2 + $0x1c8] sm:$0xff]
      %v2815 = vld [vmem:[%s2 + $0x1d0] sm:$0xff]
      %v2816 = vld [vmem:[%s2 + $0x1d8] sm:$0xff]
      %v2817 = vld [vmem:[%s2 + $0x1e0] sm:$0xff]
      %v2818 = vld [vmem:[%s2 + $0x1e8] sm:$0xff]
      %v2819 = vld [vmem:[%s2 + $0x1f0] sm:$0xff]
      %v2820 = vld [vmem:[%s2 + $0x1f8] sm:$0xff]
      %v2821 = vmul.f32 %v778, %v2757
      %v2822 = vmul.f32 %v790, %v2758
      %v2823 = vmul.f32 %v802, %v2759
      %v2824 = vmul.f32 %v814, %v2760
      %v2825 = vmul.f32 %v826, %v2761
      %v2826 = vmul.f32 %v838, %v2762
      %v2827 = vmul.f32 %v850, %v2763
      %v2828 = vmul.f32 %v862, %v2764
      %v2829 = vmul.f32 %v874, %v2765
      %v2830 = vmul.f32 %v886, %v2766
      %v2831 = vmul.f32 %v898, %v2767
      %v2832 = vmul.f32 %v910, %v2768
      %v2833 = vmul.f32 %v922, %v2769
      %v2834 = vmul.f32 %v934, %v2770
      %v2835 = vmul.f32 %v946, %v2771
      %v2836 = vmul.f32 %v958, %v2772
      %v2837 = vmul.f32 %v970, %v2773
      %v2838 = vmul.f32 %v982, %v2774
      %v2839 = vmul.f32 %v994, %v2775
      %v2840 = vmul.f32 %v1006, %v2776
      %v2841 = vmul.f32 %v1018, %v2777
      %v2842 = vmul.f32 %v1030, %v2778
      %v2843 = vmul.f32 %v1042, %v2779
      %v2844 = vmul.f32 %v1054, %v2780
      %v2845 = vmul.f32 %v1066, %v2781
      %v2846 = vmul.f32 %v1078, %v2782
      %v2847 = vmul.f32 %v1090, %v2783
      %v2848 = vmul.f32 %v1102, %v2784
      %v2849 = vmul.f32 %v1114, %v2785
      %v2850 = vmul.f32 %v1126, %v2786
      %v2851 = vmul.f32 %v1138, %v2787
      %v2852 = vmul.f32 %v1150, %v2788
      %v2853 = vmul.f32 %v1162, %v2789
      %v2854 = vmul.f32 %v1174, %v2790
      %v2855 = vmul.f32 %v1186, %v2791
      %v2856 = vmul.f32 %v1198, %v2792
      %v2857 = vmul.f32 %v1210, %v2793
      %v2858 = vmul.f32 %v1222, %v2794
      %v2859 = vmul.f32 %v1234, %v2795
      %v2860 = vmul.f32 %v1246, %v2796
      %v2861 = vmul.f32 %v1258, %v2797
      %v2862 = vmul.f32 %v1270, %v2798
      %v2863 = vmul.f32 %v1282, %v2799
      %v2864 = vmul.f32 %v1294, %v2800
      %v2865 = vmul.f32 %v1306, %v2801
      %v2866 = vmul.f32 %v1318, %v2802
      %v2867 = vmul.f32 %v1330, %v2803
      %v2868 = vmul.f32 %v1342, %v2804
      %v2869 = vmul.f32 %v1354, %v2805
      %v2870 = vmul.f32 %v1366, %v2806
      %v2871 = vmul.f32 %v1378, %v2807
      %v2872 = vmul.f32 %v1390, %v2808
      %v2873 = vmul.f32 %v1402, %v2809
      %v2874 = vmul.f32 %v1414, %v2810
      %v2875 = vmul.f32 %v1426, %v2811
      %v2876 = vmul.f32 %v1438, %v2812
      %v2877 = vmul.f32 %v1450, %v2813
      %v2878 = vmul.f32 %v1462, %v2814
      %v2879 = vmul.f32 %v1474, %v2815
      %v2880 = vmul.f32 %v1486, %v2816
      %v2881 = vmul.f32 %v1498, %v2817
      %v2882 = vmul.f32 %v1510, %v2818
      %v2883 = vmul.f32 %v1522, %v2819
      %v2884 = vmul.f32 %v1534, %v2820
      %v2885 = vmul.f32 %v2821, %v2693
      %v2886 = vmul.f32 %v2822, %v2694
      %v2887 = vmul.f32 %v2823, %v2695
      %v2888 = vmul.f32 %v2824, %v2696
      %v2889 = vmul.f32 %v2825, %v2697
      %v2890 = vmul.f32 %v2826, %v2698
      %v2891 = vmul.f32 %v2827, %v2699
      %v2892 = vmul.f32 %v2828, %v2700
      %v2893 = vmul.f32 %v2829, %v2701
      %v2894 = vmul.f32 %v2830, %v2702
      %v2895 = vmul.f32 %v2831, %v2703
      %v2896 = vmul.f32 %v2832, %v2704
      %v2897 = vmul.f32 %v2833, %v2705
      %v2898 = vmul.f32 %v2834, %v2706
      %v2899 = vmul.f32 %v2835, %v2707
      %v2900 = vmul.f32 %v2836, %v2708
      %v2901 = vmul.f32 %v2837, %v2709
      %v2902 = vmul.f32 %v2838, %v2710
      %v2903 = vmul.f32 %v2839, %v2711
      %v2904 = vmul.f32 %v2840, %v2712
      %v2905 = vmul.f32 %v2841, %v2713
      %v2906 = vmul.f32 %v2842, %v2714
      %v2907 = vmul.f32 %v2843, %v2715
      %v2908 = vmul.f32 %v2844, %v2716
      %v2909 = vmul.f32 %v2845, %v2717
      %v2910 = vmul.f32 %v2846, %v2718
      %v2911 = vmul.f32 %v2847, %v2719
      %v2912 = vmul.f32 %v2848, %v2720
      %v2913 = vmul.f32 %v2849, %v2721
      %v2914 = vmul.f32 %v2850, %v2722
      %v2915 = vmul.f32 %v2851, %v2723
      %v2916 = vmul.f32 %v2852, %v2724
      %v2917 = vmul.f32 %v2853, %v2725
      %v2918 = vmul.f32 %v2854, %v2726
      %v2919 = vmul.f32 %v2855, %v2727
      %v2920 = vmul.f32 %v2856, %v2728
      %v2921 = vmul.f32 %v2857, %v2729
      %v2922 = vmul.f32 %v2858, %v2730
      %v2923 = vmul.f32 %v2859, %v2731
      %v2924 = vmul.f32 %v2860, %v2732
      %v2925 = vmul.f32 %v2861, %v2733
      %v2926 = vmul.f32 %v2862, %v2734
      %v2927 = vmul.f32 %v2863, %v2735
      %v2928 = vmul.f32 %v2864, %v2736
      %v2929 = vmul.f32 %v2865, %v2737
      %v2930 = vmul.f32 %v2866, %v2738
      %v2931 = vmul.f32 %v2867, %v2739
      %v2932 = vmul.f32 %v2868, %v2740
      %v2933 = vmul.f32 %v2869, %v2741
      %v2934 = vmul.f32 %v2870, %v2742
      %v2935 = vmul.f32 %v2871, %v2743
      %v2936 = vmul.f32 %v2872, %v2744
      %v2937 = vmul.f32 %v2873, %v2745
      %v2938 = vmul.f32 %v2874, %v2746
      %v2939 = vmul.f32 %v2875, %v2747
      %v2940 = vmul.f32 %v2876, %v2748
      %v2941 = vmul.f32 %v2877, %v2749
      %v2942 = vmul.f32 %v2878, %v2750
      %v2943 = vmul.f32 %v2879, %v2751
      %v2944 = vmul.f32 %v2880, %v2752
      %v2945 = vmul.f32 %v2881, %v2753
      %v2946 = vmul.f32 %v2882, %v2754
      %v2947 = vmul.f32 %v2883, %v2755
      %v2948 = vmul.f32 %v2884, %v2756
      %2949 = vst [vmem:[%s190] sm:$0xff] %v2885
      %2950 = vst [vmem:[%s190 + $0x8] sm:$0xff] %v2886
      %2951 = vst [vmem:[%s190 + $0x10] sm:$0xff] %v2887
      %2952 = vst [vmem:[%s190 + $0x18] sm:$0xff] %v2888
      %2953 = vst [vmem:[%s190 + $0x20] sm:$0xff] %v2889
      %2954 = vst [vmem:[%s190 + $0x28] sm:$0xff] %v2890
      %2955 = vst [vmem:[%s190 + $0x30] sm:$0xff] %v2891
      %2956 = vst [vmem:[%s190 + $0x38] sm:$0xff] %v2892
      %2957 = vst [vmem:[%s190 + $0x40] sm:$0xff] %v2893
      %2958 = vst [vmem:[%s190 + $0x48] sm:$0xff] %v2894
      %2959 = vst [vmem:[%s190 + $0x50] sm:$0xff] %v2895
      %2960 = vst [vmem:[%s190 + $0x58] sm:$0xff] %v2896
      %2961 = vst [vmem:[%s190 + $0x60] sm:$0xff] %v2897
      %2962 = vst [vmem:[%s190 + $0x68] sm:$0xff] %v2898
      %2963 = vst [vmem:[%s190 + $0x70] sm:$0xff] %v2899
      %2964 = vst [vmem:[%s190 + $0x78] sm:$0xff] %v2900
      %2965 = vst [vmem:[%s190 + $0x80] sm:$0xff] %v2901
      %2966 = vst [vmem:[%s190 + $0x88] sm:$0xff] %v2902
      %2967 = vst [vmem:[%s190 + $0x90] sm:$0xff] %v2903
      %2968 = vst [vmem:[%s190 + $0x98] sm:$0xff] %v2904
      %2969 = vst [vmem:[%s190 + $0xa0] sm:$0xff] %v2905
      %2970 = vst [vmem:[%s190 + $0xa8] sm:$0xff] %v2906
      %2971 = vst [vmem:[%s190 + $0xb0] sm:$0xff] %v2907
      %2972 = vst [vmem:[%s190 + $0xb8] sm:$0xff] %v2908
      %2973 = vst [vmem:[%s190 + $0xc0] sm:$0xff] %v2909
      %2974 = vst [vmem:[%s190 + $0xc8] sm:$0xff] %v2910
      %2975 = vst [vmem:[%s190 + $0xd0] sm:$0xff] %v2911
      %2976 = vst [vmem:[%s190 + $0xd8] sm:$0xff] %v2912
      %2977 = vst [vmem:[%s190 + $0xe0] sm:$0xff] %v2913
      %2978 = vst [vmem:[%s190 + $0xe8] sm:$0xff] %v2914
      %2979 = vst [vmem:[%s190 + $0xf0] sm:$0xff] %v2915
      %2980 = vst [vmem:[%s190 + $0xf8] sm:$0xff] %v2916
      %2981 = vst [vmem:[%s190 + $0x100] sm:$0xff] %v2917
      %2982 = vst [vmem:[%s190 + $0x108] sm:$0xff] %v2918
      %2983 = vst [vmem:[%s190 + $0x110] sm:$0xff] %v2919
      %2984 = vst [vmem:[%s190 + $0x118] sm:$0xff] %v2920
      %2985 = vst [vmem:[%s190 + $0x120] sm:$0xff] %v2921
      %2986 = vst [vmem:[%s190 + $0x128] sm:$0xff] %v2922
      %2987 = vst [vmem:[%s190 + $0x130] sm:$0xff] %v2923
      %2988 = vst [vmem:[%s190 + $0x138] sm:$0xff] %v2924
      %2989 = vst [vmem:[%s190 + $0x140] sm:$0xff] %v2925
      %2990 = vst [vmem:[%s190 + $0x148] sm:$0xff] %v2926
      %2991 = vst [vmem:[%s190 + $0x150] sm:$0xff] %v2927
      %2992 = vst [vmem:[%s190 + $0x158] sm:$0xff] %v2928
      %2993 = vst [vmem:[%s190 + $0x160] sm:$0xff] %v2929
      %2994 = vst [vmem:[%s190 + $0x168] sm:$0xff] %v2930
      %2995 = vst [vmem:[%s190 + $0x170] sm:$0xff] %v2931
      %2996 = vst [vmem:[%s190 + $0x178] sm:$0xff] %v2932
      %2997 = vst [vmem:[%s190 + $0x180] sm:$0xff] %v2933
      %2998 = vst [vmem:[%s190 + $0x188] sm:$0xff] %v2934
      %2999 = vst [vmem:[%s190 + $0x190] sm:$0xff] %v2935
      %3000 = vst [vmem:[%s190 + $0x198] sm:$0xff] %v2936
      %3001 = vst [vmem:[%s190 + $0x1a0] sm:$0xff] %v2937
      %3002 = vst [vmem:[%s190 + $0x1a8] sm:$0xff] %v2938
      %3003 = vst [vmem:[%s190 + $0x1b0] sm:$0xff] %v2939
      %3004 = vst [vmem:[%s190 + $0x1b8] sm:$0xff] %v2940
      %3005 = vst [vmem:[%s190 + $0x1c0] sm:$0xff] %v2941
      %3006 = vst [vmem:[%s190 + $0x1c8] sm:$0xff] %v2942
      %3007 = vst [vmem:[%s190 + $0x1d0] sm:$0xff] %v2943
      %3008 = vst [vmem:[%s190 + $0x1d8] sm:$0xff] %v2944
      %3009 = vst [vmem:[%s190 + $0x1e0] sm:$0xff] %v2945
      %3010 = vst [vmem:[%s190 + $0x1e8] sm:$0xff] %v2946
      %3011 = vst [vmem:[%s190 + $0x1f0] sm:$0xff] %v2947
      %3012 = vst [vmem:[%s190 + $0x1f8] sm:$0xff] %v2948
      %p3013 = scmp.lt.s32.totalorder %s14, 1
      %s3014 = scalar_select %p3013, %s14, 1
      %s3015 = smul.addr %s3014, 64
      %s3016 = smul.addr %s3015, 8
      %s3017 = scalar_lea.vmem %s3, %s3016
      // Predicated region
      $region33: #{a_call__.4} parent=31 // pred_check
        %p3018 = pneg %p105
      $region34: #{a_call__.4} parent=31 // pred_check_branch
        %3020 = sbr.rel (%p3018) target = $region36
      $region35: #{a_call__.4} parent=31 // pred_region
        _
      $region36: #{a_call__.4} parent=31 // pred_fallthru
        _
    $region32: #{a_call__.4} parent=5 // pred_fallthru
      _
    %p3021 = scmp.le.s32.totalorder 2, %s9
    // Predicated region
    $region37: #{a_call__.4} parent=5 // pred_check
      %p3022 = pneg %p3021
    $region38: #{a_call__.4} parent=5 // pred_check_branch
      %3024 = sbr.rel (%p3022) target = $region40
    $region39: #{a_call__.4} parent=5 // pred_region
      %s3025 = ssub.s32 %s9, 2
      // Predicated region
      $region41: #{a_call__.4} parent=39 // pred_check
        %p3026 = pneg %p111
      $region42: #{a_call__.4} parent=39 // pred_check_branch
        %3028 = sbr.rel (%p3026) target = $region44
      $region43: #{a_call__.4} parent=39 // pred_region
        %p3029 = scmp.lt.s32.totalorder %s15, 1
        %s3030 = scalar_select %p3029, %s15, 1
        %s3031 = smul.addr %s3030, 64
        %s3032 = smul.addr %s3031, 8
        %s3033 = scalar_lea.vmem %s3, %s3032
      $region44: #{a_call__.4} parent=39 // pred_fallthru
        _
    $region40: #{a_call__.4} parent=5 // pred_fallthru
      _
  $region6: #{a_call__.4} parent=0 // loop_footer
    %s13 = sadd.s32 1, %s9
  $region7: #{a_call__.4} parent=0 // loop_footer_branch
    %8 = sbr.rel target = $region3
  $region8: #{a_call__.4} parent=0 // loop_exit
    _

// kernel: a_call__.5
$region0: #{a_call__.5}
  #allocation0 [shape = 'u32[]', space=smem, size = 0x4, offset = 0x4, fixed_abs, tag = 'smem constant byte address 0x4 - core index']
  #allocation1 [shape = 'u32[72,128]{1,0:T(1,128)}', space=vmem, size = 0x9000, scoped, tag = 'internal scratch']
  %s0 = inlined_call_operand.vmem [shape: f32[2,16,16], index: 0, kind: input, shape index: {}]
  %s1 = inlined_call_operand.vmem [shape: f32[2,16,16], index: 1, kind: input, shape index: {}]
  %s2 = inlined_call_operand.vmem [shape: f32[2,18,18], index: 2, kind: input, shape index: {}]
  %s3 = inlined_call_operand.vmem [shape: f32[2,18,18], index: 3, kind: input, shape index: {}]
  %s4 = inlined_call_operand.vmem [shape: f32[2,2,16,16], index: 4, kind: input, shape index: {}]
  %s5 = inlined_call_operand.vmem [shape: f32[2,2,16,16], index: 5, kind: input, shape index: {}]
  %s6 = inlined_call_operand.vmem [shape: f32[2,8,128], index: 6, kind: output, shape index: {}]
  %s7 = sld [smem:[#allocation0]]
  $region57: #{a_call__.5} parent=0
    _
  %s9 = ssub.s32 1, %s7
  %s10 = scalar_select 0, %s9, %s7
  loop: start=0, step=1, limit=4
  $region2: #{a_call__.5} parent=0 // loop_pre_header
    _
  $region3: #{a_call__.5} parent=0 // loop_header
    %s12 = sphi 0, %s16
    %p13 = scmp.ge.s32.totalorder %s12, 4
    %s22 = sphi 0, %s24
    %s25 = sphi 0, %s22
    %s26 = sphi 0, %s25
    %s42 = sphi 0, %s26
    %s48 = sphi 0, %s50
    %s51 = sphi 0, %s48
    %s52 = sphi 0, %s51
    %s68 = sphi 0, %s52
    %s74 = sphi 0, %s76
    %s77 = sphi 0, %s74
    %s78 = sphi 0, %s77
    %s94 = sphi 0, %s78
    %s100 = sphi 0, %s102
    %s103 = sphi 0, %s100
    %s104 = sphi 0, %s103
    %s120 = sphi 0, %s104
    %s126 = sphi 0, %s128
    %s129 = sphi 0, %s126
    %s130 = sphi 0, %s129
    %s146 = sphi 0, %s130
    %s152 = sphi 0, %s154
    %s155 = sphi 0, %s152
    %s156 = sphi 0, %s155
    %s172 = sphi 0, %s156
    %s178 = sphi 0, %s180
    %s181 = sphi 0, %s178
    %s182 = sphi 0, %s181
    %s198 = sphi 0, %s182
  $region4: #{a_call__.5} parent=0 // loop_header_branch
    %15 = sbr.rel (%p13) target = $region8
  $region5: #{a_call__.5} parent=0 // loop_body
    %s17 = ssub.s32 %s12, 1
    %s18 = ssub.s32 %s12, 2
    %s19 = sadd.s32 %s12, 1
    %s20 = ssub.s32 %s12, %s19
    %p21 = scmp.eq.s32.totalorder %s20, 0
    %s23 = sadd.s32 %s22, 1
    %s24 = scalar_select %p21, %s22, %s23
    %p27 = pneg %p21
    %p28 = scmp.eq.s32.totalorder %s12, 1
    %p29 = por %p27, %p28
    %p30 = scmp.ne.s32.totalorder %s22, %s25
    %p31 = scmp.eq.s32.totalorder %s12, 0
    %p32 = por %p30, %p31
    %p33 = scmp.ne.s32.totalorder %s22, %s25
    %p34 = scmp.eq.s32.totalorder %s17, 1
    %p35 = por %p33, %p34
    %p36 = scmp.ne.s32.totalorder %s25, %s26
    %p37 = scmp.eq.s32.totalorder %s17, 0
    %p38 = por %p36, %p37
    %p39 = scmp.ne.s32.totalorder %s25, %s26
    %p40 = scmp.eq.s32.totalorder %s18, 1
    %p41 = por %p39, %p40
    %p43 = scmp.ne.s32.totalorder %s26, %s42
    %p44 = scmp.eq.s32.totalorder %s18, 0
    %p45 = por %p43, %p44
    %s46 = ssub.s32 %s12, %s19
    %p47 = scmp.eq.s32.totalorder %s46, 0
    %s49 = sadd.s32 %s48, 1
    %s50 = scalar_select %p47, %s48, %s49
    %p53 = pneg %p47
    %p54 = scmp.eq.s32.totalorder %s12, 1
    %p55 = por %p53, %p54
    %p56 = scmp.ne.s32.totalorder %s48, %s51
    %p57 = scmp.eq.s32.totalorder %s12, 0
    %p58 = por %p56, %p57
    %p59 = scmp.ne.s32.totalorder %s48, %s51
    %p60 = scmp.eq.s32.totalorder %s17, 1
    %p61 = por %p59, %p60
    %p62 = scmp.ne.s32.totalorder %s51, %s52
    %p63 = scmp.eq.s32.totalorder %s17, 0
    %p64 = por %p62, %p63
    %p65 = scmp.ne.s32.totalorder %s51, %s52
    %p66 = scmp.eq.s32.totalorder %s18, 1
    %p67 = por %p65, %p66
    %p69 = scmp.ne.s32.totalorder %s52, %s68
    %p70 = scmp.eq.s32.totalorder %s18, 0
    %p71 = por %p69, %p70
    %s72 = ssub.s32 %s12, %s19
    %p73 = scmp.eq.s32.totalorder %s72, 0
    %s75 = sadd.s32 %s74, 1
    %s76 = scalar_select %p73, %s74, %s75
    %p79 = pneg %p73
    %p80 = scmp.eq.s32.totalorder %s12, 1
    %p81 = por %p79, %p80
    %p82 = scmp.ne.s32.totalorder %s74, %s77
    %p83 = scmp.eq.s32.totalorder %s12, 0
    %p84 = por %p82, %p83
    %p85 = scmp.ne.s32.totalorder %s74, %s77
    %p86 = scmp.eq.s32.totalorder %s17, 1
    %p87 = por %p85, %p86
    %p88 = scmp.ne.s32.totalorder %s77, %s78
    %p89 = scmp.eq.s32.totalorder %s17, 0
    %p90 = por %p88, %p89
    %p91 = scmp.ne.s32.totalorder %s77, %s78
    %p92 = scmp.eq.s32.totalorder %s18, 1
    %p93 = por %p91, %p92
    %p95 = scmp.ne.s32.totalorder %s78, %s94
    %p96 = scmp.eq.s32.totalorder %s18, 0
    %p97 = por %p95, %p96
    %s98 = ssub.s32 %s12, %s19
    %p99 = scmp.eq.s32.totalorder %s98, 0
    %s101 = sadd.s32 %s100, 1
    %s102 = scalar_select %p99, %s100, %s101
    %p105 = pneg %p99
    %p106 = scmp.eq.s32.totalorder %s12, 1
    %p107 = por %p105, %p106
    %p108 = scmp.ne.s32.totalorder %s100, %s103
    %p109 = scmp.eq.s32.totalorder %s12, 0
    %p110 = por %p108, %p109
    %p111 = scmp.ne.s32.totalorder %s100, %s103
    %p112 = scmp.eq.s32.totalorder %s17, 1
    %p113 = por %p111, %p112
    %p114 = scmp.ne.s32.totalorder %s103, %s104
    %p115 = scmp.eq.s32.totalorder %s17, 0
    %p116 = por %p114, %p115
    %p117 = scmp.ne.s32.totalorder %s103, %s104
    %p118 = scmp.eq.s32.totalorder %s18, 1
    %p119 = por %p117, %p118
    %p121 = scmp.ne.s32.totalorder %s104, %s120
    %p122 = scmp.eq.s32.totalorder %s18, 0
    %p123 = por %p121, %p122
    %s124 = ssub.s32 %s12, %s19
    %p125 = scmp.eq.s32.totalorder %s124, 0
    %s127 = sadd.s32 %s126, 1
    %s128 = scalar_select %p125, %s126, %s127
    %p131 = pneg %p125
    %p132 = scmp.eq.s32.totalorder %s12, 1
    %p133 = por %p131, %p132
    %p134 = scmp.ne.s32.totalorder %s126, %s129
    %p135 = scmp.eq.s32.totalorder %s12, 0
    %p136 = por %p134, %p135
    %p137 = scmp.ne.s32.totalorder %s126, %s129
    %p138 = scmp.eq.s32.totalorder %s17, 1
    %p139 = por %p137, %p138
    %p140 = scmp.ne.s32.totalorder %s129, %s130
    %p141 = scmp.eq.s32.totalorder %s17, 0
    %p142 = por %p140, %p141
    %p143 = scmp.ne.s32.totalorder %s129, %s130
    %p144 = scmp.eq.s32.totalorder %s18, 1
    %p145 = por %p143, %p144
    %p147 = scmp.ne.s32.totalorder %s130, %s146
    %p148 = scmp.eq.s32.totalorder %s18, 0
    %p149 = por %p147, %p148
    %s150 = ssub.s32 %s12, %s19
    %p151 = scmp.eq.s32.totalorder %s150, 0
    %s153 = sadd.s32 %s152, 1
    %s154 = scalar_select %p151, %s152, %s153
    %p157 = pneg %p151
    %p158 = scmp.eq.s32.totalorder %s12, 1
    %p159 = por %p157, %p158
    %p160 = scmp.ne.s32.totalorder %s152, %s155
    %p161 = scmp.eq.s32.totalorder %s12, 0
    %p162 = por %p160, %p161
    %p163 = scmp.ne.s32.totalorder %s152, %s155
    %p164 = scmp.eq.s32.totalorder %s17, 1
    %p165 = por %p163, %p164
    %p166 = scmp.ne.s32.totalorder %s155, %s156
    %p167 = scmp.eq.s32.totalorder %s17, 0
    %p168 = por %p166, %p167
    %p169 = scmp.ne.s32.totalorder %s155, %s156
    %p170 = scmp.eq.s32.totalorder %s18, 1
    %p171 = por %p169, %p170
    %p173 = scmp.ne.s32.totalorder %s156, %s172
    %p174 = scmp.eq.s32.totalorder %s18, 0
    %p175 = por %p173, %p174
    %s176 = ssub.s32 %s12, %s19
    %p177 = scmp.eq.s32.totalorder %s176, 0
    %s179 = sadd.s32 %s178, 1
    %s180 = scalar_select %p177, %s178, %s179
    %p183 = pneg %p177
    %p184 = scmp.eq.s32.totalorder %s12, 1
    %p185 = por %p183, %p184
    %p186 = scmp.ne.s32.totalorder %s178, %s181
    %p187 = scmp.eq.s32.totalorder %s12, 0
    %p188 = por %p186, %p187
    %p189 = scmp.ne.s32.totalorder %s178, %s181
    %p190 = scmp.eq.s32.totalorder %s17, 1
    %p191 = por %p189, %p190
    %p192 = scmp.ne.s32.totalorder %s181, %s182
    %p193 = scmp.eq.s32.totalorder %s17, 0
    %p194 = por %p192, %p193
    %p195 = scmp.ne.s32.totalorder %s181, %s182
    %p196 = scmp.eq.s32.totalorder %s18, 1
    %p197 = por %p195, %p196
    %p199 = scmp.ne.s32.totalorder %s182, %s198
    %p200 = scmp.eq.s32.totalorder %s18, 0
    %p201 = por %p199, %p200
    %p202 = scmp.le.s32.totalorder 1, %s12
    %p203 = scmp.lt.s32.totalorder %s12, 3
    %p204 = pnand %p202, %p203
    %p205 = pneg %p204
    // Predicated region
    $region9: #{a_call__.5} parent=5 // pred_check
      _
    $region10: #{a_call__.5} parent=5 // pred_check_branch
      %207 = sbr.rel (%p204) target = $region12
    $region11: #{a_call__.5} parent=5 // pred_region
      %s208 = ssub.s32 %s12, 1
    $region12: #{a_call__.5} parent=5 // pred_fallthru
      _
    %p209 = scmp.lt.s32.totalorder %s12, 2
    // Predicated region
    $region13: #{a_call__.5} parent=5 // pred_check
      %p210 = pneg %p209
    $region14: #{a_call__.5} parent=5 // pred_check_branch
      %212 = sbr.rel (%p210) target = $region16
    $region15: #{a_call__.5} parent=5 // pred_region
      // Predicated region
      $region17: #{a_call__.5} parent=15 // pred_check
        %p213 = pneg %p32
      $region18: #{a_call__.5} parent=15 // pred_check_branch
        %215 = sbr.rel (%p213) target = $region20
      $region19: #{a_call__.5} parent=15 // pred_region
        %p216 = scmp.lt.s32.totalorder %s12, 1
        %s217 = scalar_select %p216, %s12, 1
        %s218 = smul.addr %s217, 2
        %s219 = smul.addr %s218, 8
        %s220 = scalar_lea.vmem %s0, %s219
      $region20: #{a_call__.5} parent=15 // pred_fallthru
        _
      // Predicated region
      $region21: #{a_call__.5} parent=15 // pred_check
        %p221 = pneg %p58
      $region22: #{a_call__.5} parent=15 // pred_check_branch
        %223 = sbr.rel (%p221) target = $region24
      $region23: #{a_call__.5} parent=15 // pred_region
        %p224 = scmp.lt.s32.totalorder %s12, 1
        %s225 = scalar_select %p224, %s12, 1
        %s226 = smul.addr %s225, 2
        %s227 = smul.addr %s226, 8
        %s228 = scalar_lea.vmem %s1, %s227
      $region24: #{a_call__.5} parent=15 // pred_fallthru
        _
      // Predicated region
      $region25: #{a_call__.5} parent=15 // pred_check
        %p229 = pneg %p84
      $region26: #{a_call__.5} parent=15 // pred_check_branch
        %231 = sbr.rel (%p229) target = $region28
      $region27: #{a_call__.5} parent=15 // pred_region
        %p232 = scmp.lt.s32.totalorder %s12, 1
        %s233 = scalar_select %p232, %s12, 1
        %s234 = smul.addr %s233, 3
        %s235 = smul.addr %s234, 8
        %s236 = scalar_lea.vmem %s2, %s235
      $region28: #{a_call__.5} parent=15 // pred_fallthru
        _
      // Predicated region
      $region29: #{a_call__.5} parent=15 // pred_check
        %p237 = pneg %p110
      $region30: #{a_call__.5} parent=15 // pred_check_branch
        %239 = sbr.rel (%p237) target = $region32
      $region31: #{a_call__.5} parent=15 // pred_region
        %p240 = scmp.lt.s32.totalorder %s12, 1
        %s241 = scalar_select %p240, %s12, 1
        %s242 = smul.addr %s241, 3
        %s243 = smul.addr %s242, 8
        %s244 = scalar_lea.vmem %s3, %s243
      $region32: #{a_call__.5} parent=15 // pred_fallthru
        _
      // Predicated region
      $region33: #{a_call__.5} parent=15 // pred_check
        %p245 = pneg %p136
      $region34: #{a_call__.5} parent=15 // pred_check_branch
        %247 = sbr.rel (%p245) target = $region36
      $region35: #{a_call__.5} parent=15 // pred_region
        %p248 = scmp.lt.s32.totalorder %s12, 1
        %s249 = scalar_select %p248, %s12, 1
        %s250 = smul.addr %s249, 4
        %s251 = smul.addr %s250, 8
        %s252 = scalar_lea.vmem %s4, %s251
      $region36: #{a_call__.5} parent=15 // pred_fallthru
        _
      // Predicated region
      $region37: #{a_call__.5} parent=15 // pred_check
        %p253 = pneg %p162
      $region38: #{a_call__.5} parent=15 // pred_check_branch
        %255 = sbr.rel (%p253) target = $region40
      $region39: #{a_call__.5} parent=15 // pred_region
        %p256 = scmp.lt.s32.totalorder %s12, 1
        %s257 = scalar_select %p256, %s12, 1
        %s258 = smul.addr %s257, 4
        %s259 = smul.addr %s258, 8
        %s260 = scalar_lea.vmem %s5, %s259
      $region40: #{a_call__.5} parent=15 // pred_fallthru
        _
    $region16: #{a_call__.5} parent=5 // pred_fallthru
      _
    %p261 = scmp.le.s32.totalorder 1, %s12
    %p262 = scmp.lt.s32.totalorder %s12, 3
    %p263 = pnand %p261, %p262
    %p264 = pneg %p263
    // Predicated region
    $region41: #{a_call__.5} parent=5 // pred_check
      _
    $region42: #{a_call__.5} parent=5 // pred_check_branch
      %266 = sbr.rel (%p263) target = $region44
    $region43: #{a_call__.5} parent=5 // pred_region
      %s267 = ssub.s32 %s12, 1
      %p268 = scmp.lt.s32.totalorder %s17, 1
      %s269 = scalar_select %p268, %s17, 1
      %s270 = smul.addr %s269, 2
      %s271 = smul.addr %s270, 8
      %s272 = scalar_lea.vmem %s0, %s271
      %p273 = pneg %p38
      %p274 = pneg %p35
      %p275 = scmp.lt.s32.totalorder %s17, 1
      %s276 = scalar_select %p275, %s17, 1
      %s277 = smul.addr %s276, 2
      %s278 = smul.addr %s277, 8
      %s279 = scalar_lea.vmem %s1, %s278
      %p280 = pneg %p64
      %p281 = pneg %p61
      %p282 = scmp.lt.s32.totalorder %s17, 1
      %s283 = scalar_select %p282, %s17, 1
      %s284 = smul.addr %s283, 3
      %s285 = smul.addr %s284, 8
      %s286 = scalar_lea.vmem %s2, %s285
      %p287 = pneg %p90
      %p288 = pneg %p87
      %p289 = scmp.lt.s32.totalorder %s17, 1
      %s290 = scalar_select %p289, %s17, 1
      %s291 = smul.addr %s290, 3
      %s292 = smul.addr %s291, 8
      %s293 = scalar_lea.vmem %s3, %s292
      %p294 = pneg %p116
      %p295 = pneg %p113
      %p296 = scmp.lt.s32.totalorder %s17, 1
      %s297 = scalar_select %p296, %s17, 1
      %s298 = smul.addr %s297, 4
      %s299 = smul.addr %s298, 8
      %s300 = scalar_lea.vmem %s4, %s299
      %p301 = pneg %p142
      %p302 = pneg %p139
      %p303 = scmp.lt.s32.totalorder %s17, 1
      %s304 = scalar_select %p303, %s17, 1
      %s305 = smul.addr %s304, 4
      %s306 = smul.addr %s305, 8
      %s307 = scalar_lea.vmem %s5, %s306
      %p308 = pneg %p168
      %p309 = pneg %p165
      %p310 = pneg %p194
      %p311 = pneg %p191
      %p312 = scmp.lt.s32.totalorder %s17, 1
      %s313 = scalar_select %p312, %s17, 1
      %s314 = smul.addr %s313, 8
      %s315 = scalar_lea.vmem %s6, %s314
      %p316 = scmp.lt.s32.totalorder %s17, 1
      %s317 = scalar_select %p316, %s17, 1
      %s318 = smul.addr %s317, 2
      %s319 = smul.addr %s318, 8
      %s320 = scalar_lea.vmem %s0, %s319
      %p321 = scmp.lt.s32.totalorder %s17, 1
      %s322 = scalar_select %p321, %s17, 1
      %s323 = smul.addr %s322, 2
      %s324 = smul.addr %s323, 8
      %s325 = scalar_lea.vmem %s1, %s324
      %p326 = scmp.lt.s32.totalorder %s17, 1
      %s327 = scalar_select %p326, %s17, 1
      %s328 = smul.addr %s327, 3
      %s329 = smul.addr %s328, 8
      %s330 = scalar_lea.vmem %s2, %s329
      %p331 = scmp.lt.s32.totalorder %s17, 1
      %s332 = scalar_select %p331, %s17, 1
      %s333 = smul.addr %s332, 3
      %s334 = smul.addr %s333, 8
      %s335 = scalar_lea.vmem %s3, %s334
      %p336 = scmp.lt.s32.totalorder %s17, 1
      %s337 = scalar_select %p336, %s17, 1
      %s338 = smul.addr %s337, 4
      %s339 = smul.addr %s338, 8
      %s340 = scalar_lea.vmem %s4, %s339
      %p341 = scmp.lt.s32.totalorder %s17, 1
      %s342 = scalar_select %p341, %s17, 1
      %s343 = smul.addr %s342, 4
      %s344 = smul.addr %s343, 8
      %s345 = scalar_lea.vmem %s5, %s344
      %p346 = scmp.lt.s32.totalorder %s17, 1
      %s347 = scalar_select %p346, %s17, 1
      %s348 = smul.addr %s347, 8
      %s349 = scalar_lea.vmem %s6, %s348
      %v350 = vld [vmem:[%s330] sm:$0xff]
      %v351 = vld [vmem:[%s330 + $0x8] sm:$0xff]
      %v352 = vld [vmem:[%s330 + $0x10] sm:$0x3]
      %vm356 = vcmask 1045504
      %v357 = vrot.slane %v350, 2
      %v358 = vrot.slane %v351, 2
      %v359 = vsel %vm356, %v357, %v358
      %v360 = vrot.slane %v352, 2
      %v361 = vsel %vm356, %v358, %v360
      %v364 = vadd.f32 %v350, %v359
      %v365 = vadd.f32 %v351, %v361
      %v366 = vmul.f32 %v364, 0.1875
      %v367 = vmul.f32 %v365, 0.1875
      %v368 = vmul.f32 %v350, 0.625
      %v369 = vmul.f32 %v351, 0.625
      %v370 = vmul.f32 %v352, 0.625
      %vm374 = vcmask 1046528
      %v375 = vrot.slane %v368, 1
      %v376 = vrot.slane %v369, 1
      %v377 = vsel %vm374, %v375, %v376
      %v378 = vrot.slane %v370, 1
      %v379 = vsel %vm374, %v376, %v378
      %v382 = vadd.f32 %v366, %v377
      %v383 = vadd.f32 %v367, %v379
      %386 = vrot.lane.b32.xlu0 %v382, 2
      %v387 = vpop.permute.xlu0 %386
      %388 = vrot.lane.b32.xlu0 %v383, 2
      %v389 = vpop.permute.xlu0 %388
      %v392 = vsub.f32 %v382, %v387
      %v393 = vsub.f32 %v383, %v389
      %394 = vrot.lane.b32.xlu0 %v350, 126
      %v395 = vpop.permute.xlu0 %394
      %396 = vrot.lane.b32.xlu0 %v351, 126
      %v397 = vpop.permute.xlu0 %396
      %398 = vrot.lane.b32.xlu0 %v352, 126
      %v399 = vpop.permute.xlu0 %398
      %v403 = vadd.f32 %v350, %v395
      %v404 = vadd.f32 %v351, %v397
      %v405 = vadd.f32 %v352, %v399
      %v406 = vmul.f32 %v403, 0.1875
      %v407 = vmul.f32 %v404, 0.1875
      %v408 = vmul.f32 %v405, 0.1875
      %409 = vrot.lane.b32.xlu0 %v368, 127
      %v410 = vpop.permute.xlu0 %409
      %411 = vrot.lane.b32.xlu0 %v369, 127
      %v412 = vpop.permute.xlu0 %411
      %413 = vrot.lane.b32.xlu0 %v370, 127
      %v414 = vpop.permute.xlu0 %413
      %v418 = vadd.f32 %v406, %v410
      %v419 = vadd.f32 %v407, %v412
      %v420 = vadd.f32 %v408, %v414
      %vm423 = vcmask 1041408
      %v424 = vrot.slane %v418, 6
      %v425 = vrot.slane %v419, 6
      %v426 = vsel %vm423, %v424, %v425
      %v430 = vsub.f32 %v418, %v424
      %v431 = vsub.f32 %v419, %v426
      %v432 = vsub.f32 %v420, %v425
      %v433 = vmul.f32 %v392, %v392
      %v434 = vmul.f32 %v393, %v393
      %v435 = vmul.f32 %v430, %v430
      %v436 = vmul.f32 %v431, %v431
      %v437 = vmul.f32 %v432, %v432
      %v441 = vrot.slane %v435, 2
      %v442 = vrot.slane %v436, 2
      %v443 = vsel %vm356, %v441, %v442
      %v444 = vrot.slane %v437, 2
      %v445 = vsel %vm356, %v442, %v444
      %446 = vrot.lane.b32.xlu0 %v443, 2
      %v447 = vpop.permute.xlu0 %446
      %448 = vrot.lane.b32.xlu0 %v445, 2
      %v449 = vpop.permute.xlu0 %448
      %v452 = vadd.f32 %v433, %v447
      %v453 = vadd.f32 %v434, %v449
      %v454 = vadd.f32 %v452, 1.1920929e-07
      %v455 = vadd.f32 %v453, 1.1920929e-07
      %v456 = vrsqrt.pop %v454
      %v457 = vmul.f32 %v456, %v454
      %v458 = vmul.f32 %v457, %v456
      %v459 = vmul.f32 0.5, %v458
      %v460 = vsub.f32 1.5, %v459
      %v461 = vmul.f32 %v456, %v460
      %v462 = vmul.f32 %v454, %v461
      %vm463 = vcmp.eq.f32.partialorder %v454, inf
      %v464 = vsel %vm463, %v454, %v462
      %vm465 = vcmp.eq.f32.partialorder %v454, 0.0
      %v466 = vand.u32 %v454, 2147483648
      %v467 = vsel %vm465, %v466, %v464
      %v468 = vrsqrt.pop %v455
      %v469 = vmul.f32 %v468, %v455
      %v470 = vmul.f32 %v469, %v468
      %v471 = vmul.f32 0.5, %v470
      %v472 = vsub.f32 1.5, %v471
      %v473 = vmul.f32 %v468, %v472
      %v474 = vmul.f32 %v455, %v473
      %vm475 = vcmp.eq.f32.partialorder %v455, inf
      %v476 = vsel %vm475, %v455, %v474
      %vm477 = vcmp.eq.f32.partialorder %v455, 0.0
      %v478 = vand.u32 %v455, 2147483648
      %v479 = vsel %vm477, %v478, %v476
      %v480 = vld [vmem:[%s335] sm:$0xff]
      %v481 = vld [vmem:[%s335 + $0x8] sm:$0xff]
      %v482 = vld [vmem:[%s335 + $0x10] sm:$0x3]
      %v486 = vrot.slane %v480, 2
      %v487 = vrot.slane %v481, 2
      %v488 = vsel %vm356, %v486, %v487
      %v489 = vrot.slane %v482, 2
      %v490 = vsel %vm356, %v487, %v489
      %v493 = vadd.f32 %v480, %v488
      %v494 = vadd.f32 %v481, %v490
      %v495 = vmul.f32 %v493, 0.1875
      %v496 = vmul.f32 %v494, 0.1875
      %v497 = vmul.f32 %v480, 0.625
      %v498 = vmul.f32 %v481, 0.625
      %v499 = vmul.f32 %v482, 0.625
      %v503 = vrot.slane %v497, 1
      %v504 = vrot.slane %v498, 1
      %v505 = vsel %vm374, %v503, %v504
      %v506 = vrot.slane %v499, 1
      %v507 = vsel %vm374, %v504, %v506
      %v510 = vadd.f32 %v495, %v505
      %v511 = vadd.f32 %v496, %v507
      %514 = vrot.lane.b32.xlu0 %v510, 2
      %v515 = vpop.permute.xlu0 %514
      %516 = vrot.lane.b32.xlu0 %v511, 2
      %v517 = vpop.permute.xlu0 %516
      %v520 = vsub.f32 %v510, %v515
      %v521 = vsub.f32 %v511, %v517
      %522 = vrot.lane.b32.xlu0 %v480, 126
      %v523 = vpop.permute.xlu0 %522
      %524 = vrot.lane.b32.xlu0 %v481, 126
      %v525 = vpop.permute.xlu0 %524
      %526 = vrot.lane.b32.xlu0 %v482, 126
      %v527 = vpop.permute.xlu0 %526
      %v531 = vadd.f32 %v480, %v523
      %v532 = vadd.f32 %v481, %v525
      %v533 = vadd.f32 %v482, %v527
      %v534 = vmul.f32 %v531, 0.1875
      %v535 = vmul.f32 %v532, 0.1875
      %v536 = vmul.f32 %v533, 0.1875
      %537 = vrot.lane.b32.xlu0 %v497, 127
      %v538 = vpop.permute.xlu0 %537
      %539 = vrot.lane.b32.xlu0 %v498, 127
      %v540 = vpop.permute.xlu0 %539
      %541 = vrot.lane.b32.xlu0 %v499, 127
      %v542 = vpop.permute.xlu0 %541
      %v546 = vadd.f32 %v534, %v538
      %v547 = vadd.f32 %v535, %v540
      %v548 = vadd.f32 %v536, %v542
      %v551 = vrot.slane %v546, 6
      %v552 = vrot.slane %v547, 6
      %v553 = vsel %vm423, %v551, %v552
      %v557 = vsub.f32 %v546, %v551
      %v558 = vsub.f32 %v547, %v553
      %v559 = vsub.f32 %v548, %v552
      %v560 = vmul.f32 %v520, %v520
      %v561 = vmul.f32 %v521, %v521
      %v562 = vmul.f32 %v557, %v557
      %v563 = vmul.f32 %v558, %v558
      %v564 = vmul.f32 %v559, %v559
      %v568 = vrot.slane %v562, 2
      %v569 = vrot.slane %v563, 2
      %v570 = vsel %vm356, %v568, %v569
      %v571 = vrot.slane %v564, 2
      %v572 = vsel %vm356, %v569, %v571
      %573 = vrot.lane.b32.xlu0 %v570, 2
      %v574 = vpop.permute.xlu0 %573
      %575 = vrot.lane.b32.xlu0 %v572, 2
      %v576 = vpop.permute.xlu0 %575
      %v579 = vadd.f32 %v560, %v574
      %v580 = vadd.f32 %v561, %v576
      %v581 = vadd.f32 %v579, 1.1920929e-07
      %v582 = vadd.f32 %v580, 1.1920929e-07
      %v583 = vrsqrt.pop %v581
      %v584 = vmul.f32 %v583, %v581
      %v585 = vmul.f32 %v584, %v583
      %v586 = vmul.f32 0.5, %v585
      %v587 = vsub.f32 1.5, %v586
      %v588 = vmul.f32 %v583, %v587
      %v589 = vmul.f32 %v581, %v588
      %vm590 = vcmp.eq.f32.partialorder %v581, inf
      %v591 = vsel %vm590, %v581, %v589
      %vm592 = vcmp.eq.f32.partialorder %v581, 0.0
      %v593 = vand.u32 %v581, 2147483648
      %v594 = vsel %vm592, %v593, %v591
      %v595 = vrsqrt.pop %v582
      %v596 = vmul.f32 %v595, %v582
      %v597 = vmul.f32 %v596, %v595
      %v598 = vmul.f32 0.5, %v597
      %v599 = vsub.f32 1.5, %v598
      %v600 = vmul.f32 %v595, %v599
      %v601 = vmul.f32 %v582, %v600
      %vm602 = vcmp.eq.f32.partialorder %v582, inf
      %v603 = vsel %vm602, %v582, %v601
      %vm604 = vcmp.eq.f32.partialorder %v582, 0.0
      %v605 = vand.u32 %v582, 2147483648
      %v606 = vsel %vm604, %v605, %v603
      %v607 = vmul.f32 %v467, 2.0
      %v608 = vmul.f32 %v479, 2.0
      %v609 = vmul.f32 %v607, %v594
      %v610 = vmul.f32 %v608, %v606
      %v611 = vadd.f32 %v609, 386.0
      %v612 = vadd.f32 %v610, 386.0
      %v613 = vmul.f32 %v467, %v467
      %v614 = vmul.f32 %v479, %v479
      %v615 = vmul.f32 %v594, %v594
      %v616 = vmul.f32 %v606, %v606
      %v617 = vadd.f32 %v613, %v615
      %v618 = vadd.f32 %v614, %v616
      %v619 = vadd.f32 %v617, 386.0
      %v620 = vadd.f32 %v618, 386.0
      %v621 = vrcp.pop %v619
      %v622 = vrcp.pop %v620
      %v623 = vmul.f32 %v611, %v621
      %v624 = vmul.f32 %v612, %v622
      %v625 = vpow.f32 %v623, 0.4
      %v626 = vpow.f32 %v624, 0.4
      %v627 = vld [vmem:[%s320] sm:$0xff]
      %v628 = vld [vmem:[%s320 + $0x8] sm:$0xff]
      %v629 = vld [vmem:[%s325] sm:$0xff]
      %v630 = vld [vmem:[%s325 + $0x8] sm:$0xff]
      %v631 = vmul.f32 %v627, 2.0
      %v632 = vmul.f32 %v628, 2.0
      %v633 = vmul.f32 %v631, %v629
      %v634 = vmul.f32 %v632, %v630
      %v635 = vadd.f32 %v633, 1.27
      %v636 = vadd.f32 %v634, 1.27
      %v637 = vmul.f32 %v627, %v627
      %v638 = vmul.f32 %v628, %v628
      %v639 = vmul.f32 %v629, %v629
      %v640 = vmul.f32 %v630, %v630
      %v641 = vadd.f32 %v637, %v639
      %v642 = vadd.f32 %v638, %v640
      %v643 = vadd.f32 %v641, 1.27
      %v644 = vadd.f32 %v642, 1.27
      %v645 = vrcp.pop %v643
      %v646 = vrcp.pop %v644
      %v647 = vmul.f32 %v635, %v645
      %v648 = vmul.f32 %v636, %v646
      %651 = vrot.lane.b32.xlu0 %v647, 2
      %v652 = vpop.permute.xlu0 %651
      %653 = vrot.lane.b32.xlu0 %v648, 2
      %v654 = vpop.permute.xlu0 %653
      %v657 = vmul.f32 %v625, %v652
      %v658 = vmul.f32 %v626, %v654
      %v659 = vld [vmem:[%s340] sm:$0xff]
      %v660 = vld [vmem:[%s340 + $0x8] sm:$0xff]
      %v661 = vld [vmem:[%s340 + $0x10] sm:$0xff]
      %v662 = vld [vmem:[%s340 + $0x18] sm:$0xff]
      %v663 = vld [vmem:[%s345] sm:$0xff]
      %v664 = vld [vmem:[%s345 + $0x8] sm:$0xff]
      %v665 = vld [vmem:[%s345 + $0x10] sm:$0xff]
      %v666 = vld [vmem:[%s345 + $0x18] sm:$0xff]
      %v667 = vmul.f32 %v659, 2.0
      %v668 = vmul.f32 %v660, 2.0
      %v669 = vmul.f32 %v667, %v663
      %v670 = vmul.f32 %v668, %v664
      %v671 = vadd.f32 %v669, 130.0
      %v672 = vadd.f32 %v670, 130.0
      %v673 = vmul.f32 %v659, %v659
      %v674 = vmul.f32 %v660, %v660
      %v675 = vmul.f32 %v663, %v663
      %v676 = vmul.f32 %v664, %v664
      %v677 = vadd.f32 %v673, %v675
      %v678 = vadd.f32 %v674, %v676
      %v679 = vadd.f32 %v677, 130.0
      %v680 = vadd.f32 %v678, 130.0
      %v681 = vrcp.pop %v679
      %v682 = vrcp.pop %v680
      %v683 = vmul.f32 %v671, %v681
      %v684 = vmul.f32 %v672, %v682
      %v685 = vmul.f32 %v661, 2.0
      %v686 = vmul.f32 %v662, 2.0
      %v687 = vmul.f32 %v685, %v665
      %v688 = vmul.f32 %v686, %v666
      %v689 = vadd.f32 %v687, 130.0
      %v690 = vadd.f32 %v688, 130.0
      %v691 = vmul.f32 %v661, %v661
      %v692 = vmul.f32 %v662, %v662
      %v693 = vmul.f32 %v665, %v665
      %v694 = vmul.f32 %v666, %v666
      %v695 = vadd.f32 %v691, %v693
      %v696 = vadd.f32 %v692, %v694
      %v697 = vadd.f32 %v695, 130.0
      %v698 = vadd.f32 %v696, 130.0
      %v699 = vrcp.pop %v697
      %v700 = vrcp.pop %v698
      %v701 = vmul.f32 %v689, %v699
      %v702 = vmul.f32 %v690, %v700
      %v703 = vmul.f32 %v683, %v701
      %v704 = vmul.f32 %v684, %v702
      %vm705 = vcmp.lt.f32.partialorder %v703, 0.0
      %vm706 = vcmp.lt.f32.partialorder %v704, 0.0
      %v707 = vsel %vm705, 0.9980267, 1.0
      %v708 = vsel %vm706, 0.9980267, 1.0
      %v709 = vand.u32 2147483647, %v703
      %v710 = vand.u32 2147483647, %v704
      %v711 = vpow.f32 %v709, 0.02
      %v712 = vpow.f32 %v710, 0.02
      %v713 = vmul.f32 %v711, %v707
      %v714 = vmul.f32 %v712, %v708
      %717 = vrot.lane.b32.xlu0 %v713, 2
      %v718 = vpop.permute.xlu0 %717
      %719 = vrot.lane.b32.xlu0 %v714, 2
      %v720 = vpop.permute.xlu0 %719
      %v723 = vmul.f32 %v657, %v718
      %v724 = vmul.f32 %v658, %v720
      %v725 = vmax.f32 %v627, %v629
      %v726 = vmax.f32 %v628, %v630
      %729 = vrot.lane.b32.xlu0 %v725, 2
      %v730 = vpop.permute.xlu0 %729
      %731 = vrot.lane.b32.xlu0 %v726, 2
      %v732 = vpop.permute.xlu0 %731
      %v735 = vmul.f32 %v723, %v730
      %v736 = vmul.f32 %v724, %v732
      %739 = vrot.lane.b32.xlu0 %v735, 126
      %v740 = vpop.permute.xlu0 %739
      %741 = vrot.lane.b32.xlu0 %v736, 126
      %v742 = vpop.permute.xlu0 %741
      %vm745 = vcmask 130048
      %v746 = vsel %vm745, %v740, 0.0
      %v747 = vsel %vm745, %v742, 0.0
      %v748 = vadd.f32 %v746, %v747
      %749 = vadd.xlane.f32.xlu0 %v748
      %v750 = vpop.xlane.xlu0 %749
      %v751 = vrot.slane %v750, 4
      %v752 = vadd.f32 %v750, %v751
      %v753 = vrot.slane %v752, 2
      %v754 = vadd.f32 %v752, %v753
      %v755 = vrot.slane %v754, 1
      %v756 = vadd.f32 %v754, %v755
      %s757 = vtos %v756
      %v758 = vstv %s757
      %v759 = vadd.f32 %v758, 1.1920929e-07
      %v760 = vsel %vm745, %v725, 0.0
      %v761 = vsel %vm745, %v726, 0.0
      %v762 = vadd.f32 %v760, %v761
      %763 = vadd.xlane.f32.xlu0 %v762
      %v764 = vpop.xlane.xlu0 %763
      %v765 = vrot.slane %v764, 4
      %v766 = vadd.f32 %v764, %v765
      %v767 = vrot.slane %v766, 2
      %v768 = vadd.f32 %v766, %v767
      %v769 = vrot.slane %v768, 1
      %v770 = vadd.f32 %v768, %v769
      %s771 = vtos %v770
      %v772 = vstv %s771
      %v773 = vadd.f32 %v772, 1.1920929e-07
      %v774 = vrcp.pop %v773
      %v775 = vmul.f32 %v759, %v774
      %776 = vst [vmem:[%s349] sm:$0xff] %v775
      %p777 = scmp.lt.s32.totalorder %s17, 1
      %s778 = scalar_select %p777, %s17, 1
      %s779 = smul.addr %s778, 8
      %s780 = scalar_lea.vmem %s6, %s779
      // Predicated region
      $region45: #{a_call__.5} parent=43 // pred_check
        %p781 = pneg %p191
      $region46: #{a_call__.5} parent=43 // pred_check_branch
        %783 = sbr.rel (%p781) target = $region48
      $region47: #{a_call__.5} parent=43 // pred_region
        _
      $region48: #{a_call__.5} parent=43 // pred_fallthru
        _
    $region44: #{a_call__.5} parent=5 // pred_fallthru
      _
    %p784 = scmp.le.s32.totalorder 2, %s12
    // Predicated region
    $region49: #{a_call__.5} parent=5 // pred_check
      %p785 = pneg %p784
    $region50: #{a_call__.5} parent=5 // pred_check_branch
      %787 = sbr.rel (%p785) target = $region52
    $region51: #{a_call__.5} parent=5 // pred_region
      %s788 = ssub.s32 %s12, 2
      // Predicated region
      $region53: #{a_call__.5} parent=51 // pred_check
        %p789 = pneg %p197
      $region54: #{a_call__.5} parent=51 // pred_check_branch
        %791 = sbr.rel (%p789) target = $region56
      $region55: #{a_call__.5} parent=51 // pred_region
        %p792 = scmp.lt.s32.totalorder %s18, 1
        %s793 = scalar_select %p792, %s18, 1
        %s794 = smul.addr %s793, 8
        %s795 = scalar_lea.vmem %s6, %s794
      $region56: #{a_call__.5} parent=51 // pred_fallthru
        _
    $region52: #{a_call__.5} parent=5 // pred_fallthru
      _
  $region6: #{a_call__.5} parent=0 // loop_footer
    %s16 = sadd.s32 1, %s12
  $region7: #{a_call__.5} parent=0 // loop_footer_branch
    %11 = sbr.rel target = $region3
  $region8: #{a_call__.5} parent=0 // loop_exit
    _

</llo_original>
